<compile_context>
chip_gen: v5e
topology: v5e:2x2
jax: 0.10.0
libtpu: 0.0.40
codegen_flags: <defaults>
</compile_context>

<pallas_src>
import functools

import numpy as np
import jax
import jax.numpy as jnp
from jax import lax
from jax.experimental import pallas as pl
from jax.experimental.pallas import tpu as pltpu

EPS = 1e-5  # nn.BatchNorm2d default


# ----------------------------------------------------------------------------
# trace-time (shape-only) constant builders
# ----------------------------------------------------------------------------
def _interp_matrix(size_in: int, size_out: int) -> np.ndarray:
    """U (size_out, size_in) so that out = U @ in reproduces
    nn.Upsample(scale_factor=2, mode='bilinear', align_corners=True) along one axis."""
    U = np.zeros((size_out, size_in), np.float32)
    if size_in == 1:
        U[:, 0] = 1.0
        return U
    src = np.arange(size_out, dtype=np.float64) * (size_in - 1) / (size_out - 1)
    i0 = np.floor(src).astype(np.int64)
    i1 = np.minimum(i0 + 1, size_in - 1)
    frac = (src - i0).astype(np.float32)
    U[np.arange(size_out), i0] += 1.0 - frac
    U[np.arange(size_out), i1] += frac
    return U


def _height_taps(h: int, H: int):
    """Per output row y: (i0, i1, a, b) so that out_row[y] = a*in[i0] + b*in[i1]
    (align_corners=True bilinear along the height axis).  Pure trace-time constants."""
    if h == 1:
        return [(0, 0, 1.0, 0.0)] * H
    taps = []
    for y in range(H):
        src = y * (h - 1) / (H - 1)
        i0 = int(np.floor(src))
        i1 = min(i0 + 1, h - 1)
        b = float(src - i0)
        taps.append((i0, i1, 1.0 - b, b))
    return taps


def _col_masks(N: int, M: int, W: int, S: int, P: int):
    """(1, P) masks over the batched conv-result lane axis.
    mask_left zeroes the contributions of dx==0 taps at image column x==0,
    mask_right zeroes dx==2 taps at x==W-1 (row padding is handled structurally by
    the zero guard strips, so these are the ONLY masks the convs need)."""
    mL = np.ones((S,), np.float32)
    mR = np.ones((S,), np.float32)
    m = np.arange(M)
    mL[m[m % W == 0]] = 0.0
    mR[m[m % W == W - 1]] = 0.0
    mL = np.tile(mL, N)[:P].reshape(1, P)
    mR = np.tile(mR, N)[:P].reshape(1, P)
    return mL, mR


# ----------------------------------------------------------------------------
# fused kernel: upsample + concat + (conv3x3 -> BN -> ReLU) x 2
# ----------------------------------------------------------------------------
def _up_double_conv_kernel(skip_ref, x1w_ref, uwT_ref, mL_ref, mR_ref,
                           w1_ref, w2_ref, g1_ref, be1_ref, g2_ref, be2_ref,
                           out_ref, slab_scr,
                           *, H, W, h, htaps):
    N, C1, M = skip_ref.shape            # M = H*W, lane-dense
    Cin = w1_ref.shape[2]                # = 2*C1
    Cmid = w1_ref.shape[1]
    Cout = w2_ref.shape[1]
    G = W + 1                            # per-image guard (zero) strip width
    S = M + 2 * G                        # lane stride per image inside the slab
    P = N * S - 2 * G                    # batched conv-result lane extent
    inv_cnt = 1.0 / float(N * M)
    bf16 = slab_scr.dtype

    # Zero the shared staging slab once: the guard strips between/around images
    # structurally provide the conv row zero-padding; data regions are rewritten.
    slab_scr[...] = jnp.zeros(slab_scr.shape, slab_scr.dtype)

    # ---- separable bilinear x2 (align_corners=True) upsample ----
    # width expansion: ONE batched matmul over all images / channels / source rows
    midw = jnp.dot(x1w_ref[...], uwT_ref[...],
                   preferred_element_type=jnp.float32)        # (N*h*C1, W) f32
    midw4 = midw.reshape(N, h, C1, W)                          # free leading-dim split

    # height expansion: per output row, a 2-tap linear combination with trace-time
    # coefficients, written straight into the conv1 staging slab (fused with the
    # torch.cat([skip, x1], dim=1) channel ordering: [0,C1)=skip, [C1,2C1)=up(x1)).
    for n in range(N):
        base = n * S + G
        slab_scr[0:C1, base:base + M] = skip_ref[n].astype(bf16)
        for y, (i0, i1, a, b) in enumerate(htaps):
            if i1 == i0 or b == 0.0:
                row = midw4[n, i0]
            else:
                row = a * midw4[n, i0] + b * midw4[n, i1]      # (C1, W) f32
            slab_scr[C1:2 * C1, base + y * W: base + (y + 1) * W] = row.astype(bf16)

    mask_l = mL_ref[...]                                       # (1, P) f32
    mask_r = mR_ref[...]

    def conv3x3(w_ref, cin):
        """3x3 conv over ALL N images at once: 9 shifted matmuls accumulated
        directly off the staging slab (no im2col scratch).  Row padding comes
        from the zero guard strips; only the left/right image columns need a
        mask, applied once per column group to the f32 partials."""
        def col(dx):
            acc = None
            for dy in range(3):
                off = (dy - 1) * W + (dx - 1)
                rhs = slab_scr[0:cin, G + off: G + off + P]    # static lane-offset slice
                p = jnp.dot(w_ref[dy * 3 + dx], rhs,
                            preferred_element_type=jnp.float32)
                acc = p if acc is None else acc + p
            return acc
        return col(0) * mask_l + col(1) + col(2) * mask_r      # (C_, P) f32

    def batch_norm(act, gamma, beta, C):
        """Exact two-pass training-mode batch statistics over interior positions
        only (mean first, then E[(x-mean)^2] -> no catastrophic cancellation)."""
        s = jnp.zeros((C, 1), jnp.float32)
        for n in range(N):
            s = s + jnp.sum(act[:, n * S: n * S + M], axis=1, keepdims=True)
        mean = s * inv_cnt
        ss = jnp.zeros((C, 1), jnp.float32)
        for n in range(N):
            d = act[:, n * S: n * S + M] - mean
            ss = ss + jnp.sum(d * d, axis=1, keepdims=True)
        var = ss * inv_cnt
        scale = gamma * lax.rsqrt(var + EPS)
        shift = beta - mean * scale
        return scale, shift

    # ---- conv1 -> BN1 -> ReLU, restaged into the SAME slab (rows [0, Cmid)) ----
    a1 = conv3x3(w1_ref, Cin)                                  # (Cmid, P) f32
    scale1, shift1 = batch_norm(a1, g1_ref[...], be1_ref[...], Cmid)
    scale1b = jnp.broadcast_to(scale1, (Cmid, M))              # hoisted out of the n loop
    shift1b = jnp.broadcast_to(shift1, (Cmid, M))
    for n in range(N):
        y1 = jnp.maximum(a1[:, n * S: n * S + M] * scale1b + shift1b, 0.0)
        slab_scr[0:Cmid, n * S + G: n * S + G + M] = y1.astype(bf16)

    # ---- conv2 -> BN2 -> ReLU -> dense (lane-aligned) output stores ----
    a2 = conv3x3(w2_ref, Cmid)                                 # (Cout, P) f32
    scale2, shift2 = batch_norm(a2, g2_ref[...], be2_ref[...], Cout)
    scale2b = jnp.broadcast_to(scale2, (Cout, M))
    shift2b = jnp.broadcast_to(shift2, (Cout, M))
    for n in range(N):
        out_ref[n] = jnp.maximum(a2[:, n * S: n * S + M] * scale2b + shift2b, 0.0)


def _double_conv_pallas(skip_f, x1w, uwT, mL, mR, w1m, w2m, g1, be1, g2, be2,
                        *, H, W, h, htaps):
    N, C1, M = skip_f.shape
    Cin = w1m.shape[2]
    Cmid = w1m.shape[1]
    Cout = w2m.shape[1]
    G = W + 1
    S = M + 2 * G
    Cmax = max(Cin, Cmid)

    args = (skip_f, x1w, uwT, mL, mR, w1m, w2m, g1, be1, g2, be2)
    in_bytes = sum(int(np.prod(a.shape)) * a.dtype.itemsize for a in args)
    out_bytes = N * Cout * M * 4
    scratch_bytes = Cmax * N * S * 2
    footprint = in_bytes + out_bytes + scratch_bytes
    # Explicit scoped-VMEM limit sized from the actual footprint (the 16/32 MiB
    # defaults bite first otherwise); capped so it stays valid on every generation.
    vmem_limit = int(min(64 * 2 ** 20, max(32 * 2 ** 20, 2 * footprint)))

    kernel = functools.partial(_up_double_conv_kernel, H=H, W=W, h=h, htaps=htaps)
    vmem = lambda: pl.BlockSpec(memory_space=pltpu.MemorySpace.VMEM)
    return pl.pallas_call(
        kernel,
        out_shape=jax.ShapeDtypeStruct((N, Cout, M), jnp.float32),
        in_specs=[vmem() for _ in range(len(args))],
        out_specs=vmem(),
        scratch_shapes=[
            # single staging slab, reused by conv1 and conv2 (phase-disjoint)
            pltpu.VMEM((Cmax, N * S), jnp.bfloat16),
        ],
        compiler_params=pltpu.CompilerParams(vmem_limit_bytes=vmem_limit),
    )(*args)


# ----------------------------------------------------------------------------
# public forward: NCHW in -> NCHW out (only free reshapes + one tiny x1 transpose)
# ----------------------------------------------------------------------------
@jax.jit
def up_forward(x1_nchw, skip_nchw, params):
    """Up.forward(x1, skip)."""
    w1, b1, g1, be1, w2, b2, g2, be2 = params
    # b1 / b2 intentionally unused: exact under training-mode BatchNorm
    # ((x+b) - mean(x+b) == x - mean(x)); NOT valid for eval-mode running stats.
    del b1, b2
    N, C1, h, w = x1_nchw.shape
    H, W = 2 * h, 2 * w
    assert skip_nchw.shape == (N, C1, H, W)
    M = H * W
    Cin = 2 * C1
    Cmid, Cout = w1.shape[0], w2.shape[0]
    G = W + 1
    S = M + 2 * G
    P = N * S - 2 * G

    # trace-time constants: separable upsample operands + the two column masks
    uwT = jnp.asarray(_interp_matrix(w, W).T, jnp.float32)     # (w, W)
    htaps = tuple(_height_taps(h, H))
    mLnp, mRnp = _col_masks(N, M, W, S, P)
    mL = jnp.asarray(mLnp)
    mR = jnp.asarray(mRnp)

    # free reshape for the big skip tensor; one tiny transpose of the
    # quarter-resolution x1 so the in-kernel width matmul result is
    # (N, h, C1, W) with channels contiguous per source row.
    skip_f = skip_nchw.reshape(N, C1, M).astype(jnp.float32)
    x1w = jnp.transpose(x1_nchw, (0, 2, 1, 3)).reshape(N * h * C1, w).astype(jnp.float32)

    # conv weights -> (tap, Cout, Cin) bf16, tap index = dy*3 + dx; the cin axis
    # keeps torch.cat([skip, x1], dim=1) channel ordering.
    w1m = jnp.transpose(w1, (2, 3, 0, 1)).reshape(9, Cmid, Cin).astype(jnp.bfloat16)
    w2m = jnp.transpose(w2, (2, 3, 0, 1)).reshape(9, Cout, Cmid).astype(jnp.bfloat16)

    out_flat = _double_conv_pallas(
        skip_f, x1w, uwT, mL, mR, w1m, w2m,
        g1.reshape(Cmid, 1).astype(jnp.float32), be1.reshape(Cmid, 1).astype(jnp.float32),
        g2.reshape(Cout, 1).astype(jnp.float32), be2.reshape(Cout, 1).astype(jnp.float32),
        H=H, W=W, h=h, htaps=htaps)
    return out_flat.reshape(N, Cout, H, W)


# ----------------------------------------------------------------------------
# parameter init (PyTorch layouts) and a pure-JAX reference for validation
# ----------------------------------------------------------------------------
def init_params(key, in_channels, out_channels):
    ks = jax.random.split(key, 8)

    def conv_init(kw, kb, cin, cout):
        bound = float(1.0 / np.sqrt(cin * 9.0))
        wgt = jax.random.uniform(kw, (cout, cin, 3, 3), jnp.float32, -bound, bound)
        b = jax.random.uniform(kb, (cout,), jnp.float32, -bound, bound)
        return wgt, b

    w1, b1 = conv_init(ks[0], ks[1], in_channels, out_channels)
    w2, b2 = conv_init(ks[2], ks[3], out_channels, out_channels)
    g1 = 1.0 + 0.1 * jax.random.normal(ks[4], (out_channels,), jnp.float32)
    be1 = 0.1 * jax.random.normal(ks[5], (out_channels,), jnp.float32)
    g2 = 1.0 + 0.1 * jax.random.normal(ks[6], (out_channels,), jnp.float32)
    be2 = 0.1 * jax.random.normal(ks[7], (out_channels,), jnp.float32)
    return (w1, b1, g1, be1, w2, b2, g2, be2)


def up_forward_reference(x1, skip, params):
    """Pure-JAX (XLA) mirror of the PyTorch module; used only for a sanity check."""
    w1, b1, g1, be1, w2, b2, g2, be2 = params
    N, C1, h, w = x1.shape
    H, W = 2 * h, 2 * w

    def coords(size_in, size_out):
        if size_in == 1:
            z = jnp.zeros((size_out,), jnp.int32)
            return z, z, jnp.zeros((size_out,), jnp.float32)
        c = jnp.arange(size_out, dtype=jnp.float32) * (size_in - 1) / (size_out - 1)
        i0 = jnp.floor(c).astype(jnp.int32)
        i1 = jnp.minimum(i0 + 1, size_in - 1)
        return i0, i1, c - i0.astype(jnp.float32)

    i0, i1, fy = coords(h, H)
    xh = (x1[:, :, i0, :] * (1 - fy)[None, None, :, None]
          + x1[:, :, i1, :] * fy[None, None, :, None])
    j0, j1, fx = coords(w, W)
    x1u = (xh[:, :, :, j0] * (1 - fx)[None, None, None, :]
           + xh[:, :, :, j1] * fx[None, None, None, :])

    x = jnp.concatenate([skip, x1u], axis=1)

    def conv_bn_relu(x, wgt, b, g, beta):
        y = lax.conv_general_dilated(x, wgt, (1, 1), ((1, 1), (1, 1)),
                                     dimension_numbers=('NCHW', 'OIHW', 'NCHW'))
        y = y + b[None, :, None, None]
        mean = jnp.mean(y, axis=(0, 2, 3), keepdims=True)
        var = jnp.mean((y - mean) ** 2, axis=(0, 2, 3), keepdims=True)
        y = (y - mean) * lax.rsqrt(var + EPS) * g[None, :, None, None] + beta[None, :, None, None]
        return jnp.maximum(y, 0.0)

    x = conv_bn_relu(x, w1, b1, g1, be1)
    x = conv_bn_relu(x, w2, b2, g2, be2)
    return x


if __name__ == "__main__":
    key = jax.random.PRNGKey(0)
    k_x1, k_skip, k_par = jax.random.split(key, 3)

    in_channels, out_channels = 8, 4           # Up(8, 4, bilinear=True, kernel=3)
    N, Hs, Ws = 2, 16, 16                      # skip spatial size
    x1 = jax.random.normal(k_x1, (N, in_channels // 2, Hs // 2, Ws // 2), jnp.float32)
    skip = jax.random.normal(k_skip, (N, in_channels // 2, Hs, Ws), jnp.float32)
    params = init_params(k_par, in_channels, out_channels)

    out = up_forward(x1, skip, params)
    jax.block_until_ready(out)
    assert out.shape == (N, out_channels, Hs, Ws)

    # relative check vs. pure-f32 reference (kernel uses bf16 MXU conv operands)
    ref = up_forward_reference(x1, skip, params)
    err = float(jnp.max(jnp.abs(out - ref)))
    scale = float(jnp.max(jnp.abs(ref))) + 1e-6
    assert err <= 5e-2 * scale, f"mismatch vs reference: max abs err = {err}, scale = {scale}"

    print("KERNEL_OK")
</pallas_src>

<mosaic_0001>
module attributes {stable_mosaic.version = 11 : i64} {
  func.func @_up_double_conv_kernel(%arg0: memref<2x4x256xf32, #tpu.memory_space<vmem>>, %arg1: memref<64x8xf32, #tpu.memory_space<vmem>>, %arg2: memref<8x16xf32, #tpu.memory_space<vmem>>, %arg3: memref<1x546xf32, #tpu.memory_space<vmem>>, %arg4: memref<1x546xf32, #tpu.memory_space<vmem>>, %arg5: memref<9x4x8xbf16, #tpu.memory_space<vmem>>, %arg6: memref<9x4x4xbf16, #tpu.memory_space<vmem>>, %arg7: memref<4x1xf32, #tpu.memory_space<vmem>>, %arg8: memref<4x1xf32, #tpu.memory_space<vmem>>, %arg9: memref<4x1xf32, #tpu.memory_space<vmem>>, %arg10: memref<4x1xf32, #tpu.memory_space<vmem>>, %arg11: memref<2x4x256xf32, #tpu.memory_space<vmem>>, %arg12: memref<8x580xbf16, #tpu.memory_space<vmem>>) attributes {dimension_semantics = [], scalar_prefetch = 0 : i64, scratch_operands = 1 : i64, tpu.core_type = #tpu.core_type<tc>} {
    %cst = arith.constant 0.000000e+00 : bf16
    %0 = vector.broadcast %cst : bf16 to vector<8x580xbf16>
    %c0 = arith.constant 0 : index
    %c0_0 = arith.constant 0 : index
    %1 = vector.load %arg12[%c0, %c0_0] : memref<8x580xbf16, #tpu.memory_space<vmem>>, vector<8x580xbf16>
    tpu.vector_store %arg12[%c0, %c0_0], %0 {strides = array<i32>} : memref<8x580xbf16, #tpu.memory_space<vmem>>, vector<8x580xbf16>,
    %c0_1 = arith.constant 0 : index
    %c0_2 = arith.constant 0 : index
    %2 = vector.load %arg1[%c0_1, %c0_2] : memref<64x8xf32, #tpu.memory_space<vmem>>, vector<64x8xf32>
    %c0_3 = arith.constant 0 : index
    %c0_4 = arith.constant 0 : index
    %3 = vector.load %arg2[%c0_3, %c0_4] : memref<8x16xf32, #tpu.memory_space<vmem>>, vector<8x16xf32>
    %cst_5 = arith.constant dense<0.000000e+00> : vector<64x16xf32>
    %4 = tpu.matmul %2, %3, %cst_5 {dimension_numbers = #tpu.dot_dimension_numbers<[1], [0], [0], [1], [0, 0, 1, 1], [], []>} : vector<64x8xf32>, vector<8x16xf32>, vector<64x16xf32> -> vector<64x16xf32>
    %5 = vector.shape_cast %4 : vector<64x16xf32> to vector<2x8x4x16xf32>
    %c0_6 = arith.constant 0 : index
    %c0_7 = arith.constant 0 : index
    %c0_8 = arith.constant 0 : index
    %6 = vector.load %arg0[%c0_6, %c0_7, %c0_8] : memref<2x4x256xf32, #tpu.memory_space<vmem>>, vector<1x4x256xf32>
    %7 = vector.shape_cast %6 : vector<1x4x256xf32> to vector<4x256xf32>
    %8 = arith.truncf %7 : vector<4x256xf32> to vector<4x256xbf16>
    %c0_9 = arith.constant 0 : index
    %c17 = arith.constant 17 : index
    %9 = vector.load %arg12[%c0_9, %c17] : memref<8x580xbf16, #tpu.memory_space<vmem>>, vector<4x256xbf16>
    tpu.vector_store %arg12[%c0_9, %c17], %8 {strides = array<i32>} : memref<8x580xbf16, #tpu.memory_space<vmem>>, vector<4x256xbf16>,
    %10 = vector.extract_strided_slice %5 {offsets = [0, 0, 0, 0], sizes = [1, 1, 4, 16], strides = [1, 1, 1, 1]} : vector<2x8x4x16xf32> to vector<1x1x4x16xf32>
    %11 = vector.shape_cast %10 : vector<1x1x4x16xf32> to vector<4x16xf32>
    %12 = arith.truncf %11 : vector<4x16xf32> to vector<4x16xbf16>
    %c4 = arith.constant 4 : index
    %c17_10 = arith.constant 17 : index
    %13 = vector.load %arg12[%c4, %c17_10] : memref<8x580xbf16, #tpu.memory_space<vmem>>, vector<4x16xbf16>
    tpu.vector_store %arg12[%c4, %c17_10], %12 {strides = array<i32>} : memref<8x580xbf16, #tpu.memory_space<vmem>>, vector<4x16xbf16>,
    %14 = vector.extract_strided_slice %5 {offsets = [0, 0, 0, 0], sizes = [1, 1, 4, 16], strides = [1, 1, 1, 1]} : vector<2x8x4x16xf32> to vector<1x1x4x16xf32>
    %15 = vector.shape_cast %14 : vector<1x1x4x16xf32> to vector<4x16xf32>
    %cst_11 = arith.constant 0.533333361 : f32
    %16 = vector.broadcast %cst_11 : f32 to vector<4x16xf32>
    %17 = arith.mulf %16, %15 : vector<4x16xf32>
    %18 = vector.extract_strided_slice %5 {offsets = [0, 1, 0, 0], sizes = [1, 1, 4, 16], strides = [1, 1, 1, 1]} : vector<2x8x4x16xf32> to vector<1x1x4x16xf32>
    %19 = vector.shape_cast %18 : vector<1x1x4x16xf32> to vector<4x16xf32>
    %cst_12 = arith.constant 0.466666669 : f32
    %20 = vector.broadcast %cst_12 : f32 to vector<4x16xf32>
    %21 = arith.mulf %20, %19 : vector<4x16xf32>
    %22 = arith.addf %17, %21 : vector<4x16xf32>
    %23 = arith.truncf %22 : vector<4x16xf32> to vector<4x16xbf16>
    %c4_13 = arith.constant 4 : index
    %c33 = arith.constant 33 : index
    %24 = vector.load %arg12[%c4_13, %c33] : memref<8x580xbf16, #tpu.memory_space<vmem>>, vector<4x16xbf16>
    tpu.vector_store %arg12[%c4_13, %c33], %23 {strides = array<i32>} : memref<8x580xbf16, #tpu.memory_space<vmem>>, vector<4x16xbf16>,
    %25 = vector.extract_strided_slice %5 {offsets = [0, 0, 0, 0], sizes = [1, 1, 4, 16], strides = [1, 1, 1, 1]} : vector<2x8x4x16xf32> to vector<1x1x4x16xf32>
    %26 = vector.shape_cast %25 : vector<1x1x4x16xf32> to vector<4x16xf32>
    %cst_14 = arith.constant 0.0666666701 : f32
    %27 = vector.broadcast %cst_14 : f32 to vector<4x16xf32>
    %28 = arith.mulf %27, %26 : vector<4x16xf32>
    %29 = vector.extract_strided_slice %5 {offsets = [0, 1, 0, 0], sizes = [1, 1, 4, 16], strides = [1, 1, 1, 1]} : vector<2x8x4x16xf32> to vector<1x1x4x16xf32>
    %30 = vector.shape_cast %29 : vector<1x1x4x16xf32> to vector<4x16xf32>
    %cst_15 = arith.constant 0.933333337 : f32
    %31 = vector.broadcast %cst_15 : f32 to vector<4x16xf32>
    %32 = arith.mulf %31, %30 : vector<4x16xf32>
    %33 = arith.addf %28, %32 : vector<4x16xf32>
    %34 = arith.truncf %33 : vector<4x16xf32> to vector<4x16xbf16>
    %c4_16 = arith.constant 4 : index
    %c49 = arith.constant 49 : index
    %35 = vector.load %arg12[%c4_16, %c49] : memref<8x580xbf16, #tpu.memory_space<vmem>>, vector<4x16xbf16>
    tpu.vector_store %arg12[%c4_16, %c49], %34 {strides = array<i32>} : memref<8x580xbf16, #tpu.memory_space<vmem>>, vector<4x16xbf16>,
    %36 = vector.extract_strided_slice %5 {offsets = [0, 1, 0, 0], sizes = [1, 1, 4, 16], strides = [1, 1, 1, 1]} : vector<2x8x4x16xf32> to vector<1x1x4x16xf32>
    %37 = vector.shape_cast %36 : vector<1x1x4x16xf32> to vector<4x16xf32>
    %cst_17 = arith.constant 6.000000e-01 : f32
    %38 = vector.broadcast %cst_17 : f32 to vector<4x16xf32>
    %39 = arith.mulf %38, %37 : vector<4x16xf32>
    %40 = vector.extract_strided_slice %5 {offsets = [0, 2, 0, 0], sizes = [1, 1, 4, 16], strides = [1, 1, 1, 1]} : vector<2x8x4x16xf32> to vector<1x1x4x16xf32>
    %41 = vector.shape_cast %40 : vector<1x1x4x16xf32> to vector<4x16xf32>
    %cst_18 = arith.constant 4.000000e-01 : f32
    %42 = vector.broadcast %cst_18 : f32 to vector<4x16xf32>
    %43 = arith.mulf %42, %41 : vector<4x16xf32>
    %44 = arith.addf %39, %43 : vector<4x16xf32>
    %45 = arith.truncf %44 : vector<4x16xf32> to vector<4x16xbf16>
    %c4_19 = arith.constant 4 : index
    %c65 = arith.constant 65 : index
    %46 = vector.load %arg12[%c4_19, %c65] : memref<8x580xbf16, #tpu.memory_space<vmem>>, vector<4x16xbf16>
    tpu.vector_store %arg12[%c4_19, %c65], %45 {strides = array<i32>} : memref<8x580xbf16, #tpu.memory_space<vmem>>, vector<4x16xbf16>,
    %47 = vector.extract_strided_slice %5 {offsets = [0, 1, 0, 0], sizes = [1, 1, 4, 16], strides = [1, 1, 1, 1]} : vector<2x8x4x16xf32> to vector<1x1x4x16xf32>
    %48 = vector.shape_cast %47 : vector<1x1x4x16xf32> to vector<4x16xf32>
    %cst_20 = arith.constant 0.13333334 : f32
    %49 = vector.broadcast %cst_20 : f32 to vector<4x16xf32>
    %50 = arith.mulf %49, %48 : vector<4x16xf32>
    %51 = vector.extract_strided_slice %5 {offsets = [0, 2, 0, 0], sizes = [1, 1, 4, 16], strides = [1, 1, 1, 1]} : vector<2x8x4x16xf32> to vector<1x1x4x16xf32>
    %52 = vector.shape_cast %51 : vector<1x1x4x16xf32> to vector<4x16xf32>
    %cst_21 = arith.constant 0.866666674 : f32
    %53 = vector.broadcast %cst_21 : f32 to vector<4x16xf32>
    %54 = arith.mulf %53, %52 : vector<4x16xf32>
    %55 = arith.addf %50, %54 : vector<4x16xf32>
    %56 = arith.truncf %55 : vector<4x16xf32> to vector<4x16xbf16>
    %c4_22 = arith.constant 4 : index
    %c81 = arith.constant 81 : index
    %57 = vector.load %arg12[%c4_22, %c81] : memref<8x580xbf16, #tpu.memory_space<vmem>>, vector<4x16xbf16>
    tpu.vector_store %arg12[%c4_22, %c81], %56 {strides = array<i32>} : memref<8x580xbf16, #tpu.memory_space<vmem>>, vector<4x16xbf16>,
    %58 = vector.extract_strided_slice %5 {offsets = [0, 2, 0, 0], sizes = [1, 1, 4, 16], strides = [1, 1, 1, 1]} : vector<2x8x4x16xf32> to vector<1x1x4x16xf32>
    %59 = vector.shape_cast %58 : vector<1x1x4x16xf32> to vector<4x16xf32>
    %cst_23 = arith.constant 0.666666686 : f32
    %60 = vector.broadcast %cst_23 : f32 to vector<4x16xf32>
    %61 = arith.mulf %60, %59 : vector<4x16xf32>
    %62 = vector.extract_strided_slice %5 {offsets = [0, 3, 0, 0], sizes = [1, 1, 4, 16], strides = [1, 1, 1, 1]} : vector<2x8x4x16xf32> to vector<1x1x4x16xf32>
    %63 = vector.shape_cast %62 : vector<1x1x4x16xf32> to vector<4x16xf32>
    %cst_24 = arith.constant 0.333333343 : f32
    %64 = vector.broadcast %cst_24 : f32 to vector<4x16xf32>
    %65 = arith.mulf %64, %63 : vector<4x16xf32>
    %66 = arith.addf %61, %65 : vector<4x16xf32>
    %67 = arith.truncf %66 : vector<4x16xf32> to vector<4x16xbf16>
    %c4_25 = arith.constant 4 : index
    %c97 = arith.constant 97 : index
    %68 = vector.load %arg12[%c4_25, %c97] : memref<8x580xbf16, #tpu.memory_space<vmem>>, vector<4x16xbf16>
    tpu.vector_store %arg12[%c4_25, %c97], %67 {strides = array<i32>} : memref<8x580xbf16, #tpu.memory_space<vmem>>, vector<4x16xbf16>,
    %69 = vector.extract_strided_slice %5 {offsets = [0, 2, 0, 0], sizes = [1, 1, 4, 16], strides = [1, 1, 1, 1]} : vector<2x8x4x16xf32> to vector<1x1x4x16xf32>
    %70 = vector.shape_cast %69 : vector<1x1x4x16xf32> to vector<4x16xf32>
    %cst_26 = arith.constant 2.000000e-01 : f32
    %71 = vector.broadcast %cst_26 : f32 to vector<4x16xf32>
    %72 = arith.mulf %71, %70 : vector<4x16xf32>
    %73 = vector.extract_strided_slice %5 {offsets = [0, 3, 0, 0], sizes = [1, 1, 4, 16], strides = [1, 1, 1, 1]} : vector<2x8x4x16xf32> to vector<1x1x4x16xf32>
    %74 = vector.shape_cast %73 : vector<1x1x4x16xf32> to vector<4x16xf32>
    %cst_27 = arith.constant 8.000000e-01 : f32
    %75 = vector.broadcast %cst_27 : f32 to vector<4x16xf32>
    %76 = arith.mulf %75, %74 : vector<4x16xf32>
    %77 = arith.addf %72, %76 : vector<4x16xf32>
    %78 = arith.truncf %77 : vector<4x16xf32> to vector<4x16xbf16>
    %c4_28 = arith.constant 4 : index
    %c113 = arith.constant 113 : index
    %79 = vector.load %arg12[%c4_28, %c113] : memref<8x580xbf16, #tpu.memory_space<vmem>>, vector<4x16xbf16>
    tpu.vector_store %arg12[%c4_28, %c113], %78 {strides = array<i32>} : memref<8x580xbf16, #tpu.memory_space<vmem>>, vector<4x16xbf16>,
    %80 = vector.extract_strided_slice %5 {offsets = [0, 3, 0, 0], sizes = [1, 1, 4, 16], strides = [1, 1, 1, 1]} : vector<2x8x4x16xf32> to vector<1x1x4x16xf32>
    %81 = vector.shape_cast %80 : vector<1x1x4x16xf32> to vector<4x16xf32>
    %cst_29 = arith.constant 0.733333349 : f32
    %82 = vector.broadcast %cst_29 : f32 to vector<4x16xf32>
    %83 = arith.mulf %82, %81 : vector<4x16xf32>
    %84 = vector.extract_strided_slice %5 {offsets = [0, 4, 0, 0], sizes = [1, 1, 4, 16], strides = [1, 1, 1, 1]} : vector<2x8x4x16xf32> to vector<1x1x4x16xf32>
    %85 = vector.shape_cast %84 : vector<1x1x4x16xf32> to vector<4x16xf32>
    %cst_30 = arith.constant 0.266666681 : f32
    %86 = vector.broadcast %cst_30 : f32 to vector<4x16xf32>
    %87 = arith.mulf %86, %85 : vector<4x16xf32>
    %88 = arith.addf %83, %87 : vector<4x16xf32>
    %89 = arith.truncf %88 : vector<4x16xf32> to vector<4x16xbf16>
    %c4_31 = arith.constant 4 : index
    %c129 = arith.constant 129 : index
    %90 = vector.load %arg12[%c4_31, %c129] : memref<8x580xbf16, #tpu.memory_space<vmem>>, vector<4x16xbf16>
    tpu.vector_store %arg12[%c4_31, %c129], %89 {strides = array<i32>} : memref<8x580xbf16, #tpu.memory_space<vmem>>, vector<4x16xbf16>,
    %91 = vector.extract_strided_slice %5 {offsets = [0, 3, 0, 0], sizes = [1, 1, 4, 16], strides = [1, 1, 1, 1]} : vector<2x8x4x16xf32> to vector<1x1x4x16xf32>
    %92 = vector.shape_cast %91 : vector<1x1x4x16xf32> to vector<4x16xf32>
    %cst_32 = arith.constant 0.266666681 : f32
    %93 = vector.broadcast %cst_32 : f32 to vector<4x16xf32>
    %94 = arith.mulf %93, %92 : vector<4x16xf32>
    %95 = vector.extract_strided_slice %5 {offsets = [0, 4, 0, 0], sizes = [1, 1, 4, 16], strides = [1, 1, 1, 1]} : vector<2x8x4x16xf32> to vector<1x1x4x16xf32>
    %96 = vector.shape_cast %95 : vector<1x1x4x16xf32> to vector<4x16xf32>
    %cst_33 = arith.constant 0.733333349 : f32
    %97 = vector.broadcast %cst_33 : f32 to vector<4x16xf32>
    %98 = arith.mulf %97, %96 : vector<4x16xf32>
    %99 = arith.addf %94, %98 : vector<4x16xf32>
    %100 = arith.truncf %99 : vector<4x16xf32> to vector<4x16xbf16>
    %c4_34 = arith.constant 4 : index
    %c145 = arith.constant 145 : index
    %101 = vector.load %arg12[%c4_34, %c145] : memref<8x580xbf16, #tpu.memory_space<vmem>>, vector<4x16xbf16>
    tpu.vector_store %arg12[%c4_34, %c145], %100 {strides = array<i32>} : memref<8x580xbf16, #tpu.memory_space<vmem>>, vector<4x16xbf16>,
    %102 = vector.extract_strided_slice %5 {offsets = [0, 4, 0, 0], sizes = [1, 1, 4, 16], strides = [1, 1, 1, 1]} : vector<2x8x4x16xf32> to vector<1x1x4x16xf32>
    %103 = vector.shape_cast %102 : vector<1x1x4x16xf32> to vector<4x16xf32>
    %cst_35 = arith.constant 8.000000e-01 : f32
    %104 = vector.broadcast %cst_35 : f32 to vector<4x16xf32>
    %105 = arith.mulf %104, %103 : vector<4x16xf32>
    %106 = vector.extract_strided_slice %5 {offsets = [0, 5, 0, 0], sizes = [1, 1, 4, 16], strides = [1, 1, 1, 1]} : vector<2x8x4x16xf32> to vector<1x1x4x16xf32>
    %107 = vector.shape_cast %106 : vector<1x1x4x16xf32> to vector<4x16xf32>
    %cst_36 = arith.constant 2.000000e-01 : f32
    %108 = vector.broadcast %cst_36 : f32 to vector<4x16xf32>
    %109 = arith.mulf %108, %107 : vector<4x16xf32>
    %110 = arith.addf %105, %109 : vector<4x16xf32>
    %111 = arith.truncf %110 : vector<4x16xf32> to vector<4x16xbf16>
    %c4_37 = arith.constant 4 : index
    %c161 = arith.constant 161 : index
    %112 = vector.load %arg12[%c4_37, %c161] : memref<8x580xbf16, #tpu.memory_space<vmem>>, vector<4x16xbf16>
    tpu.vector_store %arg12[%c4_37, %c161], %111 {strides = array<i32>} : memref<8x580xbf16, #tpu.memory_space<vmem>>, vector<4x16xbf16>,
    %113 = vector.extract_strided_slice %5 {offsets = [0, 4, 0, 0], sizes = [1, 1, 4, 16], strides = [1, 1, 1, 1]} : vector<2x8x4x16xf32> to vector<1x1x4x16xf32>
    %114 = vector.shape_cast %113 : vector<1x1x4x16xf32> to vector<4x16xf32>
    %cst_38 = arith.constant 0.333333343 : f32
    %115 = vector.broadcast %cst_38 : f32 to vector<4x16xf32>
    %116 = arith.mulf %115, %114 : vector<4x16xf32>
    %117 = vector.extract_strided_slice %5 {offsets = [0, 5, 0, 0], sizes = [1, 1, 4, 16], strides = [1, 1, 1, 1]} : vector<2x8x4x16xf32> to vector<1x1x4x16xf32>
    %118 = vector.shape_cast %117 : vector<1x1x4x16xf32> to vector<4x16xf32>
    %cst_39 = arith.constant 0.666666686 : f32
    %119 = vector.broadcast %cst_39 : f32 to vector<4x16xf32>
    %120 = arith.mulf %119, %118 : vector<4x16xf32>
    %121 = arith.addf %116, %120 : vector<4x16xf32>
    %122 = arith.truncf %121 : vector<4x16xf32> to vector<4x16xbf16>
    %c4_40 = arith.constant 4 : index
    %c177 = arith.constant 177 : index
    %123 = vector.load %arg12[%c4_40, %c177] : memref<8x580xbf16, #tpu.memory_space<vmem>>, vector<4x16xbf16>
    tpu.vector_store %arg12[%c4_40, %c177], %122 {strides = array<i32>} : memref<8x580xbf16, #tpu.memory_space<vmem>>, vector<4x16xbf16>,
    %124 = vector.extract_strided_slice %5 {offsets = [0, 5, 0, 0], sizes = [1, 1, 4, 16], strides = [1, 1, 1, 1]} : vector<2x8x4x16xf32> to vector<1x1x4x16xf32>
    %125 = vector.shape_cast %124 : vector<1x1x4x16xf32> to vector<4x16xf32>
    %cst_41 = arith.constant 0.866666674 : f32
    %126 = vector.broadcast %cst_41 : f32 to vector<4x16xf32>
    %127 = arith.mulf %126, %125 : vector<4x16xf32>
    %128 = vector.extract_strided_slice %5 {offsets = [0, 6, 0, 0], sizes = [1, 1, 4, 16], strides = [1, 1, 1, 1]} : vector<2x8x4x16xf32> to vector<1x1x4x16xf32>
    %129 = vector.shape_cast %128 : vector<1x1x4x16xf32> to vector<4x16xf32>
    %cst_42 = arith.constant 0.13333334 : f32
    %130 = vector.broadcast %cst_42 : f32 to vector<4x16xf32>
    %131 = arith.mulf %130, %129 : vector<4x16xf32>
    %132 = arith.addf %127, %131 : vector<4x16xf32>
    %133 = arith.truncf %132 : vector<4x16xf32> to vector<4x16xbf16>
    %c4_43 = arith.constant 4 : index
    %c193 = arith.constant 193 : index
    %134 = vector.load %arg12[%c4_43, %c193] : memref<8x580xbf16, #tpu.memory_space<vmem>>, vector<4x16xbf16>
    tpu.vector_store %arg12[%c4_43, %c193], %133 {strides = array<i32>} : memref<8x580xbf16, #tpu.memory_space<vmem>>, vector<4x16xbf16>,
    %135 = vector.extract_strided_slice %5 {offsets = [0, 5, 0, 0], sizes = [1, 1, 4, 16], strides = [1, 1, 1, 1]} : vector<2x8x4x16xf32> to vector<1x1x4x16xf32>
    %136 = vector.shape_cast %135 : vector<1x1x4x16xf32> to vector<4x16xf32>
    %cst_44 = arith.constant 4.000000e-01 : f32
    %137 = vector.broadcast %cst_44 : f32 to vector<4x16xf32>
    %138 = arith.mulf %137, %136 : vector<4x16xf32>
    %139 = vector.extract_strided_slice %5 {offsets = [0, 6, 0, 0], sizes = [1, 1, 4, 16], strides = [1, 1, 1, 1]} : vector<2x8x4x16xf32> to vector<1x1x4x16xf32>
    %140 = vector.shape_cast %139 : vector<1x1x4x16xf32> to vector<4x16xf32>
    %cst_45 = arith.constant 6.000000e-01 : f32
    %141 = vector.broadcast %cst_45 : f32 to vector<4x16xf32>
    %142 = arith.mulf %141, %140 : vector<4x16xf32>
    %143 = arith.addf %138, %142 : vector<4x16xf32>
    %144 = arith.truncf %143 : vector<4x16xf32> to vector<4x16xbf16>
    %c4_46 = arith.constant 4 : index
    %c209 = arith.constant 209 : index
    %145 = vector.load %arg12[%c4_46, %c209] : memref<8x580xbf16, #tpu.memory_space<vmem>>, vector<4x16xbf16>
    tpu.vector_store %arg12[%c4_46, %c209], %144 {strides = array<i32>} : memref<8x580xbf16, #tpu.memory_space<vmem>>, vector<4x16xbf16>,
    %146 = vector.extract_strided_slice %5 {offsets = [0, 6, 0, 0], sizes = [1, 1, 4, 16], strides = [1, 1, 1, 1]} : vector<2x8x4x16xf32> to vector<1x1x4x16xf32>
    %147 = vector.shape_cast %146 : vector<1x1x4x16xf32> to vector<4x16xf32>
    %cst_47 = arith.constant 0.933333337 : f32
    %148 = vector.broadcast %cst_47 : f32 to vector<4x16xf32>
    %149 = arith.mulf %148, %147 : vector<4x16xf32>
    %150 = vector.extract_strided_slice %5 {offsets = [0, 7, 0, 0], sizes = [1, 1, 4, 16], strides = [1, 1, 1, 1]} : vector<2x8x4x16xf32> to vector<1x1x4x16xf32>
    %151 = vector.shape_cast %150 : vector<1x1x4x16xf32> to vector<4x16xf32>
    %cst_48 = arith.constant 0.0666666701 : f32
    %152 = vector.broadcast %cst_48 : f32 to vector<4x16xf32>
    %153 = arith.mulf %152, %151 : vector<4x16xf32>
    %154 = arith.addf %149, %153 : vector<4x16xf32>
    %155 = arith.truncf %154 : vector<4x16xf32> to vector<4x16xbf16>
    %c4_49 = arith.constant 4 : index
    %c225 = arith.constant 225 : index
    %156 = vector.load %arg12[%c4_49, %c225] : memref<8x580xbf16, #tpu.memory_space<vmem>>, vector<4x16xbf16>
    tpu.vector_store %arg12[%c4_49, %c225], %155 {strides = array<i32>} : memref<8x580xbf16, #tpu.memory_space<vmem>>, vector<4x16xbf16>,
    %157 = vector.extract_strided_slice %5 {offsets = [0, 6, 0, 0], sizes = [1, 1, 4, 16], strides = [1, 1, 1, 1]} : vector<2x8x4x16xf32> to vector<1x1x4x16xf32>
    %158 = vector.shape_cast %157 : vector<1x1x4x16xf32> to vector<4x16xf32>
    %cst_50 = arith.constant 0.466666669 : f32
    %159 = vector.broadcast %cst_50 : f32 to vector<4x16xf32>
    %160 = arith.mulf %159, %158 : vector<4x16xf32>
    %161 = vector.extract_strided_slice %5 {offsets = [0, 7, 0, 0], sizes = [1, 1, 4, 16], strides = [1, 1, 1, 1]} : vector<2x8x4x16xf32> to vector<1x1x4x16xf32>
    %162 = vector.shape_cast %161 : vector<1x1x4x16xf32> to vector<4x16xf32>
    %cst_51 = arith.constant 0.533333361 : f32
    %163 = vector.broadcast %cst_51 : f32 to vector<4x16xf32>
    %164 = arith.mulf %163, %162 : vector<4x16xf32>
    %165 = arith.addf %160, %164 : vector<4x16xf32>
    %166 = arith.truncf %165 : vector<4x16xf32> to vector<4x16xbf16>
    %c4_52 = arith.constant 4 : index
    %c241 = arith.constant 241 : index
    %167 = vector.load %arg12[%c4_52, %c241] : memref<8x580xbf16, #tpu.memory_space<vmem>>, vector<4x16xbf16>
    tpu.vector_store %arg12[%c4_52, %c241], %166 {strides = array<i32>} : memref<8x580xbf16, #tpu.memory_space<vmem>>, vector<4x16xbf16>,
    %168 = vector.extract_strided_slice %5 {offsets = [0, 7, 0, 0], sizes = [1, 1, 4, 16], strides = [1, 1, 1, 1]} : vector<2x8x4x16xf32> to vector<1x1x4x16xf32>
    %169 = vector.shape_cast %168 : vector<1x1x4x16xf32> to vector<4x16xf32>
    %170 = arith.truncf %169 : vector<4x16xf32> to vector<4x16xbf16>
    %c4_53 = arith.constant 4 : index
    %c257 = arith.constant 257 : index
    %171 = vector.load %arg12[%c4_53, %c257] : memref<8x580xbf16, #tpu.memory_space<vmem>>, vector<4x16xbf16>
    tpu.vector_store %arg12[%c4_53, %c257], %170 {strides = array<i32>} : memref<8x580xbf16, #tpu.memory_space<vmem>>, vector<4x16xbf16>,
    %c1 = arith.constant 1 : index
    %c0_54 = arith.constant 0 : index
    %c0_55 = arith.constant 0 : index
    %172 = vector.load %arg0[%c1, %c0_54, %c0_55] : memref<2x4x256xf32, #tpu.memory_space<vmem>>, vector<1x4x256xf32>
    %173 = vector.shape_cast %172 : vector<1x4x256xf32> to vector<4x256xf32>
    %174 = arith.truncf %173 : vector<4x256xf32> to vector<4x256xbf16>
    %c0_56 = arith.constant 0 : index
    %c307 = arith.constant 307 : index
    %175 = vector.load %arg12[%c0_56, %c307] : memref<8x580xbf16, #tpu.memory_space<vmem>>, vector<4x256xbf16>
    tpu.vector_store %arg12[%c0_56, %c307], %174 {strides = array<i32>} : memref<8x580xbf16, #tpu.memory_space<vmem>>, vector<4x256xbf16>,
    %176 = vector.extract_strided_slice %5 {offsets = [1, 0, 0, 0], sizes = [1, 1, 4, 16], strides = [1, 1, 1, 1]} : vector<2x8x4x16xf32> to vector<1x1x4x16xf32>
    %177 = vector.shape_cast %176 : vector<1x1x4x16xf32> to vector<4x16xf32>
    %178 = arith.truncf %177 : vector<4x16xf32> to vector<4x16xbf16>
    %c4_57 = arith.constant 4 : index
    %c307_58 = arith.constant 307 : index
    %179 = vector.load %arg12[%c4_57, %c307_58] : memref<8x580xbf16, #tpu.memory_space<vmem>>, vector<4x16xbf16>
    tpu.vector_store %arg12[%c4_57, %c307_58], %178 {strides = array<i32>} : memref<8x580xbf16, #tpu.memory_space<vmem>>, vector<4x16xbf16>,
    %180 = vector.extract_strided_slice %5 {offsets = [1, 0, 0, 0], sizes = [1, 1, 4, 16], strides = [1, 1, 1, 1]} : vector<2x8x4x16xf32> to vector<1x1x4x16xf32>
    %181 = vector.shape_cast %180 : vector<1x1x4x16xf32> to vector<4x16xf32>
    %cst_59 = arith.constant 0.533333361 : f32
    %182 = vector.broadcast %cst_59 : f32 to vector<4x16xf32>
    %183 = arith.mulf %182, %181 : vector<4x16xf32>
    %184 = vector.extract_strided_slice %5 {offsets = [1, 1, 0, 0], sizes = [1, 1, 4, 16], strides = [1, 1, 1, 1]} : vector<2x8x4x16xf32> to vector<1x1x4x16xf32>
    %185 = vector.shape_cast %184 : vector<1x1x4x16xf32> to vector<4x16xf32>
    %cst_60 = arith.constant 0.466666669 : f32
    %186 = vector.broadcast %cst_60 : f32 to vector<4x16xf32>
    %187 = arith.mulf %186, %185 : vector<4x16xf32>
    %188 = arith.addf %183, %187 : vector<4x16xf32>
    %189 = arith.truncf %188 : vector<4x16xf32> to vector<4x16xbf16>
    %c4_61 = arith.constant 4 : index
    %c323 = arith.constant 323 : index
    %190 = vector.load %arg12[%c4_61, %c323] : memref<8x580xbf16, #tpu.memory_space<vmem>>, vector<4x16xbf16>
    tpu.vector_store %arg12[%c4_61, %c323], %189 {strides = array<i32>} : memref<8x580xbf16, #tpu.memory_space<vmem>>, vector<4x16xbf16>,
    %191 = vector.extract_strided_slice %5 {offsets = [1, 0, 0, 0], sizes = [1, 1, 4, 16], strides = [1, 1, 1, 1]} : vector<2x8x4x16xf32> to vector<1x1x4x16xf32>
    %192 = vector.shape_cast %191 : vector<1x1x4x16xf32> to vector<4x16xf32>
    %cst_62 = arith.constant 0.0666666701 : f32
    %193 = vector.broadcast %cst_62 : f32 to vector<4x16xf32>
    %194 = arith.mulf %193, %192 : vector<4x16xf32>
    %195 = vector.extract_strided_slice %5 {offsets = [1, 1, 0, 0], sizes = [1, 1, 4, 16], strides = [1, 1, 1, 1]} : vector<2x8x4x16xf32> to vector<1x1x4x16xf32>
    %196 = vector.shape_cast %195 : vector<1x1x4x16xf32> to vector<4x16xf32>
    %cst_63 = arith.constant 0.933333337 : f32
    %197 = vector.broadcast %cst_63 : f32 to vector<4x16xf32>
    %198 = arith.mulf %197, %196 : vector<4x16xf32>
    %199 = arith.addf %194, %198 : vector<4x16xf32>
    %200 = arith.truncf %199 : vector<4x16xf32> to vector<4x16xbf16>
    %c4_64 = arith.constant 4 : index
    %c339 = arith.constant 339 : index
    %201 = vector.load %arg12[%c4_64, %c339] : memref<8x580xbf16, #tpu.memory_space<vmem>>, vector<4x16xbf16>
    tpu.vector_store %arg12[%c4_64, %c339], %200 {strides = array<i32>} : memref<8x580xbf16, #tpu.memory_space<vmem>>, vector<4x16xbf16>,
    %202 = vector.extract_strided_slice %5 {offsets = [1, 1, 0, 0], sizes = [1, 1, 4, 16], strides = [1, 1, 1, 1]} : vector<2x8x4x16xf32> to vector<1x1x4x16xf32>
    %203 = vector.shape_cast %202 : vector<1x1x4x16xf32> to vector<4x16xf32>
    %cst_65 = arith.constant 6.000000e-01 : f32
    %204 = vector.broadcast %cst_65 : f32 to vector<4x16xf32>
    %205 = arith.mulf %204, %203 : vector<4x16xf32>
    %206 = vector.extract_strided_slice %5 {offsets = [1, 2, 0, 0], sizes = [1, 1, 4, 16], strides = [1, 1, 1, 1]} : vector<2x8x4x16xf32> to vector<1x1x4x16xf32>
    %207 = vector.shape_cast %206 : vector<1x1x4x16xf32> to vector<4x16xf32>
    %cst_66 = arith.constant 4.000000e-01 : f32
    %208 = vector.broadcast %cst_66 : f32 to vector<4x16xf32>
    %209 = arith.mulf %208, %207 : vector<4x16xf32>
    %210 = arith.addf %205, %209 : vector<4x16xf32>
    %211 = arith.truncf %210 : vector<4x16xf32> to vector<4x16xbf16>
    %c4_67 = arith.constant 4 : index
    %c355 = arith.constant 355 : index
    %212 = vector.load %arg12[%c4_67, %c355] : memref<8x580xbf16, #tpu.memory_space<vmem>>, vector<4x16xbf16>
    tpu.vector_store %arg12[%c4_67, %c355], %211 {strides = array<i32>} : memref<8x580xbf16, #tpu.memory_space<vmem>>, vector<4x16xbf16>,
    %213 = vector.extract_strided_slice %5 {offsets = [1, 1, 0, 0], sizes = [1, 1, 4, 16], strides = [1, 1, 1, 1]} : vector<2x8x4x16xf32> to vector<1x1x4x16xf32>
    %214 = vector.shape_cast %213 : vector<1x1x4x16xf32> to vector<4x16xf32>
    %cst_68 = arith.constant 0.13333334 : f32
    %215 = vector.broadcast %cst_68 : f32 to vector<4x16xf32>
    %216 = arith.mulf %215, %214 : vector<4x16xf32>
    %217 = vector.extract_strided_slice %5 {offsets = [1, 2, 0, 0], sizes = [1, 1, 4, 16], strides = [1, 1, 1, 1]} : vector<2x8x4x16xf32> to vector<1x1x4x16xf32>
    %218 = vector.shape_cast %217 : vector<1x1x4x16xf32> to vector<4x16xf32>
    %cst_69 = arith.constant 0.866666674 : f32
    %219 = vector.broadcast %cst_69 : f32 to vector<4x16xf32>
    %220 = arith.mulf %219, %218 : vector<4x16xf32>
    %221 = arith.addf %216, %220 : vector<4x16xf32>
    %222 = arith.truncf %221 : vector<4x16xf32> to vector<4x16xbf16>
    %c4_70 = arith.constant 4 : index
    %c371 = arith.constant 371 : index
    %223 = vector.load %arg12[%c4_70, %c371] : memref<8x580xbf16, #tpu.memory_space<vmem>>, vector<4x16xbf16>
    tpu.vector_store %arg12[%c4_70, %c371], %222 {strides = array<i32>} : memref<8x580xbf16, #tpu.memory_space<vmem>>, vector<4x16xbf16>,
    %224 = vector.extract_strided_slice %5 {offsets = [1, 2, 0, 0], sizes = [1, 1, 4, 16], strides = [1, 1, 1, 1]} : vector<2x8x4x16xf32> to vector<1x1x4x16xf32>
    %225 = vector.shape_cast %224 : vector<1x1x4x16xf32> to vector<4x16xf32>
    %cst_71 = arith.constant 0.666666686 : f32
    %226 = vector.broadcast %cst_71 : f32 to vector<4x16xf32>
    %227 = arith.mulf %226, %225 : vector<4x16xf32>
    %228 = vector.extract_strided_slice %5 {offsets = [1, 3, 0, 0], sizes = [1, 1, 4, 16], strides = [1, 1, 1, 1]} : vector<2x8x4x16xf32> to vector<1x1x4x16xf32>
    %229 = vector.shape_cast %228 : vector<1x1x4x16xf32> to vector<4x16xf32>
    %cst_72 = arith.constant 0.333333343 : f32
    %230 = vector.broadcast %cst_72 : f32 to vector<4x16xf32>
    %231 = arith.mulf %230, %229 : vector<4x16xf32>
    %232 = arith.addf %227, %231 : vector<4x16xf32>
    %233 = arith.truncf %232 : vector<4x16xf32> to vector<4x16xbf16>
    %c4_73 = arith.constant 4 : index
    %c387 = arith.constant 387 : index
    %234 = vector.load %arg12[%c4_73, %c387] : memref<8x580xbf16, #tpu.memory_space<vmem>>, vector<4x16xbf16>
    tpu.vector_store %arg12[%c4_73, %c387], %233 {strides = array<i32>} : memref<8x580xbf16, #tpu.memory_space<vmem>>, vector<4x16xbf16>,
    %235 = vector.extract_strided_slice %5 {offsets = [1, 2, 0, 0], sizes = [1, 1, 4, 16], strides = [1, 1, 1, 1]} : vector<2x8x4x16xf32> to vector<1x1x4x16xf32>
    %236 = vector.shape_cast %235 : vector<1x1x4x16xf32> to vector<4x16xf32>
    %cst_74 = arith.constant 2.000000e-01 : f32
    %237 = vector.broadcast %cst_74 : f32 to vector<4x16xf32>
    %238 = arith.mulf %237, %236 : vector<4x16xf32>
    %239 = vector.extract_strided_slice %5 {offsets = [1, 3, 0, 0], sizes = [1, 1, 4, 16], strides = [1, 1, 1, 1]} : vector<2x8x4x16xf32> to vector<1x1x4x16xf32>
    %240 = vector.shape_cast %239 : vector<1x1x4x16xf32> to vector<4x16xf32>
    %cst_75 = arith.constant 8.000000e-01 : f32
    %241 = vector.broadcast %cst_75 : f32 to vector<4x16xf32>
    %242 = arith.mulf %241, %240 : vector<4x16xf32>
    %243 = arith.addf %238, %242 : vector<4x16xf32>
    %244 = arith.truncf %243 : vector<4x16xf32> to vector<4x16xbf16>
    %c4_76 = arith.constant 4 : index
    %c403 = arith.constant 403 : index
    %245 = vector.load %arg12[%c4_76, %c403] : memref<8x580xbf16, #tpu.memory_space<vmem>>, vector<4x16xbf16>
    tpu.vector_store %arg12[%c4_76, %c403], %244 {strides = array<i32>} : memref<8x580xbf16, #tpu.memory_space<vmem>>, vector<4x16xbf16>,
    %246 = vector.extract_strided_slice %5 {offsets = [1, 3, 0, 0], sizes = [1, 1, 4, 16], strides = [1, 1, 1, 1]} : vector<2x8x4x16xf32> to vector<1x1x4x16xf32>
    %247 = vector.shape_cast %246 : vector<1x1x4x16xf32> to vector<4x16xf32>
    %cst_77 = arith.constant 0.733333349 : f32
    %248 = vector.broadcast %cst_77 : f32 to vector<4x16xf32>
    %249 = arith.mulf %248, %247 : vector<4x16xf32>
    %250 = vector.extract_strided_slice %5 {offsets = [1, 4, 0, 0], sizes = [1, 1, 4, 16], strides = [1, 1, 1, 1]} : vector<2x8x4x16xf32> to vector<1x1x4x16xf32>
    %251 = vector.shape_cast %250 : vector<1x1x4x16xf32> to vector<4x16xf32>
    %cst_78 = arith.constant 0.266666681 : f32
    %252 = vector.broadcast %cst_78 : f32 to vector<4x16xf32>
    %253 = arith.mulf %252, %251 : vector<4x16xf32>
    %254 = arith.addf %249, %253 : vector<4x16xf32>
    %255 = arith.truncf %254 : vector<4x16xf32> to vector<4x16xbf16>
    %c4_79 = arith.constant 4 : index
    %c419 = arith.constant 419 : index
    %256 = vector.load %arg12[%c4_79, %c419] : memref<8x580xbf16, #tpu.memory_space<vmem>>, vector<4x16xbf16>
    tpu.vector_store %arg12[%c4_79, %c419], %255 {strides = array<i32>} : memref<8x580xbf16, #tpu.memory_space<vmem>>, vector<4x16xbf16>,
    %257 = vector.extract_strided_slice %5 {offsets = [1, 3, 0, 0], sizes = [1, 1, 4, 16], strides = [1, 1, 1, 1]} : vector<2x8x4x16xf32> to vector<1x1x4x16xf32>
    %258 = vector.shape_cast %257 : vector<1x1x4x16xf32> to vector<4x16xf32>
    %cst_80 = arith.constant 0.266666681 : f32
    %259 = vector.broadcast %cst_80 : f32 to vector<4x16xf32>
    %260 = arith.mulf %259, %258 : vector<4x16xf32>
    %261 = vector.extract_strided_slice %5 {offsets = [1, 4, 0, 0], sizes = [1, 1, 4, 16], strides = [1, 1, 1, 1]} : vector<2x8x4x16xf32> to vector<1x1x4x16xf32>
    %262 = vector.shape_cast %261 : vector<1x1x4x16xf32> to vector<4x16xf32>
    %cst_81 = arith.constant 0.733333349 : f32
    %263 = vector.broadcast %cst_81 : f32 to vector<4x16xf32>
    %264 = arith.mulf %263, %262 : vector<4x16xf32>
    %265 = arith.addf %260, %264 : vector<4x16xf32>
    %266 = arith.truncf %265 : vector<4x16xf32> to vector<4x16xbf16>
    %c4_82 = arith.constant 4 : index
    %c435 = arith.constant 435 : index
    %267 = vector.load %arg12[%c4_82, %c435] : memref<8x580xbf16, #tpu.memory_space<vmem>>, vector<4x16xbf16>
    tpu.vector_store %arg12[%c4_82, %c435], %266 {strides = array<i32>} : memref<8x580xbf16, #tpu.memory_space<vmem>>, vector<4x16xbf16>,
    %268 = vector.extract_strided_slice %5 {offsets = [1, 4, 0, 0], sizes = [1, 1, 4, 16], strides = [1, 1, 1, 1]} : vector<2x8x4x16xf32> to vector<1x1x4x16xf32>
    %269 = vector.shape_cast %268 : vector<1x1x4x16xf32> to vector<4x16xf32>
    %cst_83 = arith.constant 8.000000e-01 : f32
    %270 = vector.broadcast %cst_83 : f32 to vector<4x16xf32>
    %271 = arith.mulf %270, %269 : vector<4x16xf32>
    %272 = vector.extract_strided_slice %5 {offsets = [1, 5, 0, 0], sizes = [1, 1, 4, 16], strides = [1, 1, 1, 1]} : vector<2x8x4x16xf32> to vector<1x1x4x16xf32>
    %273 = vector.shape_cast %272 : vector<1x1x4x16xf32> to vector<4x16xf32>
    %cst_84 = arith.constant 2.000000e-01 : f32
    %274 = vector.broadcast %cst_84 : f32 to vector<4x16xf32>
    %275 = arith.mulf %274, %273 : vector<4x16xf32>
    %276 = arith.addf %271, %275 : vector<4x16xf32>
    %277 = arith.truncf %276 : vector<4x16xf32> to vector<4x16xbf16>
    %c4_85 = arith.constant 4 : index
    %c451 = arith.constant 451 : index
    %278 = vector.load %arg12[%c4_85, %c451] : memref<8x580xbf16, #tpu.memory_space<vmem>>, vector<4x16xbf16>
    tpu.vector_store %arg12[%c4_85, %c451], %277 {strides = array<i32>} : memref<8x580xbf16, #tpu.memory_space<vmem>>, vector<4x16xbf16>,
    %279 = vector.extract_strided_slice %5 {offsets = [1, 4, 0, 0], sizes = [1, 1, 4, 16], strides = [1, 1, 1, 1]} : vector<2x8x4x16xf32> to vector<1x1x4x16xf32>
    %280 = vector.shape_cast %279 : vector<1x1x4x16xf32> to vector<4x16xf32>
    %cst_86 = arith.constant 0.333333343 : f32
    %281 = vector.broadcast %cst_86 : f32 to vector<4x16xf32>
    %282 = arith.mulf %281, %280 : vector<4x16xf32>
    %283 = vector.extract_strided_slice %5 {offsets = [1, 5, 0, 0], sizes = [1, 1, 4, 16], strides = [1, 1, 1, 1]} : vector<2x8x4x16xf32> to vector<1x1x4x16xf32>
    %284 = vector.shape_cast %283 : vector<1x1x4x16xf32> to vector<4x16xf32>
    %cst_87 = arith.constant 0.666666686 : f32
    %285 = vector.broadcast %cst_87 : f32 to vector<4x16xf32>
    %286 = arith.mulf %285, %284 : vector<4x16xf32>
    %287 = arith.addf %282, %286 : vector<4x16xf32>
    %288 = arith.truncf %287 : vector<4x16xf32> to vector<4x16xbf16>
    %c4_88 = arith.constant 4 : index
    %c467 = arith.constant 467 : index
    %289 = vector.load %arg12[%c4_88, %c467] : memref<8x580xbf16, #tpu.memory_space<vmem>>, vector<4x16xbf16>
    tpu.vector_store %arg12[%c4_88, %c467], %288 {strides = array<i32>} : memref<8x580xbf16, #tpu.memory_space<vmem>>, vector<4x16xbf16>,
    %290 = vector.extract_strided_slice %5 {offsets = [1, 5, 0, 0], sizes = [1, 1, 4, 16], strides = [1, 1, 1, 1]} : vector<2x8x4x16xf32> to vector<1x1x4x16xf32>
    %291 = vector.shape_cast %290 : vector<1x1x4x16xf32> to vector<4x16xf32>
    %cst_89 = arith.constant 0.866666674 : f32
    %292 = vector.broadcast %cst_89 : f32 to vector<4x16xf32>
    %293 = arith.mulf %292, %291 : vector<4x16xf32>
    %294 = vector.extract_strided_slice %5 {offsets = [1, 6, 0, 0], sizes = [1, 1, 4, 16], strides = [1, 1, 1, 1]} : vector<2x8x4x16xf32> to vector<1x1x4x16xf32>
    %295 = vector.shape_cast %294 : vector<1x1x4x16xf32> to vector<4x16xf32>
    %cst_90 = arith.constant 0.13333334 : f32
    %296 = vector.broadcast %cst_90 : f32 to vector<4x16xf32>
    %297 = arith.mulf %296, %295 : vector<4x16xf32>
    %298 = arith.addf %293, %297 : vector<4x16xf32>
    %299 = arith.truncf %298 : vector<4x16xf32> to vector<4x16xbf16>
    %c4_91 = arith.constant 4 : index
    %c483 = arith.constant 483 : index
    %300 = vector.load %arg12[%c4_91, %c483] : memref<8x580xbf16, #tpu.memory_space<vmem>>, vector<4x16xbf16>
    tpu.vector_store %arg12[%c4_91, %c483], %299 {strides = array<i32>} : memref<8x580xbf16, #tpu.memory_space<vmem>>, vector<4x16xbf16>,
    %301 = vector.extract_strided_slice %5 {offsets = [1, 5, 0, 0], sizes = [1, 1, 4, 16], strides = [1, 1, 1, 1]} : vector<2x8x4x16xf32> to vector<1x1x4x16xf32>
    %302 = vector.shape_cast %301 : vector<1x1x4x16xf32> to vector<4x16xf32>
    %cst_92 = arith.constant 4.000000e-01 : f32
    %303 = vector.broadcast %cst_92 : f32 to vector<4x16xf32>
    %304 = arith.mulf %303, %302 : vector<4x16xf32>
    %305 = vector.extract_strided_slice %5 {offsets = [1, 6, 0, 0], sizes = [1, 1, 4, 16], strides = [1, 1, 1, 1]} : vector<2x8x4x16xf32> to vector<1x1x4x16xf32>
    %306 = vector.shape_cast %305 : vector<1x1x4x16xf32> to vector<4x16xf32>
    %cst_93 = arith.constant 6.000000e-01 : f32
    %307 = vector.broadcast %cst_93 : f32 to vector<4x16xf32>
    %308 = arith.mulf %307, %306 : vector<4x16xf32>
    %309 = arith.addf %304, %308 : vector<4x16xf32>
    %310 = arith.truncf %309 : vector<4x16xf32> to vector<4x16xbf16>
    %c4_94 = arith.constant 4 : index
    %c499 = arith.constant 499 : index
    %311 = vector.load %arg12[%c4_94, %c499] : memref<8x580xbf16, #tpu.memory_space<vmem>>, vector<4x16xbf16>
    tpu.vector_store %arg12[%c4_94, %c499], %310 {strides = array<i32>} : memref<8x580xbf16, #tpu.memory_space<vmem>>, vector<4x16xbf16>,
    %312 = vector.extract_strided_slice %5 {offsets = [1, 6, 0, 0], sizes = [1, 1, 4, 16], strides = [1, 1, 1, 1]} : vector<2x8x4x16xf32> to vector<1x1x4x16xf32>
    %313 = vector.shape_cast %312 : vector<1x1x4x16xf32> to vector<4x16xf32>
    %cst_95 = arith.constant 0.933333337 : f32
    %314 = vector.broadcast %cst_95 : f32 to vector<4x16xf32>
    %315 = arith.mulf %314, %313 : vector<4x16xf32>
    %316 = vector.extract_strided_slice %5 {offsets = [1, 7, 0, 0], sizes = [1, 1, 4, 16], strides = [1, 1, 1, 1]} : vector<2x8x4x16xf32> to vector<1x1x4x16xf32>
    %317 = vector.shape_cast %316 : vector<1x1x4x16xf32> to vector<4x16xf32>
    %cst_96 = arith.constant 0.0666666701 : f32
    %318 = vector.broadcast %cst_96 : f32 to vector<4x16xf32>
    %319 = arith.mulf %318, %317 : vector<4x16xf32>
    %320 = arith.addf %315, %319 : vector<4x16xf32>
    %321 = arith.truncf %320 : vector<4x16xf32> to vector<4x16xbf16>
    %c4_97 = arith.constant 4 : index
    %c515 = arith.constant 515 : index
    %322 = vector.load %arg12[%c4_97, %c515] : memref<8x580xbf16, #tpu.memory_space<vmem>>, vector<4x16xbf16>
    tpu.vector_store %arg12[%c4_97, %c515], %321 {strides = array<i32>} : memref<8x580xbf16, #tpu.memory_space<vmem>>, vector<4x16xbf16>,
    %323 = vector.extract_strided_slice %5 {offsets = [1, 6, 0, 0], sizes = [1, 1, 4, 16], strides = [1, 1, 1, 1]} : vector<2x8x4x16xf32> to vector<1x1x4x16xf32>
    %324 = vector.shape_cast %323 : vector<1x1x4x16xf32> to vector<4x16xf32>
    %cst_98 = arith.constant 0.466666669 : f32
    %325 = vector.broadcast %cst_98 : f32 to vector<4x16xf32>
    %326 = arith.mulf %325, %324 : vector<4x16xf32>
    %327 = vector.extract_strided_slice %5 {offsets = [1, 7, 0, 0], sizes = [1, 1, 4, 16], strides = [1, 1, 1, 1]} : vector<2x8x4x16xf32> to vector<1x1x4x16xf32>
    %328 = vector.shape_cast %327 : vector<1x1x4x16xf32> to vector<4x16xf32>
    %cst_99 = arith.constant 0.533333361 : f32
    %329 = vector.broadcast %cst_99 : f32 to vector<4x16xf32>
    %330 = arith.mulf %329, %328 : vector<4x16xf32>
    %331 = arith.addf %326, %330 : vector<4x16xf32>
    %332 = arith.truncf %331 : vector<4x16xf32> to vector<4x16xbf16>
    %c4_100 = arith.constant 4 : index
    %c531 = arith.constant 531 : index
    %333 = vector.load %arg12[%c4_100, %c531] : memref<8x580xbf16, #tpu.memory_space<vmem>>, vector<4x16xbf16>
    tpu.vector_store %arg12[%c4_100, %c531], %332 {strides = array<i32>} : memref<8x580xbf16, #tpu.memory_space<vmem>>, vector<4x16xbf16>,
    %334 = vector.extract_strided_slice %5 {offsets = [1, 7, 0, 0], sizes = [1, 1, 4, 16], strides = [1, 1, 1, 1]} : vector<2x8x4x16xf32> to vector<1x1x4x16xf32>
    %335 = vector.shape_cast %334 : vector<1x1x4x16xf32> to vector<4x16xf32>
    %336 = arith.truncf %335 : vector<4x16xf32> to vector<4x16xbf16>
    %c4_101 = arith.constant 4 : index
    %c547 = arith.constant 547 : index
    %337 = vector.load %arg12[%c4_101, %c547] : memref<8x580xbf16, #tpu.memory_space<vmem>>, vector<4x16xbf16>
    tpu.vector_store %arg12[%c4_101, %c547], %336 {strides = array<i32>} : memref<8x580xbf16, #tpu.memory_space<vmem>>, vector<4x16xbf16>,
    %c0_102 = arith.constant 0 : index
    %c0_103 = arith.constant 0 : index
    %338 = vector.load %arg3[%c0_102, %c0_103] : memref<1x546xf32, #tpu.memory_space<vmem>>, vector<1x546xf32>
    %c0_104 = arith.constant 0 : index
    %c0_105 = arith.constant 0 : index
    %339 = vector.load %arg4[%c0_104, %c0_105] : memref<1x546xf32, #tpu.memory_space<vmem>>, vector<1x546xf32>
    %c0_106 = arith.constant 0 : index
    %c0_107 = arith.constant 0 : index
    %340 = vector.load %arg12[%c0_106, %c0_107] : memref<8x580xbf16, #tpu.memory_space<vmem>>, vector<8x546xbf16>
    %c0_108 = arith.constant 0 : index
    %c0_109 = arith.constant 0 : index
    %c0_110 = arith.constant 0 : index
    %341 = vector.load %arg5[%c0_108, %c0_109, %c0_110] : memref<9x4x8xbf16, #tpu.memory_space<vmem>>, vector<1x4x8xbf16>
    %342 = vector.shape_cast %341 : vector<1x4x8xbf16> to vector<4x8xbf16>
    %cst_111 = arith.constant dense<0.000000e+00> : vector<4x546xf32>
    %343 = tpu.matmul %342, %340, %cst_111 {dimension_numbers = #tpu.dot_dimension_numbers<[1], [0], [0], [1], [0, 0, 1, 1], [], []>} : vector<4x8xbf16>, vector<8x546xbf16>, vector<4x546xf32> -> vector<4x546xf32>
    %c0_112 = arith.constant 0 : index
    %c16 = arith.constant 16 : index
    %344 = vector.load %arg12[%c0_112, %c16] : memref<8x580xbf16, #tpu.memory_space<vmem>>, vector<8x546xbf16>
    %c3 = arith.constant 3 : index
    %c0_113 = arith.constant 0 : index
    %c0_114 = arith.constant 0 : index
    %345 = vector.load %arg5[%c3, %c0_113, %c0_114] : memref<9x4x8xbf16, #tpu.memory_space<vmem>>, vector<1x4x8xbf16>
    %346 = vector.shape_cast %345 : vector<1x4x8xbf16> to vector<4x8xbf16>
    %cst_115 = arith.constant dense<0.000000e+00> : vector<4x546xf32>
    %347 = tpu.matmul %346, %344, %cst_115 {dimension_numbers = #tpu.dot_dimension_numbers<[1], [0], [0], [1], [0, 0, 1, 1], [], []>} : vector<4x8xbf16>, vector<8x546xbf16>, vector<4x546xf32> -> vector<4x546xf32>
    %348 = arith.addf %343, %347 : vector<4x546xf32>
    %c0_116 = arith.constant 0 : index
    %c32 = arith.constant 32 : index
    %349 = vector.load %arg12[%c0_116, %c32] : memref<8x580xbf16, #tpu.memory_space<vmem>>, vector<8x546xbf16>
    %c6 = arith.constant 6 : index
    %c0_117 = arith.constant 0 : index
    %c0_118 = arith.constant 0 : index
    %350 = vector.load %arg5[%c6, %c0_117, %c0_118] : memref<9x4x8xbf16, #tpu.memory_space<vmem>>, vector<1x4x8xbf16>
    %351 = vector.shape_cast %350 : vector<1x4x8xbf16> to vector<4x8xbf16>
    %cst_119 = arith.constant dense<0.000000e+00> : vector<4x546xf32>
    %352 = tpu.matmul %351, %349, %cst_119 {dimension_numbers = #tpu.dot_dimension_numbers<[1], [0], [0], [1], [0, 0, 1, 1], [], []>} : vector<4x8xbf16>, vector<8x546xbf16>, vector<4x546xf32> -> vector<4x546xf32>
    %353 = arith.addf %348, %352 : vector<4x546xf32>
    %354 = vector.broadcast %338 : vector<1x546xf32> to vector<4x546xf32>
    %355 = arith.mulf %353, %354 : vector<4x546xf32>
    %c0_120 = arith.constant 0 : index
    %c1_121 = arith.constant 1 : index
    %356 = vector.load %arg12[%c0_120, %c1_121] : memref<8x580xbf16, #tpu.memory_space<vmem>>, vector<8x546xbf16>
    %c1_122 = arith.constant 1 : index
    %c0_123 = arith.constant 0 : index
    %c0_124 = arith.constant 0 : index
    %357 = vector.load %arg5[%c1_122, %c0_123, %c0_124] : memref<9x4x8xbf16, #tpu.memory_space<vmem>>, vector<1x4x8xbf16>
    %358 = vector.shape_cast %357 : vector<1x4x8xbf16> to vector<4x8xbf16>
    %cst_125 = arith.constant dense<0.000000e+00> : vector<4x546xf32>
    %359 = tpu.matmul %358, %356, %cst_125 {dimension_numbers = #tpu.dot_dimension_numbers<[1], [0], [0], [1], [0, 0, 1, 1], [], []>} : vector<4x8xbf16>, vector<8x546xbf16>, vector<4x546xf32> -> vector<4x546xf32>
    %c0_126 = arith.constant 0 : index
    %c17_127 = arith.constant 17 : index
    %360 = vector.load %arg12[%c0_126, %c17_127] : memref<8x580xbf16, #tpu.memory_space<vmem>>, vector<8x546xbf16>
    %c4_128 = arith.constant 4 : index
    %c0_129 = arith.constant 0 : index
    %c0_130 = arith.constant 0 : index
    %361 = vector.load %arg5[%c4_128, %c0_129, %c0_130] : memref<9x4x8xbf16, #tpu.memory_space<vmem>>, vector<1x4x8xbf16>
    %362 = vector.shape_cast %361 : vector<1x4x8xbf16> to vector<4x8xbf16>
    %cst_131 = arith.constant dense<0.000000e+00> : vector<4x546xf32>
    %363 = tpu.matmul %362, %360, %cst_131 {dimension_numbers = #tpu.dot_dimension_numbers<[1], [0], [0], [1], [0, 0, 1, 1], [], []>} : vector<4x8xbf16>, vector<8x546xbf16>, vector<4x546xf32> -> vector<4x546xf32>
    %364 = arith.addf %359, %363 : vector<4x546xf32>
    %c0_132 = arith.constant 0 : index
    %c33_133 = arith.constant 33 : index
    %365 = vector.load %arg12[%c0_132, %c33_133] : memref<8x580xbf16, #tpu.memory_space<vmem>>, vector<8x546xbf16>
    %c7 = arith.constant 7 : index
    %c0_134 = arith.constant 0 : index
    %c0_135 = arith.constant 0 : index
    %366 = vector.load %arg5[%c7, %c0_134, %c0_135] : memref<9x4x8xbf16, #tpu.memory_space<vmem>>, vector<1x4x8xbf16>
    %367 = vector.shape_cast %366 : vector<1x4x8xbf16> to vector<4x8xbf16>
    %cst_136 = arith.constant dense<0.000000e+00> : vector<4x546xf32>
    %368 = tpu.matmul %367, %365, %cst_136 {dimension_numbers = #tpu.dot_dimension_numbers<[1], [0], [0], [1], [0, 0, 1, 1], [], []>} : vector<4x8xbf16>, vector<8x546xbf16>, vector<4x546xf32> -> vector<4x546xf32>
    %369 = arith.addf %364, %368 : vector<4x546xf32>
    %370 = arith.addf %355, %369 : vector<4x546xf32>
    %c0_137 = arith.constant 0 : index
    %c2 = arith.constant 2 : index
    %371 = vector.load %arg12[%c0_137, %c2] : memref<8x580xbf16, #tpu.memory_space<vmem>>, vector<8x546xbf16>
    %c2_138 = arith.constant 2 : index
    %c0_139 = arith.constant 0 : index
    %c0_140 = arith.constant 0 : index
    %372 = vector.load %arg5[%c2_138, %c0_139, %c0_140] : memref<9x4x8xbf16, #tpu.memory_space<vmem>>, vector<1x4x8xbf16>
    %373 = vector.shape_cast %372 : vector<1x4x8xbf16> to vector<4x8xbf16>
    %cst_141 = arith.constant dense<0.000000e+00> : vector<4x546xf32>
    %374 = tpu.matmul %373, %371, %cst_141 {dimension_numbers = #tpu.dot_dimension_numbers<[1], [0], [0], [1], [0, 0, 1, 1], [], []>} : vector<4x8xbf16>, vector<8x546xbf16>, vector<4x546xf32> -> vector<4x546xf32>
    %c0_142 = arith.constant 0 : index
    %c18 = arith.constant 18 : index
    %375 = vector.load %arg12[%c0_142, %c18] : memref<8x580xbf16, #tpu.memory_space<vmem>>, vector<8x546xbf16>
    %c5 = arith.constant 5 : index
    %c0_143 = arith.constant 0 : index
    %c0_144 = arith.constant 0 : index
    %376 = vector.load %arg5[%c5, %c0_143, %c0_144] : memref<9x4x8xbf16, #tpu.memory_space<vmem>>, vector<1x4x8xbf16>
    %377 = vector.shape_cast %376 : vector<1x4x8xbf16> to vector<4x8xbf16>
    %cst_145 = arith.constant dense<0.000000e+00> : vector<4x546xf32>
    %378 = tpu.matmul %377, %375, %cst_145 {dimension_numbers = #tpu.dot_dimension_numbers<[1], [0], [0], [1], [0, 0, 1, 1], [], []>} : vector<4x8xbf16>, vector<8x546xbf16>, vector<4x546xf32> -> vector<4x546xf32>
    %379 = arith.addf %374, %378 : vector<4x546xf32>
    %c0_146 = arith.constant 0 : index
    %c34 = arith.constant 34 : index
    %380 = vector.load %arg12[%c0_146, %c34] : memref<8x580xbf16, #tpu.memory_space<vmem>>, vector<8x546xbf16>
    %c8 = arith.constant 8 : index
    %c0_147 = arith.constant 0 : index
    %c0_148 = arith.constant 0 : index
    %381 = vector.load %arg5[%c8, %c0_147, %c0_148] : memref<9x4x8xbf16, #tpu.memory_space<vmem>>, vector<1x4x8xbf16>
    %382 = vector.shape_cast %381 : vector<1x4x8xbf16> to vector<4x8xbf16>
    %cst_149 = arith.constant dense<0.000000e+00> : vector<4x546xf32>
    %383 = tpu.matmul %382, %380, %cst_149 {dimension_numbers = #tpu.dot_dimension_numbers<[1], [0], [0], [1], [0, 0, 1, 1], [], []>} : vector<4x8xbf16>, vector<8x546xbf16>, vector<4x546xf32> -> vector<4x546xf32>
    %384 = arith.addf %379, %383 : vector<4x546xf32>
    %385 = vector.broadcast %339 : vector<1x546xf32> to vector<4x546xf32>
    %386 = arith.mulf %384, %385 : vector<4x546xf32>
    %387 = arith.addf %370, %386 : vector<4x546xf32>
    %c0_150 = arith.constant 0 : index
    %c0_151 = arith.constant 0 : index
    %388 = vector.load %arg7[%c0_150, %c0_151] : memref<4x1xf32, #tpu.memory_space<vmem>>, vector<4x1xf32>
    %c0_152 = arith.constant 0 : index
    %c0_153 = arith.constant 0 : index
    %389 = vector.load %arg8[%c0_152, %c0_153] : memref<4x1xf32, #tpu.memory_space<vmem>>, vector<4x1xf32>
    %cst_154 = arith.constant 0.000000e+00 : f32
    %390 = vector.broadcast %cst_154 : f32 to vector<4x1xf32>
    %391 = vector.extract_strided_slice %387 {offsets = [0, 0], sizes = [4, 256], strides = [1, 1]} : vector<4x546xf32> to vector<4x256xf32>
    %cst_155 = arith.constant dense<0.000000e+00> : vector<4xf32>
    %392 = vector.multi_reduction <add>, %391, %cst_155 [1] : vector<4x256xf32> to vector<4xf32>
    %393 = vector.shape_cast %392 : vector<4xf32> to vector<4x1xf32>
    %394 = arith.addf %390, %393 : vector<4x1xf32>
    %395 = vector.extract_strided_slice %387 {offsets = [0, 290], sizes = [4, 256], strides = [1, 1]} : vector<4x546xf32> to vector<4x256xf32>
    %cst_156 = arith.constant dense<0.000000e+00> : vector<4xf32>
    %396 = vector.multi_reduction <add>, %395, %cst_156 [1] : vector<4x256xf32> to vector<4xf32>
    %397 = vector.shape_cast %396 : vector<4xf32> to vector<4x1xf32>
    %398 = arith.addf %394, %397 : vector<4x1xf32>
    %cst_157 = arith.constant 0.001953125 : f32
    %399 = vector.broadcast %cst_157 : f32 to vector<4x1xf32>
    %400 = arith.mulf %398, %399 : vector<4x1xf32>
    %cst_158 = arith.constant 0.000000e+00 : f32
    %401 = vector.broadcast %cst_158 : f32 to vector<4x1xf32>
    %402 = vector.extract_strided_slice %387 {offsets = [0, 0], sizes = [4, 256], strides = [1, 1]} : vector<4x546xf32> to vector<4x256xf32>
    %403 = vector.broadcast %400 : vector<4x1xf32> to vector<4x256xf32>
    %404 = arith.subf %402, %403 : vector<4x256xf32>
    %405 = arith.mulf %404, %404 : vector<4x256xf32>
    %cst_159 = arith.constant dense<0.000000e+00> : vector<4xf32>
    %406 = vector.multi_reduction <add>, %405, %cst_159 [1] : vector<4x256xf32> to vector<4xf32>
    %407 = vector.shape_cast %406 : vector<4xf32> to vector<4x1xf32>
    %408 = arith.addf %401, %407 : vector<4x1xf32>
    %409 = vector.extract_strided_slice %387 {offsets = [0, 290], sizes = [4, 256], strides = [1, 1]} : vector<4x546xf32> to vector<4x256xf32>
    %410 = vector.broadcast %400 : vector<4x1xf32> to vector<4x256xf32>
    %411 = arith.subf %409, %410 : vector<4x256xf32>
    %412 = arith.mulf %411, %411 : vector<4x256xf32>
    %cst_160 = arith.constant dense<0.000000e+00> : vector<4xf32>
    %413 = vector.multi_reduction <add>, %412, %cst_160 [1] : vector<4x256xf32> to vector<4xf32>
    %414 = vector.shape_cast %413 : vector<4xf32> to vector<4x1xf32>
    %415 = arith.addf %408, %414 : vector<4x1xf32>
    %cst_161 = arith.constant 0.001953125 : f32
    %416 = vector.broadcast %cst_161 : f32 to vector<4x1xf32>
    %417 = arith.mulf %415, %416 : vector<4x1xf32>
    %cst_162 = arith.constant 9.99999974E-6 : f32
    %418 = vector.broadcast %cst_162 : f32 to vector<4x1xf32>
    %419 = arith.addf %417, %418 : vector<4x1xf32>
    %420 = math.rsqrt %419 : vector<4x1xf32>
    %421 = arith.mulf %388, %420 : vector<4x1xf32>
    %422 = arith.mulf %400, %421 : vector<4x1xf32>
    %423 = arith.subf %389, %422 : vector<4x1xf32>
    %424 = vector.shape_cast %421 : vector<4x1xf32> to vector<4x1xf32>
    %425 = vector.broadcast %424 : vector<4x1xf32> to vector<4x256xf32>
    %426 = vector.shape_cast %423 : vector<4x1xf32> to vector<4x1xf32>
    %427 = vector.broadcast %426 : vector<4x1xf32> to vector<4x256xf32>
    %428 = vector.extract_strided_slice %387 {offsets = [0, 0], sizes = [4, 256], strides = [1, 1]} : vector<4x546xf32> to vector<4x256xf32>
    %429 = arith.mulf %428, %425 : vector<4x256xf32>
    %430 = arith.addf %429, %427 : vector<4x256xf32>
    %cst_163 = arith.constant 0.000000e+00 : f32
    %431 = vector.broadcast %cst_163 : f32 to vector<4x256xf32>
    %432 = arith.maximumf %430, %431 : vector<4x256xf32>
    %433 = arith.truncf %432 : vector<4x256xf32> to vector<4x256xbf16>
    %c0_164 = arith.constant 0 : index
    %c17_165 = arith.constant 17 : index
    %434 = vector.load %arg12[%c0_164, %c17_165] : memref<8x580xbf16, #tpu.memory_space<vmem>>, vector<4x256xbf16>
    tpu.vector_store %arg12[%c0_164, %c17_165], %433 {strides = array<i32>} : memref<8x580xbf16, #tpu.memory_space<vmem>>, vector<4x256xbf16>,
    %435 = vector.extract_strided_slice %387 {offsets = [0, 290], sizes = [4, 256], strides = [1, 1]} : vector<4x546xf32> to vector<4x256xf32>
    %436 = arith.mulf %435, %425 : vector<4x256xf32>
    %437 = arith.addf %436, %427 : vector<4x256xf32>
    %cst_166 = arith.constant 0.000000e+00 : f32
    %438 = vector.broadcast %cst_166 : f32 to vector<4x256xf32>
    %439 = arith.maximumf %437, %438 : vector<4x256xf32>
    %440 = arith.truncf %439 : vector<4x256xf32> to vector<4x256xbf16>
    %c0_167 = arith.constant 0 : index
    %c307_168 = arith.constant 307 : index
    %441 = vector.load %arg12[%c0_167, %c307_168] : memref<8x580xbf16, #tpu.memory_space<vmem>>, vector<4x256xbf16>
    tpu.vector_store %arg12[%c0_167, %c307_168], %440 {strides = array<i32>} : memref<8x580xbf16, #tpu.memory_space<vmem>>, vector<4x256xbf16>,
    %c0_169 = arith.constant 0 : index
    %c0_170 = arith.constant 0 : index
    %442 = vector.load %arg12[%c0_169, %c0_170] : memref<8x580xbf16, #tpu.memory_space<vmem>>, vector<4x546xbf16>
    %c0_171 = arith.constant 0 : index
    %c0_172 = arith.constant 0 : index
    %c0_173 = arith.constant 0 : index
    %443 = vector.load %arg6[%c0_171, %c0_172, %c0_173] : memref<9x4x4xbf16, #tpu.memory_space<vmem>>, vector<1x4x4xbf16>
    %444 = vector.shape_cast %443 : vector<1x4x4xbf16> to vector<4x4xbf16>
    %cst_174 = arith.constant dense<0.000000e+00> : vector<4x546xf32>
    %445 = tpu.matmul %444, %442, %cst_174 {dimension_numbers = #tpu.dot_dimension_numbers<[1], [0], [0], [1], [0, 0, 1, 1], [], []>} : vector<4x4xbf16>, vector<4x546xbf16>, vector<4x546xf32> -> vector<4x546xf32>
    %c0_175 = arith.constant 0 : index
    %c16_176 = arith.constant 16 : index
    %446 = vector.load %arg12[%c0_175, %c16_176] : memref<8x580xbf16, #tpu.memory_space<vmem>>, vector<4x546xbf16>
    %c3_177 = arith.constant 3 : index
    %c0_178 = arith.constant 0 : index
    %c0_179 = arith.constant 0 : index
    %447 = vector.load %arg6[%c3_177, %c0_178, %c0_179] : memref<9x4x4xbf16, #tpu.memory_space<vmem>>, vector<1x4x4xbf16>
    %448 = vector.shape_cast %447 : vector<1x4x4xbf16> to vector<4x4xbf16>
    %cst_180 = arith.constant dense<0.000000e+00> : vector<4x546xf32>
    %449 = tpu.matmul %448, %446, %cst_180 {dimension_numbers = #tpu.dot_dimension_numbers<[1], [0], [0], [1], [0, 0, 1, 1], [], []>} : vector<4x4xbf16>, vector<4x546xbf16>, vector<4x546xf32> -> vector<4x546xf32>
    %450 = arith.addf %445, %449 : vector<4x546xf32>
    %c0_181 = arith.constant 0 : index
    %c32_182 = arith.constant 32 : index
    %451 = vector.load %arg12[%c0_181, %c32_182] : memref<8x580xbf16, #tpu.memory_space<vmem>>, vector<4x546xbf16>
    %c6_183 = arith.constant 6 : index
    %c0_184 = arith.constant 0 : index
    %c0_185 = arith.constant 0 : index
    %452 = vector.load %arg6[%c6_183, %c0_184, %c0_185] : memref<9x4x4xbf16, #tpu.memory_space<vmem>>, vector<1x4x4xbf16>
    %453 = vector.shape_cast %452 : vector<1x4x4xbf16> to vector<4x4xbf16>
    %cst_186 = arith.constant dense<0.000000e+00> : vector<4x546xf32>
    %454 = tpu.matmul %453, %451, %cst_186 {dimension_numbers = #tpu.dot_dimension_numbers<[1], [0], [0], [1], [0, 0, 1, 1], [], []>} : vector<4x4xbf16>, vector<4x546xbf16>, vector<4x546xf32> -> vector<4x546xf32>
    %455 = arith.addf %450, %454 : vector<4x546xf32>
    %456 = vector.broadcast %338 : vector<1x546xf32> to vector<4x546xf32>
    %457 = arith.mulf %455, %456 : vector<4x546xf32>
    %c0_187 = arith.constant 0 : index
    %c1_188 = arith.constant 1 : index
    %458 = vector.load %arg12[%c0_187, %c1_188] : memref<8x580xbf16, #tpu.memory_space<vmem>>, vector<4x546xbf16>
    %c1_189 = arith.constant 1 : index
    %c0_190 = arith.constant 0 : index
    %c0_191 = arith.constant 0 : index
    %459 = vector.load %arg6[%c1_189, %c0_190, %c0_191] : memref<9x4x4xbf16, #tpu.memory_space<vmem>>, vector<1x4x4xbf16>
    %460 = vector.shape_cast %459 : vector<1x4x4xbf16> to vector<4x4xbf16>
    %cst_192 = arith.constant dense<0.000000e+00> : vector<4x546xf32>
    %461 = tpu.matmul %460, %458, %cst_192 {dimension_numbers = #tpu.dot_dimension_numbers<[1], [0], [0], [1], [0, 0, 1, 1], [], []>} : vector<4x4xbf16>, vector<4x546xbf16>, vector<4x546xf32> -> vector<4x546xf32>
    %c0_193 = arith.constant 0 : index
    %c17_194 = arith.constant 17 : index
    %462 = vector.load %arg12[%c0_193, %c17_194] : memref<8x580xbf16, #tpu.memory_space<vmem>>, vector<4x546xbf16>
    %c4_195 = arith.constant 4 : index
    %c0_196 = arith.constant 0 : index
    %c0_197 = arith.constant 0 : index
    %463 = vector.load %arg6[%c4_195, %c0_196, %c0_197] : memref<9x4x4xbf16, #tpu.memory_space<vmem>>, vector<1x4x4xbf16>
    %464 = vector.shape_cast %463 : vector<1x4x4xbf16> to vector<4x4xbf16>
    %cst_198 = arith.constant dense<0.000000e+00> : vector<4x546xf32>
    %465 = tpu.matmul %464, %462, %cst_198 {dimension_numbers = #tpu.dot_dimension_numbers<[1], [0], [0], [1], [0, 0, 1, 1], [], []>} : vector<4x4xbf16>, vector<4x546xbf16>, vector<4x546xf32> -> vector<4x546xf32>
    %466 = arith.addf %461, %465 : vector<4x546xf32>
    %c0_199 = arith.constant 0 : index
    %c33_200 = arith.constant 33 : index
    %467 = vector.load %arg12[%c0_199, %c33_200] : memref<8x580xbf16, #tpu.memory_space<vmem>>, vector<4x546xbf16>
    %c7_201 = arith.constant 7 : index
    %c0_202 = arith.constant 0 : index
    %c0_203 = arith.constant 0 : index
    %468 = vector.load %arg6[%c7_201, %c0_202, %c0_203] : memref<9x4x4xbf16, #tpu.memory_space<vmem>>, vector<1x4x4xbf16>
    %469 = vector.shape_cast %468 : vector<1x4x4xbf16> to vector<4x4xbf16>
    %cst_204 = arith.constant dense<0.000000e+00> : vector<4x546xf32>
    %470 = tpu.matmul %469, %467, %cst_204 {dimension_numbers = #tpu.dot_dimension_numbers<[1], [0], [0], [1], [0, 0, 1, 1], [], []>} : vector<4x4xbf16>, vector<4x546xbf16>, vector<4x546xf32> -> vector<4x546xf32>
    %471 = arith.addf %466, %470 : vector<4x546xf32>
    %472 = arith.addf %457, %471 : vector<4x546xf32>
    %c0_205 = arith.constant 0 : index
    %c2_206 = arith.constant 2 : index
    %473 = vector.load %arg12[%c0_205, %c2_206] : memref<8x580xbf16, #tpu.memory_space<vmem>>, vector<4x546xbf16>
    %c2_207 = arith.constant 2 : index
    %c0_208 = arith.constant 0 : index
    %c0_209 = arith.constant 0 : index
    %474 = vector.load %arg6[%c2_207, %c0_208, %c0_209] : memref<9x4x4xbf16, #tpu.memory_space<vmem>>, vector<1x4x4xbf16>
    %475 = vector.shape_cast %474 : vector<1x4x4xbf16> to vector<4x4xbf16>
    %cst_210 = arith.constant dense<0.000000e+00> : vector<4x546xf32>
    %476 = tpu.matmul %475, %473, %cst_210 {dimension_numbers = #tpu.dot_dimension_numbers<[1], [0], [0], [1], [0, 0, 1, 1], [], []>} : vector<4x4xbf16>, vector<4x546xbf16>, vector<4x546xf32> -> vector<4x546xf32>
    %c0_211 = arith.constant 0 : index
    %c18_212 = arith.constant 18 : index
    %477 = vector.load %arg12[%c0_211, %c18_212] : memref<8x580xbf16, #tpu.memory_space<vmem>>, vector<4x546xbf16>
    %c5_213 = arith.constant 5 : index
    %c0_214 = arith.constant 0 : index
    %c0_215 = arith.constant 0 : index
    %478 = vector.load %arg6[%c5_213, %c0_214, %c0_215] : memref<9x4x4xbf16, #tpu.memory_space<vmem>>, vector<1x4x4xbf16>
    %479 = vector.shape_cast %478 : vector<1x4x4xbf16> to vector<4x4xbf16>
    %cst_216 = arith.constant dense<0.000000e+00> : vector<4x546xf32>
    %480 = tpu.matmul %479, %477, %cst_216 {dimension_numbers = #tpu.dot_dimension_numbers<[1], [0], [0], [1], [0, 0, 1, 1], [], []>} : vector<4x4xbf16>, vector<4x546xbf16>, vector<4x546xf32> -> vector<4x546xf32>
    %481 = arith.addf %476, %480 : vector<4x546xf32>
    %c0_217 = arith.constant 0 : index
    %c34_218 = arith.constant 34 : index
    %482 = vector.load %arg12[%c0_217, %c34_218] : memref<8x580xbf16, #tpu.memory_space<vmem>>, vector<4x546xbf16>
    %c8_219 = arith.constant 8 : index
    %c0_220 = arith.constant 0 : index
    %c0_221 = arith.constant 0 : index
    %483 = vector.load %arg6[%c8_219, %c0_220, %c0_221] : memref<9x4x4xbf16, #tpu.memory_space<vmem>>, vector<1x4x4xbf16>
    %484 = vector.shape_cast %483 : vector<1x4x4xbf16> to vector<4x4xbf16>
    %cst_222 = arith.constant dense<0.000000e+00> : vector<4x546xf32>
    %485 = tpu.matmul %484, %482, %cst_222 {dimension_numbers = #tpu.dot_dimension_numbers<[1], [0], [0], [1], [0, 0, 1, 1], [], []>} : vector<4x4xbf16>, vector<4x546xbf16>, vector<4x546xf32> -> vector<4x546xf32>
    %486 = arith.addf %481, %485 : vector<4x546xf32>
    %487 = vector.broadcast %339 : vector<1x546xf32> to vector<4x546xf32>
    %488 = arith.mulf %486, %487 : vector<4x546xf32>
    %489 = arith.addf %472, %488 : vector<4x546xf32>
    %c0_223 = arith.constant 0 : index
    %c0_224 = arith.constant 0 : index
    %490 = vector.load %arg9[%c0_223, %c0_224] : memref<4x1xf32, #tpu.memory_space<vmem>>, vector<4x1xf32>
    %c0_225 = arith.constant 0 : index
    %c0_226 = arith.constant 0 : index
    %491 = vector.load %arg10[%c0_225, %c0_226] : memref<4x1xf32, #tpu.memory_space<vmem>>, vector<4x1xf32>
    %cst_227 = arith.constant 0.000000e+00 : f32
    %492 = vector.broadcast %cst_227 : f32 to vector<4x1xf32>
    %493 = vector.extract_strided_slice %489 {offsets = [0, 0], sizes = [4, 256], strides = [1, 1]} : vector<4x546xf32> to vector<4x256xf32>
    %cst_228 = arith.constant dense<0.000000e+00> : vector<4xf32>
    %494 = vector.multi_reduction <add>, %493, %cst_228 [1] : vector<4x256xf32> to vector<4xf32>
    %495 = vector.shape_cast %494 : vector<4xf32> to vector<4x1xf32>
    %496 = arith.addf %492, %495 : vector<4x1xf32>
    %497 = vector.extract_strided_slice %489 {offsets = [0, 290], sizes = [4, 256], strides = [1, 1]} : vector<4x546xf32> to vector<4x256xf32>
    %cst_229 = arith.constant dense<0.000000e+00> : vector<4xf32>
    %498 = vector.multi_reduction <add>, %497, %cst_229 [1] : vector<4x256xf32> to vector<4xf32>
    %499 = vector.shape_cast %498 : vector<4xf32> to vector<4x1xf32>
    %500 = arith.addf %496, %499 : vector<4x1xf32>
    %cst_230 = arith.constant 0.001953125 : f32
    %501 = vector.broadcast %cst_230 : f32 to vector<4x1xf32>
    %502 = arith.mulf %500, %501 : vector<4x1xf32>
    %cst_231 = arith.constant 0.000000e+00 : f32
    %503 = vector.broadcast %cst_231 : f32 to vector<4x1xf32>
    %504 = vector.extract_strided_slice %489 {offsets = [0, 0], sizes = [4, 256], strides = [1, 1]} : vector<4x546xf32> to vector<4x256xf32>
    %505 = vector.broadcast %502 : vector<4x1xf32> to vector<4x256xf32>
    %506 = arith.subf %504, %505 : vector<4x256xf32>
    %507 = arith.mulf %506, %506 : vector<4x256xf32>
    %cst_232 = arith.constant dense<0.000000e+00> : vector<4xf32>
    %508 = vector.multi_reduction <add>, %507, %cst_232 [1] : vector<4x256xf32> to vector<4xf32>
    %509 = vector.shape_cast %508 : vector<4xf32> to vector<4x1xf32>
    %510 = arith.addf %503, %509 : vector<4x1xf32>
    %511 = vector.extract_strided_slice %489 {offsets = [0, 290], sizes = [4, 256], strides = [1, 1]} : vector<4x546xf32> to vector<4x256xf32>
    %512 = vector.broadcast %502 : vector<4x1xf32> to vector<4x256xf32>
    %513 = arith.subf %511, %512 : vector<4x256xf32>
    %514 = arith.mulf %513, %513 : vector<4x256xf32>
    %cst_233 = arith.constant dense<0.000000e+00> : vector<4xf32>
    %515 = vector.multi_reduction <add>, %514, %cst_233 [1] : vector<4x256xf32> to vector<4xf32>
    %516 = vector.shape_cast %515 : vector<4xf32> to vector<4x1xf32>
    %517 = arith.addf %510, %516 : vector<4x1xf32>
    %cst_234 = arith.constant 0.001953125 : f32
    %518 = vector.broadcast %cst_234 : f32 to vector<4x1xf32>
    %519 = arith.mulf %517, %518 : vector<4x1xf32>
    %cst_235 = arith.constant 9.99999974E-6 : f32
    %520 = vector.broadcast %cst_235 : f32 to vector<4x1xf32>
    %521 = arith.addf %519, %520 : vector<4x1xf32>
    %522 = math.rsqrt %521 : vector<4x1xf32>
    %523 = arith.mulf %490, %522 : vector<4x1xf32>
    %524 = arith.mulf %502, %523 : vector<4x1xf32>
    %525 = arith.subf %491, %524 : vector<4x1xf32>
    %526 = vector.shape_cast %523 : vector<4x1xf32> to vector<4x1xf32>
    %527 = vector.broadcast %526 : vector<4x1xf32> to vector<4x256xf32>
    %528 = vector.shape_cast %525 : vector<4x1xf32> to vector<4x1xf32>
    %529 = vector.broadcast %528 : vector<4x1xf32> to vector<4x256xf32>
    %530 = vector.extract_strided_slice %489 {offsets = [0, 0], sizes = [4, 256], strides = [1, 1]} : vector<4x546xf32> to vector<4x256xf32>
    %531 = arith.mulf %530, %527 : vector<4x256xf32>
    %532 = arith.addf %531, %529 : vector<4x256xf32>
    %cst_236 = arith.constant 0.000000e+00 : f32
    %533 = vector.broadcast %cst_236 : f32 to vector<4x256xf32>
    %534 = arith.maximumf %532, %533 : vector<4x256xf32>
    %c0_237 = arith.constant 0 : index
    %c0_238 = arith.constant 0 : index
    %c0_239 = arith.constant 0 : index
    %535 = vector.load %arg11[%c0_237, %c0_238, %c0_239] : memref<2x4x256xf32, #tpu.memory_space<vmem>>, vector<1x4x256xf32>
    %536 = vector.shape_cast %535 : vector<1x4x256xf32> to vector<4x256xf32>
    %537 = vector.shape_cast %534 : vector<4x256xf32> to vector<1x4x256xf32>
    tpu.vector_store %arg11[%c0_237, %c0_238, %c0_239], %537 {strides = array<i32>} : memref<2x4x256xf32, #tpu.memory_space<vmem>>, vector<1x4x256xf32>,
    %538 = vector.extract_strided_slice %489 {offsets = [0, 290], sizes = [4, 256], strides = [1, 1]} : vector<4x546xf32> to vector<4x256xf32>
    %539 = arith.mulf %538, %527 : vector<4x256xf32>
    %540 = arith.addf %539, %529 : vector<4x256xf32>
    %cst_240 = arith.constant 0.000000e+00 : f32
    %541 = vector.broadcast %cst_240 : f32 to vector<4x256xf32>
    %542 = arith.maximumf %540, %541 : vector<4x256xf32>
    %c1_241 = arith.constant 1 : index
    %c0_242 = arith.constant 0 : index
    %c0_243 = arith.constant 0 : index
    %543 = vector.load %arg11[%c1_241, %c0_242, %c0_243] : memref<2x4x256xf32, #tpu.memory_space<vmem>>, vector<1x4x256xf32>
    %544 = vector.shape_cast %543 : vector<1x4x256xf32> to vector<4x256xf32>
    %545 = vector.shape_cast %542 : vector<4x256xf32> to vector<1x4x256xf32>
    tpu.vector_store %arg11[%c1_241, %c0_242, %c0_243], %545 {strides = array<i32>} : memref<2x4x256xf32, #tpu.memory_space<vmem>>, vector<1x4x256xf32>,
    return
  }
}

</mosaic_0001>

<llo_original>
// kernel: up_forward.1
$region0: #{up_forward.1}
  #allocation0 [shape = 'u32[]', space=smem, size = 0x4, offset = 0x4, fixed_abs, tag = 'smem constant byte address 0x4 - core index']
  #allocation1 [shape = 'u32[72,128]{1,0:T(1,128)}', space=vmem, size = 0x9000, scoped, tag = 'internal scratch']
  #allocation2 [shape = 'bf16[8,580]{1,0:T(8,128)(2,1)}', space=vmem, size = 0x2800, scoped, tag = 'scratch operand']
  %s0 = inlined_call_operand.vmem [shape: f32[2,4,256], index: 0, kind: input, shape index: {}]
  %s1 = inlined_call_operand.vmem [shape: f32[64,8], index: 1, kind: input, shape index: {}]
  %s2 = inlined_call_operand.vmem [shape: f32[8,16], index: 2, kind: input, shape index: {}]
  %s3 = inlined_call_operand.vmem [shape: f32[1,546], index: 3, kind: input, shape index: {}]
  %s4 = inlined_call_operand.vmem [shape: f32[1,546], index: 4, kind: input, shape index: {}]
  %s5 = inlined_call_operand.vmem [shape: bf16[9,4,8], index: 5, kind: input, shape index: {}]
  %s6 = inlined_call_operand.vmem [shape: bf16[9,4,4], index: 6, kind: input, shape index: {}]
  %s7 = inlined_call_operand.vmem [shape: f32[4,1], index: 7, kind: input, shape index: {}]
  %s8 = inlined_call_operand.vmem [shape: f32[4,1], index: 8, kind: input, shape index: {}]
  %s9 = inlined_call_operand.vmem [shape: f32[4,1], index: 9, kind: input, shape index: {}]
  %s10 = inlined_call_operand.vmem [shape: f32[4,1], index: 10, kind: input, shape index: {}]
  %s11 = inlined_call_operand.vmem [shape: f32[2,4,256], index: 11, kind: output, shape index: {}]
  %s12 = sld [smem:[#allocation0]]
  $region54: #{up_forward.1} parent=0
    _
  %s14 = ssub.s32 1, %s12
  %s15 = scalar_select 0, %s14, %s12
  // Predicated region
  $region2: #{up_forward.1} parent=0 // pred_check
    _
  $region3: #{up_forward.1} parent=0 // pred_check_branch
    %17 = sbr.rel (0) target = $region5
  $region4: #{up_forward.1} parent=0 // pred_region
    _
  $region5: #{up_forward.1} parent=0 // pred_fallthru
    _
  // Predicated region
  $region6: #{up_forward.1} parent=0 // pred_check
    _
  $region7: #{up_forward.1} parent=0 // pred_check_branch
    %19 = sbr.rel (0) target = $region9
  $region8: #{up_forward.1} parent=0 // pred_region
    _
  $region9: #{up_forward.1} parent=0 // pred_fallthru
    _
  // Predicated region
  $region10: #{up_forward.1} parent=0 // pred_check
    _
  $region11: #{up_forward.1} parent=0 // pred_check_branch
    %21 = sbr.rel (0) target = $region13
  $region12: #{up_forward.1} parent=0 // pred_region
    _
  $region13: #{up_forward.1} parent=0 // pred_fallthru
    _
  // Predicated region
  $region14: #{up_forward.1} parent=0 // pred_check
    _
  $region15: #{up_forward.1} parent=0 // pred_check_branch
    %23 = sbr.rel (0) target = $region17
  $region16: #{up_forward.1} parent=0 // pred_region
    _
  $region17: #{up_forward.1} parent=0 // pred_fallthru
    _
  // Predicated region
  $region18: #{up_forward.1} parent=0 // pred_check
    _
  $region19: #{up_forward.1} parent=0 // pred_check_branch
    %25 = sbr.rel (0) target = $region21
  $region20: #{up_forward.1} parent=0 // pred_region
    _
  $region21: #{up_forward.1} parent=0 // pred_fallthru
    _
  // Predicated region
  $region22: #{up_forward.1} parent=0 // pred_check
    _
  $region23: #{up_forward.1} parent=0 // pred_check_branch
    %27 = sbr.rel (0) target = $region25
  $region24: #{up_forward.1} parent=0 // pred_region
    _
  $region25: #{up_forward.1} parent=0 // pred_fallthru
    _
  // Predicated region
  $region26: #{up_forward.1} parent=0 // pred_check
    _
  $region27: #{up_forward.1} parent=0 // pred_check_branch
    %29 = sbr.rel (0) target = $region29
  $region28: #{up_forward.1} parent=0 // pred_region
    _
  $region29: #{up_forward.1} parent=0 // pred_fallthru
    _
  // Predicated region
  $region30: #{up_forward.1} parent=0 // pred_check
    _
  $region31: #{up_forward.1} parent=0 // pred_check_branch
    %31 = sbr.rel (0) target = $region33
  $region32: #{up_forward.1} parent=0 // pred_region
    _
  $region33: #{up_forward.1} parent=0 // pred_fallthru
    _
  // Predicated region
  $region34: #{up_forward.1} parent=0 // pred_check
    _
  $region35: #{up_forward.1} parent=0 // pred_check_branch
    %33 = sbr.rel (0) target = $region37
  $region36: #{up_forward.1} parent=0 // pred_region
    _
  $region37: #{up_forward.1} parent=0 // pred_fallthru
    _
  // Predicated region
  $region38: #{up_forward.1} parent=0 // pred_check
    _
  $region39: #{up_forward.1} parent=0 // pred_check_branch
    %35 = sbr.rel (0) target = $region41
  $region40: #{up_forward.1} parent=0 // pred_region
    _
  $region41: #{up_forward.1} parent=0 // pred_fallthru
    _
  // Predicated region
  $region42: #{up_forward.1} parent=0 // pred_check
    _
  $region43: #{up_forward.1} parent=0 // pred_check_branch
    %37 = sbr.rel (0) target = $region45
  $region44: #{up_forward.1} parent=0 // pred_region
    _
  $region45: #{up_forward.1} parent=0 // pred_fallthru
    _
  %39 = vst [vmem:[#allocation2] sm:$0xff] 0
  %40 = vst [vmem:[#allocation2 + $0x8] sm:$0xff] 0
  %vm41 = vcmask 551936
  %42 = vst.msk [vmem:[#allocation2 + $0x10] sm:$0xf] %vm41, 0
  %v43 = vld [vmem:[%s1] sm:$0xff]
  %v44 = vld [vmem:[%s1 + $0x8] sm:$0xff]
  %v45 = vld [vmem:[%s1 + $0x10] sm:$0xff]
  %v46 = vld [vmem:[%s1 + $0x18] sm:$0xff]
  %v47 = vld [vmem:[%s1 + $0x20] sm:$0xff]
  %v48 = vld [vmem:[%s1 + $0x28] sm:$0xff]
  %v49 = vld [vmem:[%s1 + $0x30] sm:$0xff]
  %v50 = vld [vmem:[%s1 + $0x38] sm:$0xff]
  %v51 = vld [vmem:[%s2] sm:$0xff]
  %vm52 = vcmask 64512
  %v54 = vsel %vm52, %v43, 0
  %v57 = vsel %vm52, %v44, 0
  %v60 = vsel %vm52, %v45, 0
  %v63 = vsel %vm52, %v46, 0
  %v66 = vsel %vm52, %v47, 0
  %v69 = vsel %vm52, %v48, 0
  %v72 = vsel %vm52, %v49, 0
  %v75 = vsel %vm52, %v50, 0
  %77 = vmatpush.msra.mxu0 0.0
  %78 = vmatpush.msra.mxu0 0.0
  %79 = vmatpush.msra.mxu0 0.0
  %80 = vmatpush.msra.mxu0 0.0
  %81 = vmatpush.msra.mxu0 0.0
  %82 = vmatpush.msra.mxu0 0.0
  %83 = vmatpush.msra.mxu0 0.0
  %84 = vmatpush.msra.mxu0 0.0
  %85 = vmatpush.msra.mxu0 0.0
  %86 = vmatpush.msra.mxu0 0.0
  %87 = vmatpush.msra.mxu0 0.0
  %88 = vmatpush.msra.mxu0 0.0
  %89 = vmatpush.msra.mxu0 0.0
  %90 = vmatpush.msra.mxu0 0.0
  %91 = vmatpush.msra.mxu0 0.0
  %92 = vmatpush.msra.mxu0 %v51
  %93 = vmatmul.f32.gmra.mxu0 %v54
  %v94 = vpop.f32.mrf.mxu0
  %v95 = vadd.f32 0.0, %v94
  %96 = vmatmul.f32.gmra.mxu0 %v57
  %v97 = vpop.f32.mrf.mxu0
  %v98 = vadd.f32 0.0, %v97
  %99 = vmatmul.f32.gmra.mxu0 %v60
  %v100 = vpop.f32.mrf.mxu0
  %v101 = vadd.f32 0.0, %v100
  %102 = vmatmul.f32.gmra.mxu0 %v63
  %v103 = vpop.f32.mrf.mxu0
  %v104 = vadd.f32 0.0, %v103
  %105 = vmatmul.f32.gmra.mxu0 %v66
  %v106 = vpop.f32.mrf.mxu0
  %v107 = vadd.f32 0.0, %v106
  %108 = vmatmul.f32.gmra.mxu0 %v69
  %v109 = vpop.f32.mrf.mxu0
  %v110 = vadd.f32 0.0, %v109
  %111 = vmatmul.f32.gmra.mxu0 %v72
  %v112 = vpop.f32.mrf.mxu0
  %v113 = vadd.f32 0.0, %v112
  %114 = vmatmul.f32.gmra.mxu0 %v75
  %v115 = vpop.f32.mrf.mxu0
  %v116 = vadd.f32 0.0, %v115
  %117 = vdwg.mxu0
  %v126 = vrot.slane %v95, 4
  %v127 = vrot.slane %v98, 4
  %v128 = vrot.slane %v101, 4
  %v129 = vrot.slane %v104, 4
  %v130 = vrot.slane %v107, 4
  %v131 = vrot.slane %v110, 4
  %v132 = vrot.slane %v113, 4
  %v133 = vrot.slane %v116, 4
  %v142 = vld [vmem:[%s0] sm:$0xff]
  %144 = vst [vmem:[#allocation1] ss:$2 sm:$0xff] %v142
  %v145 = vld.sshfl [vmem:[#allocation1] sm:$0xff pattern:$0x75316420]
  %v146 = vld.sshfl [vmem:[#allocation1 + $0x8] sm:$0xff pattern:$0x75316420]
  %v149 = vpack.c.bf16 %v146, %v145
  %151 = vrot.lane.b32.xlu0 %v149, 17
  %v152 = vpop.permute.xlu0 %151
  %v153 = vrot.slane %v152, 4
  %vm154 = vcmask 138240
  %v155 = vsel %vm154, %v153, %v152
  %vm158 = vcmask 1041544
  %vm159 = vcmask 1045508
  %vm160 = vmor %vm159, %vm158
  %161 = vst.msk [vmem:[#allocation2] sm:$0x33] %vm160, %v155
  %vm162 = vcmask 132096
  %163 = vst.msk [vmem:[#allocation2 + $0x8] sm:$0x3] %vm162, %v153
  %v164 = vpack.c.bf16 %v95, %v95
  %v166 = vrot.slane %v164, 6
  %167 = vrot.lane.b32.xlu0 %v166, 17
  %v168 = vpop.permute.xlu0 %167
  %vm170 = vcmask 265354
  %171 = vst.msk [vmem:[#allocation2] sm:$0xc] %vm170, %v168
  %v172 = vmul.f32 %v95, 0.53333336
  %v173 = vmul.f32 %v126, 0.46666667
  %v174 = vadd.f32 %v172, %v173
  %v175 = vpack.c.bf16 %v174, %v174
  %v177 = vrot.slane %v175, 6
  %178 = vrot.lane.b32.xlu0 %v177, 33
  %v179 = vpop.permute.xlu0 %178
  %vm181 = vcmask 396554
  %182 = vst.msk [vmem:[#allocation2] sm:$0xc] %vm181, %v179
  %v183 = vmul.f32 %v95, 0.06666667
  %v184 = vmul.f32 %v126, 0.93333334
  %v185 = vadd.f32 %v183, %v184
  %v186 = vpack.c.bf16 %v185, %v185
  %v188 = vrot.slane %v186, 6
  %189 = vrot.lane.b32.xlu0 %v188, 49
  %v190 = vpop.permute.xlu0 %189
  %vm192 = vcmask 527754
  %193 = vst.msk [vmem:[#allocation2] sm:$0xc] %vm192, %v190
  %v194 = vmul.f32 %v126, 0.6
  %v195 = vmul.f32 %v98, 0.4
  %v196 = vadd.f32 %v194, %v195
  %v197 = vpack.c.bf16 %v196, %v196
  %v199 = vrot.slane %v197, 6
  %200 = vrot.lane.b32.xlu0 %v199, 65
  %v201 = vpop.permute.xlu0 %200
  %vm203 = vcmask 658954
  %204 = vst.msk [vmem:[#allocation2] sm:$0xc] %vm203, %v201
  %v205 = vmul.f32 %v126, 0.13333334
  %v206 = vmul.f32 %v98, 0.8666667
  %v207 = vadd.f32 %v205, %v206
  %v208 = vpack.c.bf16 %v207, %v207
  %v210 = vrot.slane %v208, 6
  %211 = vrot.lane.b32.xlu0 %v210, 81
  %v212 = vpop.permute.xlu0 %211
  %vm214 = vcmask 790154
  %215 = vst.msk [vmem:[#allocation2] sm:$0xc] %vm214, %v212
  %v216 = vmul.f32 %v98, 0.6666667
  %v217 = vmul.f32 %v127, 0.33333334
  %v218 = vadd.f32 %v216, %v217
  %v219 = vpack.c.bf16 %v218, %v218
  %v221 = vrot.slane %v219, 6
  %222 = vrot.lane.b32.xlu0 %v221, 97
  %v223 = vpop.permute.xlu0 %222
  %vm225 = vcmask 921354
  %226 = vst.msk [vmem:[#allocation2] sm:$0xc] %vm225, %v223
  %v227 = vmul.f32 %v98, 0.2
  %v228 = vmul.f32 %v127, 0.8
  %v229 = vadd.f32 %v227, %v228
  %v230 = vpack.c.bf16 %v229, %v229
  %v232 = vrot.slane %v230, 6
  %233 = vrot.lane.b32.xlu0 %v232, 113
  %v234 = vpop.permute.xlu0 %233
  %v235 = vrot.slane %v234, 4
  %vm236 = vcmask 924672
  %v237 = vsel %vm236, %v235, %v234
  %vm239 = vcmask 1044362
  %vm240 = vcmask 7174
  %vm241 = vmor %vm240, %vm239
  %242 = vst.msk [vmem:[#allocation2] sm:$0xcc] %vm241, %v237
  %v243 = vmul.f32 %v127, 0.73333335
  %v244 = vmul.f32 %v101, 0.26666668
  %v245 = vadd.f32 %v243, %v244
  %v246 = vpack.c.bf16 %v245, %v245
  %v248 = vrot.slane %v246, 6
  %249 = vrot.lane.b32.xlu0 %v248, 1
  %v250 = vpop.permute.xlu0 %249
  %vm252 = vcmask 134154
  %253 = vst.msk [vmem:[#allocation2 + $0x4] sm:$0xc] %vm252, %v250
  %v254 = vmul.f32 %v127, 0.26666668
  %v255 = vmul.f32 %v101, 0.73333335
  %v256 = vadd.f32 %v254, %v255
  %v257 = vpack.c.bf16 %v256, %v256
  %v259 = vrot.slane %v257, 6
  %260 = vrot.lane.b32.xlu0 %v259, 17
  %v261 = vpop.permute.xlu0 %260
  %263 = vst.msk [vmem:[#allocation2 + $0x4] sm:$0xc] %vm170, %v261
  %v264 = vmul.f32 %v101, 0.8
  %v265 = vmul.f32 %v128, 0.2
  %v266 = vadd.f32 %v264, %v265
  %v267 = vpack.c.bf16 %v266, %v266
  %v269 = vrot.slane %v267, 6
  %270 = vrot.lane.b32.xlu0 %v269, 33
  %v271 = vpop.permute.xlu0 %270
  %273 = vst.msk [vmem:[#allocation2 + $0x4] sm:$0xc] %vm181, %v271
  %v274 = vmul.f32 %v101, 0.33333334
  %v275 = vmul.f32 %v128, 0.6666667
  %v276 = vadd.f32 %v274, %v275
  %v277 = vpack.c.bf16 %v276, %v276
  %v279 = vrot.slane %v277, 6
  %280 = vrot.lane.b32.xlu0 %v279, 49
  %v281 = vpop.permute.xlu0 %280
  %283 = vst.msk [vmem:[#allocation2 + $0x4] sm:$0xc] %vm192, %v281
  %v284 = vmul.f32 %v128, 0.8666667
  %v285 = vmul.f32 %v104, 0.13333334
  %v286 = vadd.f32 %v284, %v285
  %v287 = vpack.c.bf16 %v286, %v286
  %v289 = vrot.slane %v287, 6
  %290 = vrot.lane.b32.xlu0 %v289, 65
  %v291 = vpop.permute.xlu0 %290
  %293 = vst.msk [vmem:[#allocation2 + $0x4] sm:$0xc] %vm203, %v291
  %v294 = vmul.f32 %v128, 0.4
  %v295 = vmul.f32 %v104, 0.6
  %v296 = vadd.f32 %v294, %v295
  %v297 = vpack.c.bf16 %v296, %v296
  %v299 = vrot.slane %v297, 6
  %300 = vrot.lane.b32.xlu0 %v299, 81
  %v301 = vpop.permute.xlu0 %300
  %303 = vst.msk [vmem:[#allocation2 + $0x4] sm:$0xc] %vm214, %v301
  %v304 = vmul.f32 %v104, 0.93333334
  %v305 = vmul.f32 %v129, 0.06666667
  %v306 = vadd.f32 %v304, %v305
  %v307 = vpack.c.bf16 %v306, %v306
  %v309 = vrot.slane %v307, 6
  %310 = vrot.lane.b32.xlu0 %v309, 97
  %v311 = vpop.permute.xlu0 %310
  %313 = vst.msk [vmem:[#allocation2 + $0x4] sm:$0xc] %vm225, %v311
  %v314 = vmul.f32 %v104, 0.46666667
  %v315 = vmul.f32 %v129, 0.53333336
  %v316 = vadd.f32 %v314, %v315
  %v317 = vpack.c.bf16 %v316, %v316
  %v319 = vrot.slane %v317, 6
  %320 = vrot.lane.b32.xlu0 %v319, 113
  %v321 = vpop.permute.xlu0 %320
  %v322 = vrot.slane %v321, 4
  %v323 = vsel %vm236, %v322, %v321
  %325 = vst.msk [vmem:[#allocation2 + $0x4] sm:$0xcc] %vm241, %v323
  %v326 = vpack.c.bf16 %v129, %v129
  %v328 = vrot.slane %v326, 6
  %329 = vrot.lane.b32.xlu0 %v328, 1
  %v330 = vpop.permute.xlu0 %329
  %332 = vst.msk [vmem:[#allocation2 + $0x8] sm:$0xc] %vm252, %v330
  %s333 = scalar_lea.vmem %s0, 8
  %v334 = vld [vmem:[%s333] sm:$0xff]
  %336 = vst [vmem:[#allocation1] ss:$2 sm:$0xff] %v334
  %v337 = vld.sshfl [vmem:[#allocation1] sm:$0xff pattern:$0x75316420]
  %v338 = vld.sshfl [vmem:[#allocation1 + $0x8] sm:$0xff pattern:$0x75316420]
  %v341 = vpack.c.bf16 %v338, %v337
  %343 = vrot.lane.b32.xlu0 %v341, 51
  %v344 = vpop.permute.xlu0 %343
  %v345 = vrot.slane %v344, 4
  %vm346 = vcmask 416768
  %v347 = vsel %vm346, %v345, %v344
  %vm350 = vcmask 1041816
  %vm351 = vmor %vm159, %vm350
  %352 = vst.msk [vmem:[#allocation2 + $0x8] sm:$0x33] %vm351, %v347
  %vm353 = vcmask 410624
  %354 = vst.msk [vmem:[#allocation2 + $0x10] sm:$0x3] %vm353, %v345
  %v355 = vpack.c.bf16 %v107, %v107
  %v357 = vrot.slane %v355, 6
  %358 = vrot.lane.b32.xlu0 %v357, 51
  %v359 = vpop.permute.xlu0 %358
  %vm361 = vcmask 544154
  %362 = vst.msk [vmem:[#allocation2 + $0x8] sm:$0xc] %vm361, %v359
  %v363 = vmul.f32 %v107, 0.53333336
  %v364 = vmul.f32 %v130, 0.46666667
  %v365 = vadd.f32 %v363, %v364
  %v366 = vpack.c.bf16 %v365, %v365
  %v368 = vrot.slane %v366, 6
  %369 = vrot.lane.b32.xlu0 %v368, 67
  %v370 = vpop.permute.xlu0 %369
  %vm372 = vcmask 675354
  %373 = vst.msk [vmem:[#allocation2 + $0x8] sm:$0xc] %vm372, %v370
  %v374 = vmul.f32 %v107, 0.06666667
  %v375 = vmul.f32 %v130, 0.93333334
  %v376 = vadd.f32 %v374, %v375
  %v377 = vpack.c.bf16 %v376, %v376
  %v379 = vrot.slane %v377, 6
  %380 = vrot.lane.b32.xlu0 %v379, 83
  %v381 = vpop.permute.xlu0 %380
  %vm383 = vcmask 806554
  %384 = vst.msk [vmem:[#allocation2 + $0x8] sm:$0xc] %vm383, %v381
  %v385 = vmul.f32 %v130, 0.6
  %v386 = vmul.f32 %v110, 0.4
  %v387 = vadd.f32 %v385, %v386
  %v388 = vpack.c.bf16 %v387, %v387
  %v390 = vrot.slane %v388, 6
  %391 = vrot.lane.b32.xlu0 %v390, 99
  %v392 = vpop.permute.xlu0 %391
  %vm394 = vcmask 937754
  %395 = vst.msk [vmem:[#allocation2 + $0x8] sm:$0xc] %vm394, %v392
  %v396 = vmul.f32 %v130, 0.13333334
  %v397 = vmul.f32 %v110, 0.8666667
  %v398 = vadd.f32 %v396, %v397
  %v399 = vpack.c.bf16 %v398, %v398
  %v401 = vrot.slane %v399, 6
  %402 = vrot.lane.b32.xlu0 %v401, 115
  %v403 = vpop.permute.xlu0 %402
  %v404 = vrot.slane %v403, 4
  %vm405 = vcmask 941056
  %v406 = vsel %vm405, %v404, %v403
  %vm408 = vcmask 1044378
  %vm409 = vcmask 23558
  %vm410 = vmor %vm409, %vm408
  %411 = vst.msk [vmem:[#allocation2 + $0x8] sm:$0xcc] %vm410, %v406
  %v412 = vmul.f32 %v110, 0.6666667
  %v413 = vmul.f32 %v131, 0.33333334
  %v414 = vadd.f32 %v412, %v413
  %v415 = vpack.c.bf16 %v414, %v414
  %v417 = vrot.slane %v415, 6
  %418 = vrot.lane.b32.xlu0 %v417, 3
  %v419 = vpop.permute.xlu0 %418
  %vm421 = vcmask 150554
  %422 = vst.msk [vmem:[#allocation2 + $0xc] sm:$0xc] %vm421, %v419
  %v423 = vmul.f32 %v110, 0.2
  %v424 = vmul.f32 %v131, 0.8
  %v425 = vadd.f32 %v423, %v424
  %v426 = vpack.c.bf16 %v425, %v425
  %v428 = vrot.slane %v426, 6
  %429 = vrot.lane.b32.xlu0 %v428, 19
  %v430 = vpop.permute.xlu0 %429
  %vm432 = vcmask 281754
  %433 = vst.msk [vmem:[#allocation2 + $0xc] sm:$0xc] %vm432, %v430
  %v434 = vmul.f32 %v131, 0.73333335
  %v435 = vmul.f32 %v113, 0.26666668
  %v436 = vadd.f32 %v434, %v435
  %v437 = vpack.c.bf16 %v436, %v436
  %v439 = vrot.slane %v437, 6
  %440 = vrot.lane.b32.xlu0 %v439, 35
  %v441 = vpop.permute.xlu0 %440
  %vm443 = vcmask 412954
  %444 = vst.msk [vmem:[#allocation2 + $0xc] sm:$0xc] %vm443, %v441
  %v445 = vmul.f32 %v131, 0.26666668
  %v446 = vmul.f32 %v113, 0.73333335
  %v447 = vadd.f32 %v445, %v446
  %v448 = vpack.c.bf16 %v447, %v447
  %v450 = vrot.slane %v448, 6
  %451 = vrot.lane.b32.xlu0 %v450, 51
  %v452 = vpop.permute.xlu0 %451
  %454 = vst.msk [vmem:[#allocation2 + $0xc] sm:$0xc] %vm361, %v452
  %v455 = vmul.f32 %v113, 0.8
  %v456 = vmul.f32 %v132, 0.2
  %v457 = vadd.f32 %v455, %v456
  %v458 = vpack.c.bf16 %v457, %v457
  %v460 = vrot.slane %v458, 6
  %461 = vrot.lane.b32.xlu0 %v460, 67
  %v462 = vpop.permute.xlu0 %461
  %464 = vst.msk [vmem:[#allocation2 + $0xc] sm:$0xc] %vm372, %v462
  %v465 = vmul.f32 %v113, 0.33333334
  %v466 = vmul.f32 %v132, 0.6666667
  %v467 = vadd.f32 %v465, %v466
  %v468 = vpack.c.bf16 %v467, %v467
  %v470 = vrot.slane %v468, 6
  %471 = vrot.lane.b32.xlu0 %v470, 83
  %v472 = vpop.permute.xlu0 %471
  %474 = vst.msk [vmem:[#allocation2 + $0xc] sm:$0xc] %vm383, %v472
  %v475 = vmul.f32 %v132, 0.8666667
  %v476 = vmul.f32 %v116, 0.13333334
  %v477 = vadd.f32 %v475, %v476
  %v478 = vpack.c.bf16 %v477, %v477
  %v480 = vrot.slane %v478, 6
  %481 = vrot.lane.b32.xlu0 %v480, 99
  %v482 = vpop.permute.xlu0 %481
  %484 = vst.msk [vmem:[#allocation2 + $0xc] sm:$0xc] %vm394, %v482
  %v485 = vmul.f32 %v132, 0.4
  %v486 = vmul.f32 %v116, 0.6
  %v487 = vadd.f32 %v485, %v486
  %v488 = vpack.c.bf16 %v487, %v487
  %v490 = vrot.slane %v488, 6
  %491 = vrot.lane.b32.xlu0 %v490, 115
  %v492 = vpop.permute.xlu0 %491
  %v493 = vrot.slane %v492, 4
  %v494 = vsel %vm405, %v493, %v492
  %496 = vst.msk [vmem:[#allocation2 + $0xc] sm:$0xcc] %vm410, %v494
  %v497 = vmul.f32 %v116, 0.93333334
  %v498 = vmul.f32 %v133, 0.06666667
  %v499 = vadd.f32 %v497, %v498
  %v500 = vpack.c.bf16 %v499, %v499
  %v502 = vrot.slane %v500, 6
  %503 = vrot.lane.b32.xlu0 %v502, 3
  %v504 = vpop.permute.xlu0 %503
  %506 = vst.msk [vmem:[#allocation2 + $0x10] sm:$0xc] %vm421, %v504
  %v507 = vmul.f32 %v116, 0.46666667
  %v508 = vmul.f32 %v133, 0.53333336
  %v509 = vadd.f32 %v507, %v508
  %v510 = vpack.c.bf16 %v509, %v509
  %v512 = vrot.slane %v510, 6
  %513 = vrot.lane.b32.xlu0 %v512, 19
  %v514 = vpop.permute.xlu0 %513
  %516 = vst.msk [vmem:[#allocation2 + $0x10] sm:$0xc] %vm432, %v514
  %v517 = vpack.c.bf16 %v133, %v133
  %v519 = vrot.slane %v517, 6
  %520 = vrot.lane.b32.xlu0 %v519, 35
  %v521 = vpop.permute.xlu0 %520
  %523 = vst.msk [vmem:[#allocation2 + $0x10] sm:$0xc] %vm443, %v521
  %v524 = vld [vmem:[%s3] sm:$0x1f]
  %v525 = vld [vmem:[%s4] sm:$0x1f]
  %v526 = vld [vmem:[#allocation2] sm:$0xff]
  %v527 = vld [vmem:[#allocation2 + $0x8] sm:$0xff]
  %v528 = vld [vmem:[#allocation2 + $0x10] sm:$0xf]
  %v529 = vld [vmem:[%s5] sm:$0x3]
  %s530 = scalar_lea.vmem %s5, 6
  %v531 = vld [vmem:[%s530] sm:$0x3]
  %v535 = vunpack.c.l.b16 %v526
  %v536 = vunpack.c.h.b16 %v526
  %v537 = vunpack.c.l.b16 %v527
  %v538 = vunpack.c.h.b16 %v527
  %v539 = vunpack.c.l.b16 %v528
  %v540 = vpack.c.b16 %v535, %v535
  %v541 = vpack.c.b16 %v536, %v536
  %v542 = vpack.c.b16 %v537, %v537
  %v543 = vpack.c.b16 %v538, %v538
  %v544 = vpack.c.b16 %v539, %v539
  %545 = vrot.lane.b32.xlu0 %v540, 112
  %v546 = vpop.permute.xlu0 %545
  %547 = vrot.lane.b32.xlu0 %v541, 112
  %v548 = vpop.permute.xlu0 %547
  %549 = vrot.lane.b32.xlu0 %v542, 112
  %v550 = vpop.permute.xlu0 %549
  %551 = vrot.lane.b32.xlu0 %v543, 112
  %v552 = vpop.permute.xlu0 %551
  %553 = vrot.lane.b32.xlu0 %v544, 112
  %v554 = vpop.permute.xlu0 %553
  %vm555 = vcmask 916480
  %v556 = vsel %vm555, %v546, %v548
  %v557 = vsel %vm555, %v548, %v550
  %v558 = vsel %vm555, %v550, %v552
  %v559 = vsel %vm555, %v552, %v554
  %v561 = vsel %vm52, %v531, 0
  %vm563 = vcmask 1043456
  %v565 = vsel %vm563, %v556, 0
  %v568 = vsel %vm563, %v557, 0
  %v571 = vsel %vm563, %v558, 0
  %v574 = vsel %vm563, %v559, 0
  %v577 = vsel %vm563, %v554, 0
  %579 = vmatpush.bf16.msra.mxu0 0
  %580 = vmatpush.bf16.msra.mxu0 0
  %581 = vmatpush.bf16.msra.mxu0 0
  %582 = vmatpush.bf16.msra.mxu0 0
  %583 = vmatpush.bf16.msra.mxu0 0
  %584 = vmatpush.bf16.msra.mxu0 0
  %585 = vmatpush.bf16.msra.mxu0 0
  %586 = vmatpush.bf16.msra.mxu0 %v565
  %587 = vmatmul.bf16.gmra.mxu0 %v561
  %v588 = vpop.f32.mrf.mxu0
  %v589 = vadd.f32 0.0, %v588
  %v590 = vpop.f32.mrf.mxu0
  %591 = vdwg.mxu0
  %592 = vmatpush.bf16.msra.mxu0 0
  %593 = vmatpush.bf16.msra.mxu0 0
  %594 = vmatpush.bf16.msra.mxu0 0
  %595 = vmatpush.bf16.msra.mxu0 0
  %596 = vmatpush.bf16.msra.mxu0 0
  %597 = vmatpush.bf16.msra.mxu0 0
  %598 = vmatpush.bf16.msra.mxu0 0
  %599 = vmatpush.bf16.msra.mxu0 %v568
  %600 = vmatmul.bf16.gmra.mxu0 %v561
  %v601 = vpop.f32.mrf.mxu0
  %v602 = vadd.f32 0.0, %v601
  %v603 = vpop.f32.mrf.mxu0
  %604 = vdwg.mxu0
  %605 = vmatpush.bf16.msra.mxu0 0
  %606 = vmatpush.bf16.msra.mxu0 0
  %607 = vmatpush.bf16.msra.mxu0 0
  %608 = vmatpush.bf16.msra.mxu0 0
  %609 = vmatpush.bf16.msra.mxu0 0
  %610 = vmatpush.bf16.msra.mxu0 0
  %611 = vmatpush.bf16.msra.mxu0 0
  %612 = vmatpush.bf16.msra.mxu0 %v571
  %613 = vmatmul.bf16.gmra.mxu0 %v561
  %v614 = vpop.f32.mrf.mxu0
  %v615 = vadd.f32 0.0, %v614
  %v616 = vpop.f32.mrf.mxu0
  %617 = vdwg.mxu0
  %618 = vmatpush.bf16.msra.mxu0 0
  %619 = vmatpush.bf16.msra.mxu0 0
  %620 = vmatpush.bf16.msra.mxu0 0
  %621 = vmatpush.bf16.msra.mxu0 0
  %622 = vmatpush.bf16.msra.mxu0 0
  %623 = vmatpush.bf16.msra.mxu0 0
  %624 = vmatpush.bf16.msra.mxu0 0
  %625 = vmatpush.bf16.msra.mxu0 %v574
  %626 = vmatmul.bf16.gmra.mxu0 %v561
  %v627 = vpop.f32.mrf.mxu0
  %v628 = vadd.f32 0.0, %v627
  %v629 = vpop.f32.mrf.mxu0
  %630 = vdwg.mxu0
  %631 = vmatpush.bf16.msra.mxu0 0
  %632 = vmatpush.bf16.msra.mxu0 0
  %633 = vmatpush.bf16.msra.mxu0 0
  %634 = vmatpush.bf16.msra.mxu0 0
  %635 = vmatpush.bf16.msra.mxu0 0
  %636 = vmatpush.bf16.msra.mxu0 0
  %637 = vmatpush.bf16.msra.mxu0 0
  %638 = vmatpush.bf16.msra.mxu0 %v577
  %639 = vmatmul.bf16.gmra.mxu0 %v561
  %v640 = vpop.f32.mrf.mxu0
  %v641 = vadd.f32 0.0, %v640
  %v642 = vpop.f32.mrf.mxu0
  %643 = vdwg.mxu0
  %v645 = vsel %vm52, %v529, 0
  %v648 = vsel %vm563, %v540, 0
  %v651 = vsel %vm563, %v541, 0
  %v654 = vsel %vm563, %v542, 0
  %v657 = vsel %vm563, %v543, 0
  %v660 = vsel %vm563, %v544, 0
  %662 = vmatpush.bf16.msra.mxu0 0
  %663 = vmatpush.bf16.msra.mxu0 0
  %664 = vmatpush.bf16.msra.mxu0 0
  %665 = vmatpush.bf16.msra.mxu0 0
  %666 = vmatpush.bf16.msra.mxu0 0
  %667 = vmatpush.bf16.msra.mxu0 0
  %668 = vmatpush.bf16.msra.mxu0 0
  %669 = vmatpush.bf16.msra.mxu0 %v648
  %670 = vmatmul.bf16.gmra.mxu0 %v645
  %v671 = vpop.f32.mrf.mxu0
  %v672 = vadd.f32 %v589, %v671
  %v673 = vpop.f32.mrf.mxu0
  %674 = vdwg.mxu0
  %675 = vmatpush.bf16.msra.mxu0 0
  %676 = vmatpush.bf16.msra.mxu0 0
  %677 = vmatpush.bf16.msra.mxu0 0
  %678 = vmatpush.bf16.msra.mxu0 0
  %679 = vmatpush.bf16.msra.mxu0 0
  %680 = vmatpush.bf16.msra.mxu0 0
  %681 = vmatpush.bf16.msra.mxu0 0
  %682 = vmatpush.bf16.msra.mxu0 %v651
  %683 = vmatmul.bf16.gmra.mxu0 %v645
  %v684 = vpop.f32.mrf.mxu0
  %v685 = vadd.f32 %v602, %v684
  %v686 = vpop.f32.mrf.mxu0
  %687 = vdwg.mxu0
  %688 = vmatpush.bf16.msra.mxu0 0
  %689 = vmatpush.bf16.msra.mxu0 0
  %690 = vmatpush.bf16.msra.mxu0 0
  %691 = vmatpush.bf16.msra.mxu0 0
  %692 = vmatpush.bf16.msra.mxu0 0
  %693 = vmatpush.bf16.msra.mxu0 0
  %694 = vmatpush.bf16.msra.mxu0 0
  %695 = vmatpush.bf16.msra.mxu0 %v654
  %696 = vmatmul.bf16.gmra.mxu0 %v645
  %v697 = vpop.f32.mrf.mxu0
  %v698 = vadd.f32 %v615, %v697
  %v699 = vpop.f32.mrf.mxu0
  %700 = vdwg.mxu0
  %701 = vmatpush.bf16.msra.mxu0 0
  %702 = vmatpush.bf16.msra.mxu0 0
  %703 = vmatpush.bf16.msra.mxu0 0
  %704 = vmatpush.bf16.msra.mxu0 0
  %705 = vmatpush.bf16.msra.mxu0 0
  %706 = vmatpush.bf16.msra.mxu0 0
  %707 = vmatpush.bf16.msra.mxu0 0
  %708 = vmatpush.bf16.msra.mxu0 %v657
  %709 = vmatmul.bf16.gmra.mxu0 %v645
  %v710 = vpop.f32.mrf.mxu0
  %v711 = vadd.f32 %v628, %v710
  %v712 = vpop.f32.mrf.mxu0
  %713 = vdwg.mxu0
  %714 = vmatpush.bf16.msra.mxu0 0
  %715 = vmatpush.bf16.msra.mxu0 0
  %716 = vmatpush.bf16.msra.mxu0 0
  %717 = vmatpush.bf16.msra.mxu0 0
  %718 = vmatpush.bf16.msra.mxu0 0
  %719 = vmatpush.bf16.msra.mxu0 0
  %720 = vmatpush.bf16.msra.mxu0 0
  %721 = vmatpush.bf16.msra.mxu0 %v660
  %722 = vmatmul.bf16.gmra.mxu0 %v645
  %v723 = vpop.f32.mrf.mxu0
  %v724 = vadd.f32 %v641, %v723
  %v725 = vpop.f32.mrf.mxu0
  %726 = vdwg.mxu0
  %s727 = scalar_lea.vmem %s5, 12
  %v728 = vld [vmem:[%s727] sm:$0x3]
  %729 = vrot.lane.b32.xlu0 %v540, 96
  %v730 = vpop.permute.xlu0 %729
  %731 = vrot.lane.b32.xlu0 %v541, 96
  %v732 = vpop.permute.xlu0 %731
  %733 = vrot.lane.b32.xlu0 %v542, 96
  %v734 = vpop.permute.xlu0 %733
  %735 = vrot.lane.b32.xlu0 %v543, 96
  %v736 = vpop.permute.xlu0 %735
  %737 = vrot.lane.b32.xlu0 %v544, 96
  %v738 = vpop.permute.xlu0 %737
  %vm739 = vcmask 785408
  %v740 = vsel %vm739, %v730, %v732
  %v741 = vsel %vm739, %v732, %v734
  %v742 = vsel %vm739, %v734, %v736
  %v743 = vsel %vm739, %v736, %v738
  %v745 = vsel %vm52, %v728, 0
  %v748 = vsel %vm563, %v740, 0
  %v751 = vsel %vm563, %v741, 0
  %v754 = vsel %vm563, %v742, 0
  %v757 = vsel %vm563, %v743, 0
  %v760 = vsel %vm563, %v738, 0
  %762 = vmatpush.bf16.msra.mxu0 0
  %763 = vmatpush.bf16.msra.mxu0 0
  %764 = vmatpush.bf16.msra.mxu0 0
  %765 = vmatpush.bf16.msra.mxu0 0
  %766 = vmatpush.bf16.msra.mxu0 0
  %767 = vmatpush.bf16.msra.mxu0 0
  %768 = vmatpush.bf16.msra.mxu0 0
  %769 = vmatpush.bf16.msra.mxu0 %v748
  %770 = vmatmul.bf16.gmra.mxu0 %v745
  %v771 = vpop.f32.mrf.mxu0
  %v772 = vadd.f32 0.0, %v771
  %v773 = vpop.f32.mrf.mxu0
  %774 = vdwg.mxu0
  %775 = vmatpush.bf16.msra.mxu0 0
  %776 = vmatpush.bf16.msra.mxu0 0
  %777 = vmatpush.bf16.msra.mxu0 0
  %778 = vmatpush.bf16.msra.mxu0 0
  %779 = vmatpush.bf16.msra.mxu0 0
  %780 = vmatpush.bf16.msra.mxu0 0
  %781 = vmatpush.bf16.msra.mxu0 0
  %782 = vmatpush.bf16.msra.mxu0 %v751
  %783 = vmatmul.bf16.gmra.mxu0 %v745
  %v784 = vpop.f32.mrf.mxu0
  %v785 = vadd.f32 0.0, %v784
  %v786 = vpop.f32.mrf.mxu0
  %787 = vdwg.mxu0
  %788 = vmatpush.bf16.msra.mxu0 0
  %789 = vmatpush.bf16.msra.mxu0 0
  %790 = vmatpush.bf16.msra.mxu0 0
  %791 = vmatpush.bf16.msra.mxu0 0
  %792 = vmatpush.bf16.msra.mxu0 0
  %793 = vmatpush.bf16.msra.mxu0 0
  %794 = vmatpush.bf16.msra.mxu0 0
  %795 = vmatpush.bf16.msra.mxu0 %v754
  %796 = vmatmul.bf16.gmra.mxu0 %v745
  %v797 = vpop.f32.mrf.mxu0
  %v798 = vadd.f32 0.0, %v797
  %v799 = vpop.f32.mrf.mxu0
  %800 = vdwg.mxu0
  %801 = vmatpush.bf16.msra.mxu0 0
  %802 = vmatpush.bf16.msra.mxu0 0
  %803 = vmatpush.bf16.msra.mxu0 0
  %804 = vmatpush.bf16.msra.mxu0 0
  %805 = vmatpush.bf16.msra.mxu0 0
  %806 = vmatpush.bf16.msra.mxu0 0
  %807 = vmatpush.bf16.msra.mxu0 0
  %808 = vmatpush.bf16.msra.mxu0 %v757
  %809 = vmatmul.bf16.gmra.mxu0 %v745
  %v810 = vpop.f32.mrf.mxu0
  %v811 = vadd.f32 0.0, %v810
  %v812 = vpop.f32.mrf.mxu0
  %813 = vdwg.mxu0
  %814 = vmatpush.bf16.msra.mxu0 0
  %815 = vmatpush.bf16.msra.mxu0 0
  %816 = vmatpush.bf16.msra.mxu0 0
  %817 = vmatpush.bf16.msra.mxu0 0
  %818 = vmatpush.bf16.msra.mxu0 0
  %819 = vmatpush.bf16.msra.mxu0 0
  %820 = vmatpush.bf16.msra.mxu0 0
  %821 = vmatpush.bf16.msra.mxu0 %v760
  %822 = vmatmul.bf16.gmra.mxu0 %v745
  %v823 = vpop.f32.mrf.mxu0
  %v824 = vadd.f32 0.0, %v823
  %v825 = vpop.f32.mrf.mxu0
  %826 = vdwg.mxu0
  %v827 = vadd.f32 %v672, %v772
  %v828 = vadd.f32 %v685, %v785
  %v829 = vadd.f32 %v698, %v798
  %v830 = vadd.f32 %v711, %v811
  %v831 = vadd.f32 %v724, %v824
  %v833 = vperm.slane %v524, 0
  %v834 = vperm.slane %v524, 1
  %v835 = vperm.slane %v524, 2
  %v836 = vperm.slane %v524, 3
  %v837 = vperm.slane %v524, 4
  %v843 = vmul.f32 %v827, %v833
  %v844 = vmul.f32 %v828, %v834
  %v845 = vmul.f32 %v829, %v835
  %v846 = vmul.f32 %v830, %v836
  %v847 = vmul.f32 %v831, %v837
  %s848 = scalar_lea.vmem %s5, 2
  %v849 = vld [vmem:[%s848] sm:$0x3]
  %s850 = scalar_lea.vmem %s5, 8
  %v851 = vld [vmem:[%s850] sm:$0x3]
  %852 = vrot.lane.b32.xlu0 %v540, 111
  %v853 = vpop.permute.xlu0 %852
  %854 = vrot.lane.b32.xlu0 %v541, 111
  %v855 = vpop.permute.xlu0 %854
  %856 = vrot.lane.b32.xlu0 %v542, 111
  %v857 = vpop.permute.xlu0 %856
  %858 = vrot.lane.b32.xlu0 %v543, 111
  %v859 = vpop.permute.xlu0 %858
  %860 = vrot.lane.b32.xlu0 %v544, 111
  %v861 = vpop.permute.xlu0 %860
  %vm862 = vcmask 908288
  %v863 = vsel %vm862, %v853, %v855
  %v864 = vsel %vm862, %v855, %v857
  %v865 = vsel %vm862, %v857, %v859
  %v866 = vsel %vm862, %v859, %v861
  %v868 = vsel %vm52, %v851, 0
  %v871 = vsel %vm563, %v863, 0
  %v874 = vsel %vm563, %v864, 0
  %v877 = vsel %vm563, %v865, 0
  %v880 = vsel %vm563, %v866, 0
  %v883 = vsel %vm563, %v861, 0
  %885 = vmatpush.bf16.msra.mxu0 0
  %886 = vmatpush.bf16.msra.mxu0 0
  %887 = vmatpush.bf16.msra.mxu0 0
  %888 = vmatpush.bf16.msra.mxu0 0
  %889 = vmatpush.bf16.msra.mxu0 0
  %890 = vmatpush.bf16.msra.mxu0 0
  %891 = vmatpush.bf16.msra.mxu0 0
  %892 = vmatpush.bf16.msra.mxu0 %v871
  %893 = vmatmul.bf16.gmra.mxu0 %v868
  %v894 = vpop.f32.mrf.mxu0
  %v895 = vadd.f32 0.0, %v894
  %v896 = vpop.f32.mrf.mxu0
  %897 = vdwg.mxu0
  %898 = vmatpush.bf16.msra.mxu0 0
  %899 = vmatpush.bf16.msra.mxu0 0
  %900 = vmatpush.bf16.msra.mxu0 0
  %901 = vmatpush.bf16.msra.mxu0 0
  %902 = vmatpush.bf16.msra.mxu0 0
  %903 = vmatpush.bf16.msra.mxu0 0
  %904 = vmatpush.bf16.msra.mxu0 0
  %905 = vmatpush.bf16.msra.mxu0 %v874
  %906 = vmatmul.bf16.gmra.mxu0 %v868
  %v907 = vpop.f32.mrf.mxu0
  %v908 = vadd.f32 0.0, %v907
  %v909 = vpop.f32.mrf.mxu0
  %910 = vdwg.mxu0
  %911 = vmatpush.bf16.msra.mxu0 0
  %912 = vmatpush.bf16.msra.mxu0 0
  %913 = vmatpush.bf16.msra.mxu0 0
  %914 = vmatpush.bf16.msra.mxu0 0
  %915 = vmatpush.bf16.msra.mxu0 0
  %916 = vmatpush.bf16.msra.mxu0 0
  %917 = vmatpush.bf16.msra.mxu0 0
  %918 = vmatpush.bf16.msra.mxu0 %v877
  %919 = vmatmul.bf16.gmra.mxu0 %v868
  %v920 = vpop.f32.mrf.mxu0
  %v921 = vadd.f32 0.0, %v920
  %v922 = vpop.f32.mrf.mxu0
  %923 = vdwg.mxu0
  %924 = vmatpush.bf16.msra.mxu0 0
  %925 = vmatpush.bf16.msra.mxu0 0
  %926 = vmatpush.bf16.msra.mxu0 0
  %927 = vmatpush.bf16.msra.mxu0 0
  %928 = vmatpush.bf16.msra.mxu0 0
  %929 = vmatpush.bf16.msra.mxu0 0
  %930 = vmatpush.bf16.msra.mxu0 0
  %931 = vmatpush.bf16.msra.mxu0 %v880
  %932 = vmatmul.bf16.gmra.mxu0 %v868
  %v933 = vpop.f32.mrf.mxu0
  %v934 = vadd.f32 0.0, %v933
  %v935 = vpop.f32.mrf.mxu0
  %936 = vdwg.mxu0
  %937 = vmatpush.bf16.msra.mxu0 0
  %938 = vmatpush.bf16.msra.mxu0 0
  %939 = vmatpush.bf16.msra.mxu0 0
  %940 = vmatpush.bf16.msra.mxu0 0
  %941 = vmatpush.bf16.msra.mxu0 0
  %942 = vmatpush.bf16.msra.mxu0 0
  %943 = vmatpush.bf16.msra.mxu0 0
  %944 = vmatpush.bf16.msra.mxu0 %v883
  %945 = vmatmul.bf16.gmra.mxu0 %v868
  %v946 = vpop.f32.mrf.mxu0
  %v947 = vadd.f32 0.0, %v946
  %v948 = vpop.f32.mrf.mxu0
  %949 = vdwg.mxu0
  %950 = vrot.lane.b32.xlu0 %v540, 127
  %v951 = vpop.permute.xlu0 %950
  %952 = vrot.lane.b32.xlu0 %v541, 127
  %v953 = vpop.permute.xlu0 %952
  %954 = vrot.lane.b32.xlu0 %v542, 127
  %v955 = vpop.permute.xlu0 %954
  %956 = vrot.lane.b32.xlu0 %v543, 127
  %v957 = vpop.permute.xlu0 %956
  %958 = vrot.lane.b32.xlu0 %v544, 127
  %v959 = vpop.permute.xlu0 %958
  %vm960 = vcmask 1039360
  %v961 = vsel %vm960, %v951, %v953
  %v962 = vsel %vm960, %v953, %v955
  %v963 = vsel %vm960, %v955, %v957
  %v964 = vsel %vm960, %v957, %v959
  %v966 = vsel %vm52, %v849, 0
  %v969 = vsel %vm563, %v961, 0
  %v972 = vsel %vm563, %v962, 0
  %v975 = vsel %vm563, %v963, 0
  %v978 = vsel %vm563, %v964, 0
  %v981 = vsel %vm563, %v959, 0
  %983 = vmatpush.bf16.msra.mxu0 0
  %984 = vmatpush.bf16.msra.mxu0 0
  %985 = vmatpush.bf16.msra.mxu0 0
  %986 = vmatpush.bf16.msra.mxu0 0
  %987 = vmatpush.bf16.msra.mxu0 0
  %988 = vmatpush.bf16.msra.mxu0 0
  %989 = vmatpush.bf16.msra.mxu0 0
  %990 = vmatpush.bf16.msra.mxu0 %v969
  %991 = vmatmul.bf16.gmra.mxu0 %v966
  %v992 = vpop.f32.mrf.mxu0
  %v993 = vadd.f32 %v895, %v992
  %v994 = vpop.f32.mrf.mxu0
  %995 = vdwg.mxu0
  %996 = vmatpush.bf16.msra.mxu0 0
  %997 = vmatpush.bf16.msra.mxu0 0
  %998 = vmatpush.bf16.msra.mxu0 0
  %999 = vmatpush.bf16.msra.mxu0 0
  %1000 = vmatpush.bf16.msra.mxu0 0
  %1001 = vmatpush.bf16.msra.mxu0 0
  %1002 = vmatpush.bf16.msra.mxu0 0
  %1003 = vmatpush.bf16.msra.mxu0 %v972
  %1004 = vmatmul.bf16.gmra.mxu0 %v966
  %v1005 = vpop.f32.mrf.mxu0
  %v1006 = vadd.f32 %v908, %v1005
  %v1007 = vpop.f32.mrf.mxu0
  %1008 = vdwg.mxu0
  %1009 = vmatpush.bf16.msra.mxu0 0
  %1010 = vmatpush.bf16.msra.mxu0 0
  %1011 = vmatpush.bf16.msra.mxu0 0
  %1012 = vmatpush.bf16.msra.mxu0 0
  %1013 = vmatpush.bf16.msra.mxu0 0
  %1014 = vmatpush.bf16.msra.mxu0 0
  %1015 = vmatpush.bf16.msra.mxu0 0
  %1016 = vmatpush.bf16.msra.mxu0 %v975
  %1017 = vmatmul.bf16.gmra.mxu0 %v966
  %v1018 = vpop.f32.mrf.mxu0
  %v1019 = vadd.f32 %v921, %v1018
  %v1020 = vpop.f32.mrf.mxu0
  %1021 = vdwg.mxu0
  %1022 = vmatpush.bf16.msra.mxu0 0
  %1023 = vmatpush.bf16.msra.mxu0 0
  %1024 = vmatpush.bf16.msra.mxu0 0
  %1025 = vmatpush.bf16.msra.mxu0 0
  %1026 = vmatpush.bf16.msra.mxu0 0
  %1027 = vmatpush.bf16.msra.mxu0 0
  %1028 = vmatpush.bf16.msra.mxu0 0
  %1029 = vmatpush.bf16.msra.mxu0 %v978
  %1030 = vmatmul.bf16.gmra.mxu0 %v966
  %v1031 = vpop.f32.mrf.mxu0
  %v1032 = vadd.f32 %v934, %v1031
  %v1033 = vpop.f32.mrf.mxu0
  %1034 = vdwg.mxu0
  %1035 = vmatpush.bf16.msra.mxu0 0
  %1036 = vmatpush.bf16.msra.mxu0 0
  %1037 = vmatpush.bf16.msra.mxu0 0
  %1038 = vmatpush.bf16.msra.mxu0 0
  %1039 = vmatpush.bf16.msra.mxu0 0
  %1040 = vmatpush.bf16.msra.mxu0 0
  %1041 = vmatpush.bf16.msra.mxu0 0
  %1042 = vmatpush.bf16.msra.mxu0 %v981
  %1043 = vmatmul.bf16.gmra.mxu0 %v966
  %v1044 = vpop.f32.mrf.mxu0
  %v1045 = vadd.f32 %v947, %v1044
  %v1046 = vpop.f32.mrf.mxu0
  %1047 = vdwg.mxu0
  %s1048 = scalar_lea.vmem %s5, 14
  %v1049 = vld [vmem:[%s1048] sm:$0x3]
  %1050 = vrot.lane.b32.xlu0 %v540, 95
  %v1051 = vpop.permute.xlu0 %1050
  %1052 = vrot.lane.b32.xlu0 %v541, 95
  %v1053 = vpop.permute.xlu0 %1052
  %1054 = vrot.lane.b32.xlu0 %v542, 95
  %v1055 = vpop.permute.xlu0 %1054
  %1056 = vrot.lane.b32.xlu0 %v543, 95
  %v1057 = vpop.permute.xlu0 %1056
  %1058 = vrot.lane.b32.xlu0 %v544, 95
  %v1059 = vpop.permute.xlu0 %1058
  %vm1060 = vcmask 777216
  %v1061 = vsel %vm1060, %v1051, %v1053
  %v1062 = vsel %vm1060, %v1053, %v1055
  %v1063 = vsel %vm1060, %v1055, %v1057
  %v1064 = vsel %vm1060, %v1057, %v1059
  %v1066 = vsel %vm52, %v1049, 0
  %v1069 = vsel %vm563, %v1061, 0
  %v1072 = vsel %vm563, %v1062, 0
  %v1075 = vsel %vm563, %v1063, 0
  %v1078 = vsel %vm563, %v1064, 0
  %v1081 = vsel %vm563, %v1059, 0
  %1083 = vmatpush.bf16.msra.mxu0 0
  %1084 = vmatpush.bf16.msra.mxu0 0
  %1085 = vmatpush.bf16.msra.mxu0 0
  %1086 = vmatpush.bf16.msra.mxu0 0
  %1087 = vmatpush.bf16.msra.mxu0 0
  %1088 = vmatpush.bf16.msra.mxu0 0
  %1089 = vmatpush.bf16.msra.mxu0 0
  %1090 = vmatpush.bf16.msra.mxu0 %v1069
  %1091 = vmatmul.bf16.gmra.mxu0 %v1066
  %v1092 = vpop.f32.mrf.mxu0
  %v1093 = vadd.f32 0.0, %v1092
  %v1094 = vpop.f32.mrf.mxu0
  %1095 = vdwg.mxu0
  %1096 = vmatpush.bf16.msra.mxu0 0
  %1097 = vmatpush.bf16.msra.mxu0 0
  %1098 = vmatpush.bf16.msra.mxu0 0
  %1099 = vmatpush.bf16.msra.mxu0 0
  %1100 = vmatpush.bf16.msra.mxu0 0
  %1101 = vmatpush.bf16.msra.mxu0 0
  %1102 = vmatpush.bf16.msra.mxu0 0
  %1103 = vmatpush.bf16.msra.mxu0 %v1072
  %1104 = vmatmul.bf16.gmra.mxu0 %v1066
  %v1105 = vpop.f32.mrf.mxu0
  %v1106 = vadd.f32 0.0, %v1105
  %v1107 = vpop.f32.mrf.mxu0
  %1108 = vdwg.mxu0
  %1109 = vmatpush.bf16.msra.mxu0 0
  %1110 = vmatpush.bf16.msra.mxu0 0
  %1111 = vmatpush.bf16.msra.mxu0 0
  %1112 = vmatpush.bf16.msra.mxu0 0
  %1113 = vmatpush.bf16.msra.mxu0 0
  %1114 = vmatpush.bf16.msra.mxu0 0
  %1115 = vmatpush.bf16.msra.mxu0 0
  %1116 = vmatpush.bf16.msra.mxu0 %v1075
  %1117 = vmatmul.bf16.gmra.mxu0 %v1066
  %v1118 = vpop.f32.mrf.mxu0
  %v1119 = vadd.f32 0.0, %v1118
  %v1120 = vpop.f32.mrf.mxu0
  %1121 = vdwg.mxu0
  %1122 = vmatpush.bf16.msra.mxu0 0
  %1123 = vmatpush.bf16.msra.mxu0 0
  %1124 = vmatpush.bf16.msra.mxu0 0
  %1125 = vmatpush.bf16.msra.mxu0 0
  %1126 = vmatpush.bf16.msra.mxu0 0
  %1127 = vmatpush.bf16.msra.mxu0 0
  %1128 = vmatpush.bf16.msra.mxu0 0
  %1129 = vmatpush.bf16.msra.mxu0 %v1078
  %1130 = vmatmul.bf16.gmra.mxu0 %v1066
  %v1131 = vpop.f32.mrf.mxu0
  %v1132 = vadd.f32 0.0, %v1131
  %v1133 = vpop.f32.mrf.mxu0
  %1134 = vdwg.mxu0
  %1135 = vmatpush.bf16.msra.mxu0 0
  %1136 = vmatpush.bf16.msra.mxu0 0
  %1137 = vmatpush.bf16.msra.mxu0 0
  %1138 = vmatpush.bf16.msra.mxu0 0
  %1139 = vmatpush.bf16.msra.mxu0 0
  %1140 = vmatpush.bf16.msra.mxu0 0
  %1141 = vmatpush.bf16.msra.mxu0 0
  %1142 = vmatpush.bf16.msra.mxu0 %v1081
  %1143 = vmatmul.bf16.gmra.mxu0 %v1066
  %v1144 = vpop.f32.mrf.mxu0
  %v1145 = vadd.f32 0.0, %v1144
  %v1146 = vpop.f32.mrf.mxu0
  %1147 = vdwg.mxu0
  %v1148 = vadd.f32 %v993, %v1093
  %v1149 = vadd.f32 %v1006, %v1106
  %v1150 = vadd.f32 %v1019, %v1119
  %v1151 = vadd.f32 %v1032, %v1132
  %v1152 = vadd.f32 %v1045, %v1145
  %v1153 = vadd.f32 %v843, %v1148
  %v1154 = vadd.f32 %v844, %v1149
  %v1155 = vadd.f32 %v845, %v1150
  %v1156 = vadd.f32 %v846, %v1151
  %v1157 = vadd.f32 %v847, %v1152
  %s1158 = scalar_lea.vmem %s5, 4
  %v1159 = vld [vmem:[%s1158] sm:$0x3]
  %s1160 = scalar_lea.vmem %s5, 10
  %v1161 = vld [vmem:[%s1160] sm:$0x3]
  %1162 = vrot.lane.b32.xlu0 %v540, 110
  %v1163 = vpop.permute.xlu0 %1162
  %1164 = vrot.lane.b32.xlu0 %v541, 110
  %v1165 = vpop.permute.xlu0 %1164
  %1166 = vrot.lane.b32.xlu0 %v542, 110
  %v1167 = vpop.permute.xlu0 %1166
  %1168 = vrot.lane.b32.xlu0 %v543, 110
  %v1169 = vpop.permute.xlu0 %1168
  %1170 = vrot.lane.b32.xlu0 %v544, 110
  %v1171 = vpop.permute.xlu0 %1170
  %vm1172 = vcmask 900096
  %v1173 = vsel %vm1172, %v1163, %v1165
  %v1174 = vsel %vm1172, %v1165, %v1167
  %v1175 = vsel %vm1172, %v1167, %v1169
  %v1176 = vsel %vm1172, %v1169, %v1171
  %v1178 = vsel %vm52, %v1161, 0
  %v1181 = vsel %vm563, %v1173, 0
  %v1184 = vsel %vm563, %v1174, 0
  %v1187 = vsel %vm563, %v1175, 0
  %v1190 = vsel %vm563, %v1176, 0
  %v1193 = vsel %vm563, %v1171, 0
  %1195 = vmatpush.bf16.msra.mxu0 0
  %1196 = vmatpush.bf16.msra.mxu0 0
  %1197 = vmatpush.bf16.msra.mxu0 0
  %1198 = vmatpush.bf16.msra.mxu0 0
  %1199 = vmatpush.bf16.msra.mxu0 0
  %1200 = vmatpush.bf16.msra.mxu0 0
  %1201 = vmatpush.bf16.msra.mxu0 0
  %1202 = vmatpush.bf16.msra.mxu0 %v1181
  %1203 = vmatmul.bf16.gmra.mxu0 %v1178
  %v1204 = vpop.f32.mrf.mxu0
  %v1205 = vadd.f32 0.0, %v1204
  %v1206 = vpop.f32.mrf.mxu0
  %1207 = vdwg.mxu0
  %1208 = vmatpush.bf16.msra.mxu0 0
  %1209 = vmatpush.bf16.msra.mxu0 0
  %1210 = vmatpush.bf16.msra.mxu0 0
  %1211 = vmatpush.bf16.msra.mxu0 0
  %1212 = vmatpush.bf16.msra.mxu0 0
  %1213 = vmatpush.bf16.msra.mxu0 0
  %1214 = vmatpush.bf16.msra.mxu0 0
  %1215 = vmatpush.bf16.msra.mxu0 %v1184
  %1216 = vmatmul.bf16.gmra.mxu0 %v1178
  %v1217 = vpop.f32.mrf.mxu0
  %v1218 = vadd.f32 0.0, %v1217
  %v1219 = vpop.f32.mrf.mxu0
  %1220 = vdwg.mxu0
  %1221 = vmatpush.bf16.msra.mxu0 0
  %1222 = vmatpush.bf16.msra.mxu0 0
  %1223 = vmatpush.bf16.msra.mxu0 0
  %1224 = vmatpush.bf16.msra.mxu0 0
  %1225 = vmatpush.bf16.msra.mxu0 0
  %1226 = vmatpush.bf16.msra.mxu0 0
  %1227 = vmatpush.bf16.msra.mxu0 0
  %1228 = vmatpush.bf16.msra.mxu0 %v1187
  %1229 = vmatmul.bf16.gmra.mxu0 %v1178
  %v1230 = vpop.f32.mrf.mxu0
  %v1231 = vadd.f32 0.0, %v1230
  %v1232 = vpop.f32.mrf.mxu0
  %1233 = vdwg.mxu0
  %1234 = vmatpush.bf16.msra.mxu0 0
  %1235 = vmatpush.bf16.msra.mxu0 0
  %1236 = vmatpush.bf16.msra.mxu0 0
  %1237 = vmatpush.bf16.msra.mxu0 0
  %1238 = vmatpush.bf16.msra.mxu0 0
  %1239 = vmatpush.bf16.msra.mxu0 0
  %1240 = vmatpush.bf16.msra.mxu0 0
  %1241 = vmatpush.bf16.msra.mxu0 %v1190
  %1242 = vmatmul.bf16.gmra.mxu0 %v1178
  %v1243 = vpop.f32.mrf.mxu0
  %v1244 = vadd.f32 0.0, %v1243
  %v1245 = vpop.f32.mrf.mxu0
  %1246 = vdwg.mxu0
  %1247 = vmatpush.bf16.msra.mxu0 0
  %1248 = vmatpush.bf16.msra.mxu0 0
  %1249 = vmatpush.bf16.msra.mxu0 0
  %1250 = vmatpush.bf16.msra.mxu0 0
  %1251 = vmatpush.bf16.msra.mxu0 0
  %1252 = vmatpush.bf16.msra.mxu0 0
  %1253 = vmatpush.bf16.msra.mxu0 0
  %1254 = vmatpush.bf16.msra.mxu0 %v1193
  %1255 = vmatmul.bf16.gmra.mxu0 %v1178
  %v1256 = vpop.f32.mrf.mxu0
  %v1257 = vadd.f32 0.0, %v1256
  %v1258 = vpop.f32.mrf.mxu0
  %1259 = vdwg.mxu0
  %1260 = vrot.lane.b32.xlu0 %v540, 126
  %v1261 = vpop.permute.xlu0 %1260
  %1262 = vrot.lane.b32.xlu0 %v541, 126
  %v1263 = vpop.permute.xlu0 %1262
  %1264 = vrot.lane.b32.xlu0 %v542, 126
  %v1265 = vpop.permute.xlu0 %1264
  %1266 = vrot.lane.b32.xlu0 %v543, 126
  %v1267 = vpop.permute.xlu0 %1266
  %1268 = vrot.lane.b32.xlu0 %v544, 126
  %v1269 = vpop.permute.xlu0 %1268
  %vm1270 = vcmask 1031168
  %v1271 = vsel %vm1270, %v1261, %v1263
  %v1272 = vsel %vm1270, %v1263, %v1265
  %v1273 = vsel %vm1270, %v1265, %v1267
  %v1274 = vsel %vm1270, %v1267, %v1269
  %v1276 = vsel %vm52, %v1159, 0
  %v1279 = vsel %vm563, %v1271, 0
  %v1282 = vsel %vm563, %v1272, 0
  %v1285 = vsel %vm563, %v1273, 0
  %v1288 = vsel %vm563, %v1274, 0
  %v1291 = vsel %vm563, %v1269, 0
  %1293 = vmatpush.bf16.msra.mxu0 0
  %1294 = vmatpush.bf16.msra.mxu0 0
  %1295 = vmatpush.bf16.msra.mxu0 0
  %1296 = vmatpush.bf16.msra.mxu0 0
  %1297 = vmatpush.bf16.msra.mxu0 0
  %1298 = vmatpush.bf16.msra.mxu0 0
  %1299 = vmatpush.bf16.msra.mxu0 0
  %1300 = vmatpush.bf16.msra.mxu0 %v1279
  %1301 = vmatmul.bf16.gmra.mxu0 %v1276
  %v1302 = vpop.f32.mrf.mxu0
  %v1303 = vadd.f32 %v1205, %v1302
  %v1304 = vpop.f32.mrf.mxu0
  %1305 = vdwg.mxu0
  %1306 = vmatpush.bf16.msra.mxu0 0
  %1307 = vmatpush.bf16.msra.mxu0 0
  %1308 = vmatpush.bf16.msra.mxu0 0
  %1309 = vmatpush.bf16.msra.mxu0 0
  %1310 = vmatpush.bf16.msra.mxu0 0
  %1311 = vmatpush.bf16.msra.mxu0 0
  %1312 = vmatpush.bf16.msra.mxu0 0
  %1313 = vmatpush.bf16.msra.mxu0 %v1282
  %1314 = vmatmul.bf16.gmra.mxu0 %v1276
  %v1315 = vpop.f32.mrf.mxu0
  %v1316 = vadd.f32 %v1218, %v1315
  %v1317 = vpop.f32.mrf.mxu0
  %1318 = vdwg.mxu0
  %1319 = vmatpush.bf16.msra.mxu0 0
  %1320 = vmatpush.bf16.msra.mxu0 0
  %1321 = vmatpush.bf16.msra.mxu0 0
  %1322 = vmatpush.bf16.msra.mxu0 0
  %1323 = vmatpush.bf16.msra.mxu0 0
  %1324 = vmatpush.bf16.msra.mxu0 0
  %1325 = vmatpush.bf16.msra.mxu0 0
  %1326 = vmatpush.bf16.msra.mxu0 %v1285
  %1327 = vmatmul.bf16.gmra.mxu0 %v1276
  %v1328 = vpop.f32.mrf.mxu0
  %v1329 = vadd.f32 %v1231, %v1328
  %v1330 = vpop.f32.mrf.mxu0
  %1331 = vdwg.mxu0
  %1332 = vmatpush.bf16.msra.mxu0 0
  %1333 = vmatpush.bf16.msra.mxu0 0
  %1334 = vmatpush.bf16.msra.mxu0 0
  %1335 = vmatpush.bf16.msra.mxu0 0
  %1336 = vmatpush.bf16.msra.mxu0 0
  %1337 = vmatpush.bf16.msra.mxu0 0
  %1338 = vmatpush.bf16.msra.mxu0 0
  %1339 = vmatpush.bf16.msra.mxu0 %v1288
  %1340 = vmatmul.bf16.gmra.mxu0 %v1276
  %v1341 = vpop.f32.mrf.mxu0
  %v1342 = vadd.f32 %v1244, %v1341
  %v1343 = vpop.f32.mrf.mxu0
  %1344 = vdwg.mxu0
  %1345 = vmatpush.bf16.msra.mxu0 0
  %1346 = vmatpush.bf16.msra.mxu0 0
  %1347 = vmatpush.bf16.msra.mxu0 0
  %1348 = vmatpush.bf16.msra.mxu0 0
  %1349 = vmatpush.bf16.msra.mxu0 0
  %1350 = vmatpush.bf16.msra.mxu0 0
  %1351 = vmatpush.bf16.msra.mxu0 0
  %1352 = vmatpush.bf16.msra.mxu0 %v1291
  %1353 = vmatmul.bf16.gmra.mxu0 %v1276
  %v1354 = vpop.f32.mrf.mxu0
  %v1355 = vadd.f32 %v1257, %v1354
  %v1356 = vpop.f32.mrf.mxu0
  %1357 = vdwg.mxu0
  %s1358 = scalar_lea.vmem %s5, 16
  %v1359 = vld [vmem:[%s1358] sm:$0x3]
  %1360 = vrot.lane.b32.xlu0 %v540, 94
  %v1361 = vpop.permute.xlu0 %1360
  %1362 = vrot.lane.b32.xlu0 %v541, 94
  %v1363 = vpop.permute.xlu0 %1362
  %1364 = vrot.lane.b32.xlu0 %v542, 94
  %v1365 = vpop.permute.xlu0 %1364
  %1366 = vrot.lane.b32.xlu0 %v543, 94
  %v1367 = vpop.permute.xlu0 %1366
  %1368 = vrot.lane.b32.xlu0 %v544, 94
  %v1369 = vpop.permute.xlu0 %1368
  %vm1370 = vcmask 769024
  %v1371 = vsel %vm1370, %v1361, %v1363
  %v1372 = vsel %vm1370, %v1363, %v1365
  %v1373 = vsel %vm1370, %v1365, %v1367
  %v1374 = vsel %vm1370, %v1367, %v1369
  %v1376 = vsel %vm52, %v1359, 0
  %v1379 = vsel %vm563, %v1371, 0
  %v1382 = vsel %vm563, %v1372, 0
  %v1385 = vsel %vm563, %v1373, 0
  %v1388 = vsel %vm563, %v1374, 0
  %v1391 = vsel %vm563, %v1369, 0
  %1393 = vmatpush.bf16.msra.mxu0 0
  %1394 = vmatpush.bf16.msra.mxu0 0
  %1395 = vmatpush.bf16.msra.mxu0 0
  %1396 = vmatpush.bf16.msra.mxu0 0
  %1397 = vmatpush.bf16.msra.mxu0 0
  %1398 = vmatpush.bf16.msra.mxu0 0
  %1399 = vmatpush.bf16.msra.mxu0 0
  %1400 = vmatpush.bf16.msra.mxu0 %v1379
  %1401 = vmatmul.bf16.gmra.mxu0 %v1376
  %v1402 = vpop.f32.mrf.mxu0
  %v1403 = vadd.f32 0.0, %v1402
  %v1404 = vpop.f32.mrf.mxu0
  %1405 = vdwg.mxu0
  %1406 = vmatpush.bf16.msra.mxu0 0
  %1407 = vmatpush.bf16.msra.mxu0 0
  %1408 = vmatpush.bf16.msra.mxu0 0
  %1409 = vmatpush.bf16.msra.mxu0 0
  %1410 = vmatpush.bf16.msra.mxu0 0
  %1411 = vmatpush.bf16.msra.mxu0 0
  %1412 = vmatpush.bf16.msra.mxu0 0
  %1413 = vmatpush.bf16.msra.mxu0 %v1382
  %1414 = vmatmul.bf16.gmra.mxu0 %v1376
  %v1415 = vpop.f32.mrf.mxu0
  %v1416 = vadd.f32 0.0, %v1415
  %v1417 = vpop.f32.mrf.mxu0
  %1418 = vdwg.mxu0
  %1419 = vmatpush.bf16.msra.mxu0 0
  %1420 = vmatpush.bf16.msra.mxu0 0
  %1421 = vmatpush.bf16.msra.mxu0 0
  %1422 = vmatpush.bf16.msra.mxu0 0
  %1423 = vmatpush.bf16.msra.mxu0 0
  %1424 = vmatpush.bf16.msra.mxu0 0
  %1425 = vmatpush.bf16.msra.mxu0 0
  %1426 = vmatpush.bf16.msra.mxu0 %v1385
  %1427 = vmatmul.bf16.gmra.mxu0 %v1376
  %v1428 = vpop.f32.mrf.mxu0
  %v1429 = vadd.f32 0.0, %v1428
  %v1430 = vpop.f32.mrf.mxu0
  %1431 = vdwg.mxu0
  %1432 = vmatpush.bf16.msra.mxu0 0
  %1433 = vmatpush.bf16.msra.mxu0 0
  %1434 = vmatpush.bf16.msra.mxu0 0
  %1435 = vmatpush.bf16.msra.mxu0 0
  %1436 = vmatpush.bf16.msra.mxu0 0
  %1437 = vmatpush.bf16.msra.mxu0 0
  %1438 = vmatpush.bf16.msra.mxu0 0
  %1439 = vmatpush.bf16.msra.mxu0 %v1388
  %1440 = vmatmul.bf16.gmra.mxu0 %v1376
  %v1441 = vpop.f32.mrf.mxu0
  %v1442 = vadd.f32 0.0, %v1441
  %v1443 = vpop.f32.mrf.mxu0
  %1444 = vdwg.mxu0
  %1445 = vmatpush.bf16.msra.mxu0 0
  %1446 = vmatpush.bf16.msra.mxu0 0
  %1447 = vmatpush.bf16.msra.mxu0 0
  %1448 = vmatpush.bf16.msra.mxu0 0
  %1449 = vmatpush.bf16.msra.mxu0 0
  %1450 = vmatpush.bf16.msra.mxu0 0
  %1451 = vmatpush.bf16.msra.mxu0 0
  %1452 = vmatpush.bf16.msra.mxu0 %v1391
  %1453 = vmatmul.bf16.gmra.mxu0 %v1376
  %v1454 = vpop.f32.mrf.mxu0
  %v1455 = vadd.f32 0.0, %v1454
  %v1456 = vpop.f32.mrf.mxu0
  %1457 = vdwg.mxu0
  %v1458 = vadd.f32 %v1303, %v1403
  %v1459 = vadd.f32 %v1316, %v1416
  %v1460 = vadd.f32 %v1329, %v1429
  %v1461 = vadd.f32 %v1342, %v1442
  %v1462 = vadd.f32 %v1355, %v1455
  %v1464 = vperm.slane %v525, 0
  %v1465 = vperm.slane %v525, 1
  %v1466 = vperm.slane %v525, 2
  %v1467 = vperm.slane %v525, 3
  %v1468 = vperm.slane %v525, 4
  %v1474 = vmul.f32 %v1458, %v1464
  %v1475 = vmul.f32 %v1459, %v1465
  %v1476 = vmul.f32 %v1460, %v1466
  %v1477 = vmul.f32 %v1461, %v1467
  %v1478 = vmul.f32 %v1462, %v1468
  %v1479 = vadd.f32 %v1153, %v1474
  %v1480 = vadd.f32 %v1154, %v1475
  %v1481 = vadd.f32 %v1155, %v1476
  %v1482 = vadd.f32 %v1156, %v1477
  %v1483 = vadd.f32 %v1157, %v1478
  %v1484 = vld [vmem:[%s7] sm:$0xf]
  %v1485 = vld [vmem:[%s8] sm:$0xf]
  %v1486 = vsel %vm563, %v1479, 0.0
  %v1487 = vsel %vm563, %v1480, 0.0
  %v1488 = vadd.f32 %v1486, %v1487
  %1489 = vadd.xlane.f32.xlu0 %v1488
  %v1490 = vpop.xlane.xlu0 %1489
  %v1491 = vadd.f32 %v1490, 0.0
  %1495 = vrot.lane.b32.xlu0 %v1481, 94
  %v1496 = vpop.permute.xlu0 %1495
  %1497 = vrot.lane.b32.xlu0 %v1482, 94
  %v1498 = vpop.permute.xlu0 %1497
  %1499 = vrot.lane.b32.xlu0 %v1483, 94
  %v1500 = vpop.permute.xlu0 %1499
  %vm1501 = vcmask 769024
  %v1502 = vsel %vm1501, %v1496, %v1498
  %v1503 = vsel %vm1501, %v1498, %v1500
  %v1506 = vsel %vm563, %v1502, 0.0
  %v1507 = vsel %vm563, %v1503, 0.0
  %v1508 = vadd.f32 %v1506, %v1507
  %1509 = vadd.xlane.f32.xlu0 %v1508
  %v1510 = vpop.xlane.xlu0 %1509
  %v1511 = vadd.f32 %v1491, %v1510
  %v1512 = vmul.f32 %v1511, 0.001953125
  %v1513 = vsub.f32 %v1479, %v1512
  %v1514 = vsub.f32 %v1480, %v1512
  %v1515 = vmul.f32 %v1513, %v1513
  %v1516 = vmul.f32 %v1514, %v1514
  %v1517 = vsel %vm563, %v1515, 0.0
  %v1518 = vsel %vm563, %v1516, 0.0
  %v1519 = vadd.f32 %v1517, %v1518
  %1520 = vadd.xlane.f32.xlu0 %v1519
  %v1521 = vpop.xlane.xlu0 %1520
  %v1522 = vadd.f32 %v1521, 0.0
  %v1523 = vsub.f32 %v1481, %v1512
  %v1524 = vsub.f32 %v1482, %v1512
  %v1525 = vsub.f32 %v1483, %v1512
  %v1526 = vmul.f32 %v1523, %v1523
  %v1527 = vmul.f32 %v1524, %v1524
  %v1528 = vmul.f32 %v1525, %v1525
  %1532 = vrot.lane.b32.xlu0 %v1526, 94
  %v1533 = vpop.permute.xlu0 %1532
  %1534 = vrot.lane.b32.xlu0 %v1527, 94
  %v1535 = vpop.permute.xlu0 %1534
  %1536 = vrot.lane.b32.xlu0 %v1528, 94
  %v1537 = vpop.permute.xlu0 %1536
  %v1538 = vsel %vm1501, %v1533, %v1535
  %v1539 = vsel %vm1501, %v1535, %v1537
  %v1542 = vsel %vm563, %v1538, 0.0
  %v1543 = vsel %vm563, %v1539, 0.0
  %v1544 = vadd.f32 %v1542, %v1543
  %1545 = vadd.xlane.f32.xlu0 %v1544
  %v1546 = vpop.xlane.xlu0 %1545
  %v1547 = vadd.f32 %v1522, %v1546
  %v1548 = vmul.f32 %v1547, 0.001953125
  %v1549 = vadd.f32 %v1548, 1e-05
  %v1550 = vrsqrt.pop %v1549
  %v1551 = vmul.f32 %v1550, %v1549
  %v1552 = vmul.f32 %v1551, %v1550
  %v1553 = vmul.f32 0.5, %v1552
  %v1554 = vsub.f32 1.5, %v1553
  %v1555 = vmul.f32 %v1550, %v1554
  %vm1556 = vweird.f32 %v1549
  %vm1557 = vweird.f32 %v1550
  %vm1558 = vmor %vm1556, %vm1557
  %v1559 = vsel %vm1558, %v1550, %v1555
  %v1560 = vmul.f32 %v1484, %v1559
  %v1561 = vmul.f32 %v1512, %v1560
  %v1562 = vsub.f32 %v1485, %v1561
  %1564 = vset.pattern.permute.xlu0 0
  %1565 = vperm.xlu0 %1564, %v1560
  %v1566 = vpop.permute.xlu0 %1565
  %1569 = vset.pattern.permute.xlu0 0
  %1570 = vperm.xlu0 %1569, %v1562
  %v1571 = vpop.permute.xlu0 %1570
  %v1573 = vmul.f32 %v1479, %v1566
  %v1574 = vmul.f32 %v1480, %v1566
  %v1575 = vadd.f32 %v1573, %v1571
  %v1576 = vadd.f32 %v1574, %v1571
  %v1577 = vmax.f32 %v1575, 0.0
  %v1578 = vmax.f32 %v1576, 0.0
  %v1579 = vpack.c.bf16 %v1578, %v1577
  %1581 = vrot.lane.b32.xlu0 %v1579, 17
  %v1582 = vpop.permute.xlu0 %1581
  %v1583 = vrot.slane %v1582, 4
  %v1584 = vsel %vm154, %v1583, %v1582
  %1587 = vst.msk [vmem:[#allocation2] sm:$0x33] %vm160, %v1584
  %1588 = vst.msk [vmem:[#allocation2 + $0x8] sm:$0x3] %vm162, %v1583
  %v1589 = vmul.f32 %v1481, %v1566
  %v1590 = vmul.f32 %v1482, %v1566
  %v1591 = vmul.f32 %v1483, %v1566
  %v1592 = vadd.f32 %v1589, %v1571
  %v1593 = vadd.f32 %v1590, %v1571
  %v1594 = vadd.f32 %v1591, %v1571
  %v1595 = vmax.f32 %v1592, 0.0
  %v1596 = vmax.f32 %v1593, 0.0
  %v1597 = vmax.f32 %v1594, 0.0
  %v1598 = vpack.c.bf16 %v1596, %v1595
  %v1599 = vpack.c.bf16 %v1597, %v1597
  %1602 = vrot.lane.b32.xlu0 %v1598, 17
  %v1603 = vpop.permute.xlu0 %1602
  %1604 = vrot.lane.b32.xlu0 %v1599, 17
  %v1605 = vpop.permute.xlu0 %1604
  %v1606 = vrot.slane %v1603, 4
  %v1607 = vsel %vm154, %v1606, %v1603
  %v1608 = vsel %vm154, %v1606, %v1605
  %1611 = vst.msk [vmem:[#allocation2 + $0x8] sm:$0x33] %vm351, %v1607
  %1612 = vst.msk [vmem:[#allocation2 + $0x10] sm:$0x3] %vm353, %v1608
  %v1613 = vld [vmem:[#allocation2] sm:$0x33]
  %v1614 = vld [vmem:[#allocation2 + $0x8] sm:$0x33]
  %v1615 = vld [vmem:[#allocation2 + $0x10] sm:$0x3]
  %v1616 = vld [vmem:[%s6] sm:$0x3]
  %s1617 = scalar_lea.vmem %s6, 6
  %v1618 = vld [vmem:[%s1617] sm:$0x3]
  %v1622 = vunpack.c.l.b16 %v1613
  %v1623 = vunpack.c.h.b16 %v1613
  %v1624 = vunpack.c.l.b16 %v1614
  %v1625 = vunpack.c.h.b16 %v1614
  %v1626 = vunpack.c.l.b16 %v1615
  %v1627 = vpack.c.b16 %v1622, %v1622
  %v1628 = vpack.c.b16 %v1623, %v1623
  %v1629 = vpack.c.b16 %v1624, %v1624
  %v1630 = vpack.c.b16 %v1625, %v1625
  %v1631 = vpack.c.b16 %v1626, %v1626
  %1632 = vrot.lane.b32.xlu0 %v1627, 112
  %v1633 = vpop.permute.xlu0 %1632
  %1634 = vrot.lane.b32.xlu0 %v1628, 112
  %v1635 = vpop.permute.xlu0 %1634
  %1636 = vrot.lane.b32.xlu0 %v1629, 112
  %v1637 = vpop.permute.xlu0 %1636
  %1638 = vrot.lane.b32.xlu0 %v1630, 112
  %v1639 = vpop.permute.xlu0 %1638
  %1640 = vrot.lane.b32.xlu0 %v1631, 112
  %v1641 = vpop.permute.xlu0 %1640
  %v1642 = vsel %vm555, %v1633, %v1635
  %v1643 = vsel %vm555, %v1635, %v1637
  %v1644 = vsel %vm555, %v1637, %v1639
  %v1645 = vsel %vm555, %v1639, %v1641
  %vm1646 = vcmask 31744
  %v1648 = vsel %vm1646, %v1618, 0
  %vm1650 = vcmask 1041408
  %v1652 = vsel %vm1650, %v1642, 0
  %v1655 = vsel %vm1650, %v1643, 0
  %v1658 = vsel %vm1650, %v1644, 0
  %v1661 = vsel %vm1650, %v1645, 0
  %v1664 = vsel %vm1650, %v1641, 0
  %1666 = vmatpush.bf16.msra.mxu0 0
  %1667 = vmatpush.bf16.msra.mxu0 0
  %1668 = vmatpush.bf16.msra.mxu0 0
  %1669 = vmatpush.bf16.msra.mxu0 0
  %1670 = vmatpush.bf16.msra.mxu0 0
  %1671 = vmatpush.bf16.msra.mxu0 0
  %1672 = vmatpush.bf16.msra.mxu0 0
  %1673 = vmatpush.bf16.msra.mxu0 %v1652
  %1674 = vmatmul.bf16.gmra.mxu0 %v1648
  %v1675 = vpop.f32.mrf.mxu0
  %v1676 = vadd.f32 0.0, %v1675
  %v1677 = vpop.f32.mrf.mxu0
  %1678 = vdwg.mxu0
  %1679 = vmatpush.bf16.msra.mxu0 0
  %1680 = vmatpush.bf16.msra.mxu0 0
  %1681 = vmatpush.bf16.msra.mxu0 0
  %1682 = vmatpush.bf16.msra.mxu0 0
  %1683 = vmatpush.bf16.msra.mxu0 0
  %1684 = vmatpush.bf16.msra.mxu0 0
  %1685 = vmatpush.bf16.msra.mxu0 0
  %1686 = vmatpush.bf16.msra.mxu0 %v1655
  %1687 = vmatmul.bf16.gmra.mxu0 %v1648
  %v1688 = vpop.f32.mrf.mxu0
  %v1689 = vadd.f32 0.0, %v1688
  %v1690 = vpop.f32.mrf.mxu0
  %1691 = vdwg.mxu0
  %1692 = vmatpush.bf16.msra.mxu0 0
  %1693 = vmatpush.bf16.msra.mxu0 0
  %1694 = vmatpush.bf16.msra.mxu0 0
  %1695 = vmatpush.bf16.msra.mxu0 0
  %1696 = vmatpush.bf16.msra.mxu0 0
  %1697 = vmatpush.bf16.msra.mxu0 0
  %1698 = vmatpush.bf16.msra.mxu0 0
  %1699 = vmatpush.bf16.msra.mxu0 %v1658
  %1700 = vmatmul.bf16.gmra.mxu0 %v1648
  %v1701 = vpop.f32.mrf.mxu0
  %v1702 = vadd.f32 0.0, %v1701
  %v1703 = vpop.f32.mrf.mxu0
  %1704 = vdwg.mxu0
  %1705 = vmatpush.bf16.msra.mxu0 0
  %1706 = vmatpush.bf16.msra.mxu0 0
  %1707 = vmatpush.bf16.msra.mxu0 0
  %1708 = vmatpush.bf16.msra.mxu0 0
  %1709 = vmatpush.bf16.msra.mxu0 0
  %1710 = vmatpush.bf16.msra.mxu0 0
  %1711 = vmatpush.bf16.msra.mxu0 0
  %1712 = vmatpush.bf16.msra.mxu0 %v1661
  %1713 = vmatmul.bf16.gmra.mxu0 %v1648
  %v1714 = vpop.f32.mrf.mxu0
  %v1715 = vadd.f32 0.0, %v1714
  %v1716 = vpop.f32.mrf.mxu0
  %1717 = vdwg.mxu0
  %1718 = vmatpush.bf16.msra.mxu0 0
  %1719 = vmatpush.bf16.msra.mxu0 0
  %1720 = vmatpush.bf16.msra.mxu0 0
  %1721 = vmatpush.bf16.msra.mxu0 0
  %1722 = vmatpush.bf16.msra.mxu0 0
  %1723 = vmatpush.bf16.msra.mxu0 0
  %1724 = vmatpush.bf16.msra.mxu0 0
  %1725 = vmatpush.bf16.msra.mxu0 %v1664
  %1726 = vmatmul.bf16.gmra.mxu0 %v1648
  %v1727 = vpop.f32.mrf.mxu0
  %v1728 = vadd.f32 0.0, %v1727
  %v1729 = vpop.f32.mrf.mxu0
  %1730 = vdwg.mxu0
  %v1732 = vsel %vm1646, %v1616, 0
  %v1735 = vsel %vm1650, %v1627, 0
  %v1738 = vsel %vm1650, %v1628, 0
  %v1741 = vsel %vm1650, %v1629, 0
  %v1744 = vsel %vm1650, %v1630, 0
  %v1747 = vsel %vm1650, %v1631, 0
  %1749 = vmatpush.bf16.msra.mxu0 0
  %1750 = vmatpush.bf16.msra.mxu0 0
  %1751 = vmatpush.bf16.msra.mxu0 0
  %1752 = vmatpush.bf16.msra.mxu0 0
  %1753 = vmatpush.bf16.msra.mxu0 0
  %1754 = vmatpush.bf16.msra.mxu0 0
  %1755 = vmatpush.bf16.msra.mxu0 0
  %1756 = vmatpush.bf16.msra.mxu0 %v1735
  %1757 = vmatmul.bf16.gmra.mxu0 %v1732
  %v1758 = vpop.f32.mrf.mxu0
  %v1759 = vadd.f32 %v1676, %v1758
  %v1760 = vpop.f32.mrf.mxu0
  %1761 = vdwg.mxu0
  %1762 = vmatpush.bf16.msra.mxu0 0
  %1763 = vmatpush.bf16.msra.mxu0 0
  %1764 = vmatpush.bf16.msra.mxu0 0
  %1765 = vmatpush.bf16.msra.mxu0 0
  %1766 = vmatpush.bf16.msra.mxu0 0
  %1767 = vmatpush.bf16.msra.mxu0 0
  %1768 = vmatpush.bf16.msra.mxu0 0
  %1769 = vmatpush.bf16.msra.mxu0 %v1738
  %1770 = vmatmul.bf16.gmra.mxu0 %v1732
  %v1771 = vpop.f32.mrf.mxu0
  %v1772 = vadd.f32 %v1689, %v1771
  %v1773 = vpop.f32.mrf.mxu0
  %1774 = vdwg.mxu0
  %1775 = vmatpush.bf16.msra.mxu0 0
  %1776 = vmatpush.bf16.msra.mxu0 0
  %1777 = vmatpush.bf16.msra.mxu0 0
  %1778 = vmatpush.bf16.msra.mxu0 0
  %1779 = vmatpush.bf16.msra.mxu0 0
  %1780 = vmatpush.bf16.msra.mxu0 0
  %1781 = vmatpush.bf16.msra.mxu0 0
  %1782 = vmatpush.bf16.msra.mxu0 %v1741
  %1783 = vmatmul.bf16.gmra.mxu0 %v1732
  %v1784 = vpop.f32.mrf.mxu0
  %v1785 = vadd.f32 %v1702, %v1784
  %v1786 = vpop.f32.mrf.mxu0
  %1787 = vdwg.mxu0
  %1788 = vmatpush.bf16.msra.mxu0 0
  %1789 = vmatpush.bf16.msra.mxu0 0
  %1790 = vmatpush.bf16.msra.mxu0 0
  %1791 = vmatpush.bf16.msra.mxu0 0
  %1792 = vmatpush.bf16.msra.mxu0 0
  %1793 = vmatpush.bf16.msra.mxu0 0
  %1794 = vmatpush.bf16.msra.mxu0 0
  %1795 = vmatpush.bf16.msra.mxu0 %v1744
  %1796 = vmatmul.bf16.gmra.mxu0 %v1732
  %v1797 = vpop.f32.mrf.mxu0
  %v1798 = vadd.f32 %v1715, %v1797
  %v1799 = vpop.f32.mrf.mxu0
  %1800 = vdwg.mxu0
  %1801 = vmatpush.bf16.msra.mxu0 0
  %1802 = vmatpush.bf16.msra.mxu0 0
  %1803 = vmatpush.bf16.msra.mxu0 0
  %1804 = vmatpush.bf16.msra.mxu0 0
  %1805 = vmatpush.bf16.msra.mxu0 0
  %1806 = vmatpush.bf16.msra.mxu0 0
  %1807 = vmatpush.bf16.msra.mxu0 0
  %1808 = vmatpush.bf16.msra.mxu0 %v1747
  %1809 = vmatmul.bf16.gmra.mxu0 %v1732
  %v1810 = vpop.f32.mrf.mxu0
  %v1811 = vadd.f32 %v1728, %v1810
  %v1812 = vpop.f32.mrf.mxu0
  %1813 = vdwg.mxu0
  %s1814 = scalar_lea.vmem %s6, 12
  %v1815 = vld [vmem:[%s1814] sm:$0x3]
  %1816 = vrot.lane.b32.xlu0 %v1627, 96
  %v1817 = vpop.permute.xlu0 %1816
  %1818 = vrot.lane.b32.xlu0 %v1628, 96
  %v1819 = vpop.permute.xlu0 %1818
  %1820 = vrot.lane.b32.xlu0 %v1629, 96
  %v1821 = vpop.permute.xlu0 %1820
  %1822 = vrot.lane.b32.xlu0 %v1630, 96
  %v1823 = vpop.permute.xlu0 %1822
  %1824 = vrot.lane.b32.xlu0 %v1631, 96
  %v1825 = vpop.permute.xlu0 %1824
  %v1826 = vsel %vm739, %v1817, %v1819
  %v1827 = vsel %vm739, %v1819, %v1821
  %v1828 = vsel %vm739, %v1821, %v1823
  %v1829 = vsel %vm739, %v1823, %v1825
  %v1831 = vsel %vm1646, %v1815, 0
  %v1834 = vsel %vm1650, %v1826, 0
  %v1837 = vsel %vm1650, %v1827, 0
  %v1840 = vsel %vm1650, %v1828, 0
  %v1843 = vsel %vm1650, %v1829, 0
  %v1846 = vsel %vm1650, %v1825, 0
  %1848 = vmatpush.bf16.msra.mxu0 0
  %1849 = vmatpush.bf16.msra.mxu0 0
  %1850 = vmatpush.bf16.msra.mxu0 0
  %1851 = vmatpush.bf16.msra.mxu0 0
  %1852 = vmatpush.bf16.msra.mxu0 0
  %1853 = vmatpush.bf16.msra.mxu0 0
  %1854 = vmatpush.bf16.msra.mxu0 0
  %1855 = vmatpush.bf16.msra.mxu0 %v1834
  %1856 = vmatmul.bf16.gmra.mxu0 %v1831
  %v1857 = vpop.f32.mrf.mxu0
  %v1858 = vadd.f32 0.0, %v1857
  %v1859 = vpop.f32.mrf.mxu0
  %1860 = vdwg.mxu0
  %1861 = vmatpush.bf16.msra.mxu0 0
  %1862 = vmatpush.bf16.msra.mxu0 0
  %1863 = vmatpush.bf16.msra.mxu0 0
  %1864 = vmatpush.bf16.msra.mxu0 0
  %1865 = vmatpush.bf16.msra.mxu0 0
  %1866 = vmatpush.bf16.msra.mxu0 0
  %1867 = vmatpush.bf16.msra.mxu0 0
  %1868 = vmatpush.bf16.msra.mxu0 %v1837
  %1869 = vmatmul.bf16.gmra.mxu0 %v1831
  %v1870 = vpop.f32.mrf.mxu0
  %v1871 = vadd.f32 0.0, %v1870
  %v1872 = vpop.f32.mrf.mxu0
  %1873 = vdwg.mxu0
  %1874 = vmatpush.bf16.msra.mxu0 0
  %1875 = vmatpush.bf16.msra.mxu0 0
  %1876 = vmatpush.bf16.msra.mxu0 0
  %1877 = vmatpush.bf16.msra.mxu0 0
  %1878 = vmatpush.bf16.msra.mxu0 0
  %1879 = vmatpush.bf16.msra.mxu0 0
  %1880 = vmatpush.bf16.msra.mxu0 0
  %1881 = vmatpush.bf16.msra.mxu0 %v1840
  %1882 = vmatmul.bf16.gmra.mxu0 %v1831
  %v1883 = vpop.f32.mrf.mxu0
  %v1884 = vadd.f32 0.0, %v1883
  %v1885 = vpop.f32.mrf.mxu0
  %1886 = vdwg.mxu0
  %1887 = vmatpush.bf16.msra.mxu0 0
  %1888 = vmatpush.bf16.msra.mxu0 0
  %1889 = vmatpush.bf16.msra.mxu0 0
  %1890 = vmatpush.bf16.msra.mxu0 0
  %1891 = vmatpush.bf16.msra.mxu0 0
  %1892 = vmatpush.bf16.msra.mxu0 0
  %1893 = vmatpush.bf16.msra.mxu0 0
  %1894 = vmatpush.bf16.msra.mxu0 %v1843
  %1895 = vmatmul.bf16.gmra.mxu0 %v1831
  %v1896 = vpop.f32.mrf.mxu0
  %v1897 = vadd.f32 0.0, %v1896
  %v1898 = vpop.f32.mrf.mxu0
  %1899 = vdwg.mxu0
  %1900 = vmatpush.bf16.msra.mxu0 0
  %1901 = vmatpush.bf16.msra.mxu0 0
  %1902 = vmatpush.bf16.msra.mxu0 0
  %1903 = vmatpush.bf16.msra.mxu0 0
  %1904 = vmatpush.bf16.msra.mxu0 0
  %1905 = vmatpush.bf16.msra.mxu0 0
  %1906 = vmatpush.bf16.msra.mxu0 0
  %1907 = vmatpush.bf16.msra.mxu0 %v1846
  %1908 = vmatmul.bf16.gmra.mxu0 %v1831
  %v1909 = vpop.f32.mrf.mxu0
  %v1910 = vadd.f32 0.0, %v1909
  %v1911 = vpop.f32.mrf.mxu0
  %1912 = vdwg.mxu0
  %v1913 = vadd.f32 %v1759, %v1858
  %v1914 = vadd.f32 %v1772, %v1871
  %v1915 = vadd.f32 %v1785, %v1884
  %v1916 = vadd.f32 %v1798, %v1897
  %v1917 = vadd.f32 %v1811, %v1910
  %v1918 = vmul.f32 %v1913, %v833
  %v1919 = vmul.f32 %v1914, %v834
  %v1920 = vmul.f32 %v1915, %v835
  %v1921 = vmul.f32 %v1916, %v836
  %v1922 = vmul.f32 %v1917, %v837
  %s1923 = scalar_lea.vmem %s6, 2
  %v1924 = vld [vmem:[%s1923] sm:$0x3]
  %s1925 = scalar_lea.vmem %s6, 8
  %v1926 = vld [vmem:[%s1925] sm:$0x3]
  %1927 = vrot.lane.b32.xlu0 %v1627, 111
  %v1928 = vpop.permute.xlu0 %1927
  %1929 = vrot.lane.b32.xlu0 %v1628, 111
  %v1930 = vpop.permute.xlu0 %1929
  %1931 = vrot.lane.b32.xlu0 %v1629, 111
  %v1932 = vpop.permute.xlu0 %1931
  %1933 = vrot.lane.b32.xlu0 %v1630, 111
  %v1934 = vpop.permute.xlu0 %1933
  %1935 = vrot.lane.b32.xlu0 %v1631, 111
  %v1936 = vpop.permute.xlu0 %1935
  %v1937 = vsel %vm862, %v1928, %v1930
  %v1938 = vsel %vm862, %v1930, %v1932
  %v1939 = vsel %vm862, %v1932, %v1934
  %v1940 = vsel %vm862, %v1934, %v1936
  %v1942 = vsel %vm1646, %v1926, 0
  %v1945 = vsel %vm1650, %v1937, 0
  %v1948 = vsel %vm1650, %v1938, 0
  %v1951 = vsel %vm1650, %v1939, 0
  %v1954 = vsel %vm1650, %v1940, 0
  %v1957 = vsel %vm1650, %v1936, 0
  %1959 = vmatpush.bf16.msra.mxu0 0
  %1960 = vmatpush.bf16.msra.mxu0 0
  %1961 = vmatpush.bf16.msra.mxu0 0
  %1962 = vmatpush.bf16.msra.mxu0 0
  %1963 = vmatpush.bf16.msra.mxu0 0
  %1964 = vmatpush.bf16.msra.mxu0 0
  %1965 = vmatpush.bf16.msra.mxu0 0
  %1966 = vmatpush.bf16.msra.mxu0 %v1945
  %1967 = vmatmul.bf16.gmra.mxu0 %v1942
  %v1968 = vpop.f32.mrf.mxu0
  %v1969 = vadd.f32 0.0, %v1968
  %v1970 = vpop.f32.mrf.mxu0
  %1971 = vdwg.mxu0
  %1972 = vmatpush.bf16.msra.mxu0 0
  %1973 = vmatpush.bf16.msra.mxu0 0
  %1974 = vmatpush.bf16.msra.mxu0 0
  %1975 = vmatpush.bf16.msra.mxu0 0
  %1976 = vmatpush.bf16.msra.mxu0 0
  %1977 = vmatpush.bf16.msra.mxu0 0
  %1978 = vmatpush.bf16.msra.mxu0 0
  %1979 = vmatpush.bf16.msra.mxu0 %v1948
  %1980 = vmatmul.bf16.gmra.mxu0 %v1942
  %v1981 = vpop.f32.mrf.mxu0
  %v1982 = vadd.f32 0.0, %v1981
  %v1983 = vpop.f32.mrf.mxu0
  %1984 = vdwg.mxu0
  %1985 = vmatpush.bf16.msra.mxu0 0
  %1986 = vmatpush.bf16.msra.mxu0 0
  %1987 = vmatpush.bf16.msra.mxu0 0
  %1988 = vmatpush.bf16.msra.mxu0 0
  %1989 = vmatpush.bf16.msra.mxu0 0
  %1990 = vmatpush.bf16.msra.mxu0 0
  %1991 = vmatpush.bf16.msra.mxu0 0
  %1992 = vmatpush.bf16.msra.mxu0 %v1951
  %1993 = vmatmul.bf16.gmra.mxu0 %v1942
  %v1994 = vpop.f32.mrf.mxu0
  %v1995 = vadd.f32 0.0, %v1994
  %v1996 = vpop.f32.mrf.mxu0
  %1997 = vdwg.mxu0
  %1998 = vmatpush.bf16.msra.mxu0 0
  %1999 = vmatpush.bf16.msra.mxu0 0
  %2000 = vmatpush.bf16.msra.mxu0 0
  %2001 = vmatpush.bf16.msra.mxu0 0
  %2002 = vmatpush.bf16.msra.mxu0 0
  %2003 = vmatpush.bf16.msra.mxu0 0
  %2004 = vmatpush.bf16.msra.mxu0 0
  %2005 = vmatpush.bf16.msra.mxu0 %v1954
  %2006 = vmatmul.bf16.gmra.mxu0 %v1942
  %v2007 = vpop.f32.mrf.mxu0
  %v2008 = vadd.f32 0.0, %v2007
  %v2009 = vpop.f32.mrf.mxu0
  %2010 = vdwg.mxu0
  %2011 = vmatpush.bf16.msra.mxu0 0
  %2012 = vmatpush.bf16.msra.mxu0 0
  %2013 = vmatpush.bf16.msra.mxu0 0
  %2014 = vmatpush.bf16.msra.mxu0 0
  %2015 = vmatpush.bf16.msra.mxu0 0
  %2016 = vmatpush.bf16.msra.mxu0 0
  %2017 = vmatpush.bf16.msra.mxu0 0
  %2018 = vmatpush.bf16.msra.mxu0 %v1957
  %2019 = vmatmul.bf16.gmra.mxu0 %v1942
  %v2020 = vpop.f32.mrf.mxu0
  %v2021 = vadd.f32 0.0, %v2020
  %v2022 = vpop.f32.mrf.mxu0
  %2023 = vdwg.mxu0
  %2024 = vrot.lane.b32.xlu0 %v1627, 127
  %v2025 = vpop.permute.xlu0 %2024
  %2026 = vrot.lane.b32.xlu0 %v1628, 127
  %v2027 = vpop.permute.xlu0 %2026
  %2028 = vrot.lane.b32.xlu0 %v1629, 127
  %v2029 = vpop.permute.xlu0 %2028
  %2030 = vrot.lane.b32.xlu0 %v1630, 127
  %v2031 = vpop.permute.xlu0 %2030
  %2032 = vrot.lane.b32.xlu0 %v1631, 127
  %v2033 = vpop.permute.xlu0 %2032
  %v2034 = vsel %vm960, %v2025, %v2027
  %v2035 = vsel %vm960, %v2027, %v2029
  %v2036 = vsel %vm960, %v2029, %v2031
  %v2037 = vsel %vm960, %v2031, %v2033
  %v2039 = vsel %vm1646, %v1924, 0
  %v2042 = vsel %vm1650, %v2034, 0
  %v2045 = vsel %vm1650, %v2035, 0
  %v2048 = vsel %vm1650, %v2036, 0
  %v2051 = vsel %vm1650, %v2037, 0
  %v2054 = vsel %vm1650, %v2033, 0
  %2056 = vmatpush.bf16.msra.mxu0 0
  %2057 = vmatpush.bf16.msra.mxu0 0
  %2058 = vmatpush.bf16.msra.mxu0 0
  %2059 = vmatpush.bf16.msra.mxu0 0
  %2060 = vmatpush.bf16.msra.mxu0 0
  %2061 = vmatpush.bf16.msra.mxu0 0
  %2062 = vmatpush.bf16.msra.mxu0 0
  %2063 = vmatpush.bf16.msra.mxu0 %v2042
  %2064 = vmatmul.bf16.gmra.mxu0 %v2039
  %v2065 = vpop.f32.mrf.mxu0
  %v2066 = vadd.f32 %v1969, %v2065
  %v2067 = vpop.f32.mrf.mxu0
  %2068 = vdwg.mxu0
  %2069 = vmatpush.bf16.msra.mxu0 0
  %2070 = vmatpush.bf16.msra.mxu0 0
  %2071 = vmatpush.bf16.msra.mxu0 0
  %2072 = vmatpush.bf16.msra.mxu0 0
  %2073 = vmatpush.bf16.msra.mxu0 0
  %2074 = vmatpush.bf16.msra.mxu0 0
  %2075 = vmatpush.bf16.msra.mxu0 0
  %2076 = vmatpush.bf16.msra.mxu0 %v2045
  %2077 = vmatmul.bf16.gmra.mxu0 %v2039
  %v2078 = vpop.f32.mrf.mxu0
  %v2079 = vadd.f32 %v1982, %v2078
  %v2080 = vpop.f32.mrf.mxu0
  %2081 = vdwg.mxu0
  %2082 = vmatpush.bf16.msra.mxu0 0
  %2083 = vmatpush.bf16.msra.mxu0 0
  %2084 = vmatpush.bf16.msra.mxu0 0
  %2085 = vmatpush.bf16.msra.mxu0 0
  %2086 = vmatpush.bf16.msra.mxu0 0
  %2087 = vmatpush.bf16.msra.mxu0 0
  %2088 = vmatpush.bf16.msra.mxu0 0
  %2089 = vmatpush.bf16.msra.mxu0 %v2048
  %2090 = vmatmul.bf16.gmra.mxu0 %v2039
  %v2091 = vpop.f32.mrf.mxu0
  %v2092 = vadd.f32 %v1995, %v2091
  %v2093 = vpop.f32.mrf.mxu0
  %2094 = vdwg.mxu0
  %2095 = vmatpush.bf16.msra.mxu0 0
  %2096 = vmatpush.bf16.msra.mxu0 0
  %2097 = vmatpush.bf16.msra.mxu0 0
  %2098 = vmatpush.bf16.msra.mxu0 0
  %2099 = vmatpush.bf16.msra.mxu0 0
  %2100 = vmatpush.bf16.msra.mxu0 0
  %2101 = vmatpush.bf16.msra.mxu0 0
  %2102 = vmatpush.bf16.msra.mxu0 %v2051
  %2103 = vmatmul.bf16.gmra.mxu0 %v2039
  %v2104 = vpop.f32.mrf.mxu0
  %v2105 = vadd.f32 %v2008, %v2104
  %v2106 = vpop.f32.mrf.mxu0
  %2107 = vdwg.mxu0
  %2108 = vmatpush.bf16.msra.mxu0 0
  %2109 = vmatpush.bf16.msra.mxu0 0
  %2110 = vmatpush.bf16.msra.mxu0 0
  %2111 = vmatpush.bf16.msra.mxu0 0
  %2112 = vmatpush.bf16.msra.mxu0 0
  %2113 = vmatpush.bf16.msra.mxu0 0
  %2114 = vmatpush.bf16.msra.mxu0 0
  %2115 = vmatpush.bf16.msra.mxu0 %v2054
  %2116 = vmatmul.bf16.gmra.mxu0 %v2039
  %v2117 = vpop.f32.mrf.mxu0
  %v2118 = vadd.f32 %v2021, %v2117
  %v2119 = vpop.f32.mrf.mxu0
  %2120 = vdwg.mxu0
  %s2121 = scalar_lea.vmem %s6, 14
  %v2122 = vld [vmem:[%s2121] sm:$0x3]
  %2123 = vrot.lane.b32.xlu0 %v1627, 95
  %v2124 = vpop.permute.xlu0 %2123
  %2125 = vrot.lane.b32.xlu0 %v1628, 95
  %v2126 = vpop.permute.xlu0 %2125
  %2127 = vrot.lane.b32.xlu0 %v1629, 95
  %v2128 = vpop.permute.xlu0 %2127
  %2129 = vrot.lane.b32.xlu0 %v1630, 95
  %v2130 = vpop.permute.xlu0 %2129
  %2131 = vrot.lane.b32.xlu0 %v1631, 95
  %v2132 = vpop.permute.xlu0 %2131
  %v2133 = vsel %vm1060, %v2124, %v2126
  %v2134 = vsel %vm1060, %v2126, %v2128
  %v2135 = vsel %vm1060, %v2128, %v2130
  %v2136 = vsel %vm1060, %v2130, %v2132
  %v2138 = vsel %vm1646, %v2122, 0
  %v2141 = vsel %vm1650, %v2133, 0
  %v2144 = vsel %vm1650, %v2134, 0
  %v2147 = vsel %vm1650, %v2135, 0
  %v2150 = vsel %vm1650, %v2136, 0
  %v2153 = vsel %vm1650, %v2132, 0
  %2155 = vmatpush.bf16.msra.mxu0 0
  %2156 = vmatpush.bf16.msra.mxu0 0
  %2157 = vmatpush.bf16.msra.mxu0 0
  %2158 = vmatpush.bf16.msra.mxu0 0
  %2159 = vmatpush.bf16.msra.mxu0 0
  %2160 = vmatpush.bf16.msra.mxu0 0
  %2161 = vmatpush.bf16.msra.mxu0 0
  %2162 = vmatpush.bf16.msra.mxu0 %v2141
  %2163 = vmatmul.bf16.gmra.mxu0 %v2138
  %v2164 = vpop.f32.mrf.mxu0
  %v2165 = vadd.f32 0.0, %v2164
  %v2166 = vpop.f32.mrf.mxu0
  %2167 = vdwg.mxu0
  %2168 = vmatpush.bf16.msra.mxu0 0
  %2169 = vmatpush.bf16.msra.mxu0 0
  %2170 = vmatpush.bf16.msra.mxu0 0
  %2171 = vmatpush.bf16.msra.mxu0 0
  %2172 = vmatpush.bf16.msra.mxu0 0
  %2173 = vmatpush.bf16.msra.mxu0 0
  %2174 = vmatpush.bf16.msra.mxu0 0
  %2175 = vmatpush.bf16.msra.mxu0 %v2144
  %2176 = vmatmul.bf16.gmra.mxu0 %v2138
  %v2177 = vpop.f32.mrf.mxu0
  %v2178 = vadd.f32 0.0, %v2177
  %v2179 = vpop.f32.mrf.mxu0
  %2180 = vdwg.mxu0
  %2181 = vmatpush.bf16.msra.mxu0 0
  %2182 = vmatpush.bf16.msra.mxu0 0
  %2183 = vmatpush.bf16.msra.mxu0 0
  %2184 = vmatpush.bf16.msra.mxu0 0
  %2185 = vmatpush.bf16.msra.mxu0 0
  %2186 = vmatpush.bf16.msra.mxu0 0
  %2187 = vmatpush.bf16.msra.mxu0 0
  %2188 = vmatpush.bf16.msra.mxu0 %v2147
  %2189 = vmatmul.bf16.gmra.mxu0 %v2138
  %v2190 = vpop.f32.mrf.mxu0
  %v2191 = vadd.f32 0.0, %v2190
  %v2192 = vpop.f32.mrf.mxu0
  %2193 = vdwg.mxu0
  %2194 = vmatpush.bf16.msra.mxu0 0
  %2195 = vmatpush.bf16.msra.mxu0 0
  %2196 = vmatpush.bf16.msra.mxu0 0
  %2197 = vmatpush.bf16.msra.mxu0 0
  %2198 = vmatpush.bf16.msra.mxu0 0
  %2199 = vmatpush.bf16.msra.mxu0 0
  %2200 = vmatpush.bf16.msra.mxu0 0
  %2201 = vmatpush.bf16.msra.mxu0 %v2150
  %2202 = vmatmul.bf16.gmra.mxu0 %v2138
  %v2203 = vpop.f32.mrf.mxu0
  %v2204 = vadd.f32 0.0, %v2203
  %v2205 = vpop.f32.mrf.mxu0
  %2206 = vdwg.mxu0
  %2207 = vmatpush.bf16.msra.mxu0 0
  %2208 = vmatpush.bf16.msra.mxu0 0
  %2209 = vmatpush.bf16.msra.mxu0 0
  %2210 = vmatpush.bf16.msra.mxu0 0
  %2211 = vmatpush.bf16.msra.mxu0 0
  %2212 = vmatpush.bf16.msra.mxu0 0
  %2213 = vmatpush.bf16.msra.mxu0 0
  %2214 = vmatpush.bf16.msra.mxu0 %v2153
  %2215 = vmatmul.bf16.gmra.mxu0 %v2138
  %v2216 = vpop.f32.mrf.mxu0
  %v2217 = vadd.f32 0.0, %v2216
  %v2218 = vpop.f32.mrf.mxu0
  %2219 = vdwg.mxu0
  %v2220 = vadd.f32 %v2066, %v2165
  %v2221 = vadd.f32 %v2079, %v2178
  %v2222 = vadd.f32 %v2092, %v2191
  %v2223 = vadd.f32 %v2105, %v2204
  %v2224 = vadd.f32 %v2118, %v2217
  %v2225 = vadd.f32 %v1918, %v2220
  %v2226 = vadd.f32 %v1919, %v2221
  %v2227 = vadd.f32 %v1920, %v2222
  %v2228 = vadd.f32 %v1921, %v2223
  %v2229 = vadd.f32 %v1922, %v2224
  %s2230 = scalar_lea.vmem %s6, 4
  %v2231 = vld [vmem:[%s2230] sm:$0x3]
  %s2232 = scalar_lea.vmem %s6, 10
  %v2233 = vld [vmem:[%s2232] sm:$0x3]
  %2234 = vrot.lane.b32.xlu0 %v1627, 110
  %v2235 = vpop.permute.xlu0 %2234
  %2236 = vrot.lane.b32.xlu0 %v1628, 110
  %v2237 = vpop.permute.xlu0 %2236
  %2238 = vrot.lane.b32.xlu0 %v1629, 110
  %v2239 = vpop.permute.xlu0 %2238
  %2240 = vrot.lane.b32.xlu0 %v1630, 110
  %v2241 = vpop.permute.xlu0 %2240
  %2242 = vrot.lane.b32.xlu0 %v1631, 110
  %v2243 = vpop.permute.xlu0 %2242
  %v2244 = vsel %vm1172, %v2235, %v2237
  %v2245 = vsel %vm1172, %v2237, %v2239
  %v2246 = vsel %vm1172, %v2239, %v2241
  %v2247 = vsel %vm1172, %v2241, %v2243
  %v2249 = vsel %vm1646, %v2233, 0
  %v2252 = vsel %vm1650, %v2244, 0
  %v2255 = vsel %vm1650, %v2245, 0
  %v2258 = vsel %vm1650, %v2246, 0
  %v2261 = vsel %vm1650, %v2247, 0
  %v2264 = vsel %vm1650, %v2243, 0
  %2266 = vmatpush.bf16.msra.mxu0 0
  %2267 = vmatpush.bf16.msra.mxu0 0
  %2268 = vmatpush.bf16.msra.mxu0 0
  %2269 = vmatpush.bf16.msra.mxu0 0
  %2270 = vmatpush.bf16.msra.mxu0 0
  %2271 = vmatpush.bf16.msra.mxu0 0
  %2272 = vmatpush.bf16.msra.mxu0 0
  %2273 = vmatpush.bf16.msra.mxu0 %v2252
  %2274 = vmatmul.bf16.gmra.mxu0 %v2249
  %v2275 = vpop.f32.mrf.mxu0
  %v2276 = vadd.f32 0.0, %v2275
  %v2277 = vpop.f32.mrf.mxu0
  %2278 = vdwg.mxu0
  %2279 = vmatpush.bf16.msra.mxu0 0
  %2280 = vmatpush.bf16.msra.mxu0 0
  %2281 = vmatpush.bf16.msra.mxu0 0
  %2282 = vmatpush.bf16.msra.mxu0 0
  %2283 = vmatpush.bf16.msra.mxu0 0
  %2284 = vmatpush.bf16.msra.mxu0 0
  %2285 = vmatpush.bf16.msra.mxu0 0
  %2286 = vmatpush.bf16.msra.mxu0 %v2255
  %2287 = vmatmul.bf16.gmra.mxu0 %v2249
  %v2288 = vpop.f32.mrf.mxu0
  %v2289 = vadd.f32 0.0, %v2288
  %v2290 = vpop.f32.mrf.mxu0
  %2291 = vdwg.mxu0
  %2292 = vmatpush.bf16.msra.mxu0 0
  %2293 = vmatpush.bf16.msra.mxu0 0
  %2294 = vmatpush.bf16.msra.mxu0 0
  %2295 = vmatpush.bf16.msra.mxu0 0
  %2296 = vmatpush.bf16.msra.mxu0 0
  %2297 = vmatpush.bf16.msra.mxu0 0
  %2298 = vmatpush.bf16.msra.mxu0 0
  %2299 = vmatpush.bf16.msra.mxu0 %v2258
  %2300 = vmatmul.bf16.gmra.mxu0 %v2249
  %v2301 = vpop.f32.mrf.mxu0
  %v2302 = vadd.f32 0.0, %v2301
  %v2303 = vpop.f32.mrf.mxu0
  %2304 = vdwg.mxu0
  %2305 = vmatpush.bf16.msra.mxu0 0
  %2306 = vmatpush.bf16.msra.mxu0 0
  %2307 = vmatpush.bf16.msra.mxu0 0
  %2308 = vmatpush.bf16.msra.mxu0 0
  %2309 = vmatpush.bf16.msra.mxu0 0
  %2310 = vmatpush.bf16.msra.mxu0 0
  %2311 = vmatpush.bf16.msra.mxu0 0
  %2312 = vmatpush.bf16.msra.mxu0 %v2261
  %2313 = vmatmul.bf16.gmra.mxu0 %v2249
  %v2314 = vpop.f32.mrf.mxu0
  %v2315 = vadd.f32 0.0, %v2314
  %v2316 = vpop.f32.mrf.mxu0
  %2317 = vdwg.mxu0
  %2318 = vmatpush.bf16.msra.mxu0 0
  %2319 = vmatpush.bf16.msra.mxu0 0
  %2320 = vmatpush.bf16.msra.mxu0 0
  %2321 = vmatpush.bf16.msra.mxu0 0
  %2322 = vmatpush.bf16.msra.mxu0 0
  %2323 = vmatpush.bf16.msra.mxu0 0
  %2324 = vmatpush.bf16.msra.mxu0 0
  %2325 = vmatpush.bf16.msra.mxu0 %v2264
  %2326 = vmatmul.bf16.gmra.mxu0 %v2249
  %v2327 = vpop.f32.mrf.mxu0
  %v2328 = vadd.f32 0.0, %v2327
  %v2329 = vpop.f32.mrf.mxu0
  %2330 = vdwg.mxu0
  %2331 = vrot.lane.b32.xlu0 %v1627, 126
  %v2332 = vpop.permute.xlu0 %2331
  %2333 = vrot.lane.b32.xlu0 %v1628, 126
  %v2334 = vpop.permute.xlu0 %2333
  %2335 = vrot.lane.b32.xlu0 %v1629, 126
  %v2336 = vpop.permute.xlu0 %2335
  %2337 = vrot.lane.b32.xlu0 %v1630, 126
  %v2338 = vpop.permute.xlu0 %2337
  %2339 = vrot.lane.b32.xlu0 %v1631, 126
  %v2340 = vpop.permute.xlu0 %2339
  %v2341 = vsel %vm1270, %v2332, %v2334
  %v2342 = vsel %vm1270, %v2334, %v2336
  %v2343 = vsel %vm1270, %v2336, %v2338
  %v2344 = vsel %vm1270, %v2338, %v2340
  %v2346 = vsel %vm1646, %v2231, 0
  %v2349 = vsel %vm1650, %v2341, 0
  %v2352 = vsel %vm1650, %v2342, 0
  %v2355 = vsel %vm1650, %v2343, 0
  %v2358 = vsel %vm1650, %v2344, 0
  %v2361 = vsel %vm1650, %v2340, 0
  %2363 = vmatpush.bf16.msra.mxu0 0
  %2364 = vmatpush.bf16.msra.mxu0 0
  %2365 = vmatpush.bf16.msra.mxu0 0
  %2366 = vmatpush.bf16.msra.mxu0 0
  %2367 = vmatpush.bf16.msra.mxu0 0
  %2368 = vmatpush.bf16.msra.mxu0 0
  %2369 = vmatpush.bf16.msra.mxu0 0
  %2370 = vmatpush.bf16.msra.mxu0 %v2349
  %2371 = vmatmul.bf16.gmra.mxu0 %v2346
  %v2372 = vpop.f32.mrf.mxu0
  %v2373 = vadd.f32 %v2276, %v2372
  %v2374 = vpop.f32.mrf.mxu0
  %2375 = vdwg.mxu0
  %2376 = vmatpush.bf16.msra.mxu0 0
  %2377 = vmatpush.bf16.msra.mxu0 0
  %2378 = vmatpush.bf16.msra.mxu0 0
  %2379 = vmatpush.bf16.msra.mxu0 0
  %2380 = vmatpush.bf16.msra.mxu0 0
  %2381 = vmatpush.bf16.msra.mxu0 0
  %2382 = vmatpush.bf16.msra.mxu0 0
  %2383 = vmatpush.bf16.msra.mxu0 %v2352
  %2384 = vmatmul.bf16.gmra.mxu0 %v2346
  %v2385 = vpop.f32.mrf.mxu0
  %v2386 = vadd.f32 %v2289, %v2385
  %v2387 = vpop.f32.mrf.mxu0
  %2388 = vdwg.mxu0
  %2389 = vmatpush.bf16.msra.mxu0 0
  %2390 = vmatpush.bf16.msra.mxu0 0
  %2391 = vmatpush.bf16.msra.mxu0 0
  %2392 = vmatpush.bf16.msra.mxu0 0
  %2393 = vmatpush.bf16.msra.mxu0 0
  %2394 = vmatpush.bf16.msra.mxu0 0
  %2395 = vmatpush.bf16.msra.mxu0 0
  %2396 = vmatpush.bf16.msra.mxu0 %v2355
  %2397 = vmatmul.bf16.gmra.mxu0 %v2346
  %v2398 = vpop.f32.mrf.mxu0
  %v2399 = vadd.f32 %v2302, %v2398
  %v2400 = vpop.f32.mrf.mxu0
  %2401 = vdwg.mxu0
  %2402 = vmatpush.bf16.msra.mxu0 0
  %2403 = vmatpush.bf16.msra.mxu0 0
  %2404 = vmatpush.bf16.msra.mxu0 0
  %2405 = vmatpush.bf16.msra.mxu0 0
  %2406 = vmatpush.bf16.msra.mxu0 0
  %2407 = vmatpush.bf16.msra.mxu0 0
  %2408 = vmatpush.bf16.msra.mxu0 0
  %2409 = vmatpush.bf16.msra.mxu0 %v2358
  %2410 = vmatmul.bf16.gmra.mxu0 %v2346
  %v2411 = vpop.f32.mrf.mxu0
  %v2412 = vadd.f32 %v2315, %v2411
  %v2413 = vpop.f32.mrf.mxu0
  %2414 = vdwg.mxu0
  %2415 = vmatpush.bf16.msra.mxu0 0
  %2416 = vmatpush.bf16.msra.mxu0 0
  %2417 = vmatpush.bf16.msra.mxu0 0
  %2418 = vmatpush.bf16.msra.mxu0 0
  %2419 = vmatpush.bf16.msra.mxu0 0
  %2420 = vmatpush.bf16.msra.mxu0 0
  %2421 = vmatpush.bf16.msra.mxu0 0
  %2422 = vmatpush.bf16.msra.mxu0 %v2361
  %2423 = vmatmul.bf16.gmra.mxu0 %v2346
  %v2424 = vpop.f32.mrf.mxu0
  %v2425 = vadd.f32 %v2328, %v2424
  %v2426 = vpop.f32.mrf.mxu0
  %2427 = vdwg.mxu0
  %s2428 = scalar_lea.vmem %s6, 16
  %v2429 = vld [vmem:[%s2428] sm:$0x3]
  %2430 = vrot.lane.b32.xlu0 %v1627, 94
  %v2431 = vpop.permute.xlu0 %2430
  %2432 = vrot.lane.b32.xlu0 %v1628, 94
  %v2433 = vpop.permute.xlu0 %2432
  %2434 = vrot.lane.b32.xlu0 %v1629, 94
  %v2435 = vpop.permute.xlu0 %2434
  %2436 = vrot.lane.b32.xlu0 %v1630, 94
  %v2437 = vpop.permute.xlu0 %2436
  %2438 = vrot.lane.b32.xlu0 %v1631, 94
  %v2439 = vpop.permute.xlu0 %2438
  %v2440 = vsel %vm1370, %v2431, %v2433
  %v2441 = vsel %vm1370, %v2433, %v2435
  %v2442 = vsel %vm1370, %v2435, %v2437
  %v2443 = vsel %vm1370, %v2437, %v2439
  %v2445 = vsel %vm1646, %v2429, 0
  %v2448 = vsel %vm1650, %v2440, 0
  %v2451 = vsel %vm1650, %v2441, 0
  %v2454 = vsel %vm1650, %v2442, 0
  %v2457 = vsel %vm1650, %v2443, 0
  %v2460 = vsel %vm1650, %v2439, 0
  %2462 = vmatpush.bf16.msra.mxu0 0
  %2463 = vmatpush.bf16.msra.mxu0 0
  %2464 = vmatpush.bf16.msra.mxu0 0
  %2465 = vmatpush.bf16.msra.mxu0 0
  %2466 = vmatpush.bf16.msra.mxu0 0
  %2467 = vmatpush.bf16.msra.mxu0 0
  %2468 = vmatpush.bf16.msra.mxu0 0
  %2469 = vmatpush.bf16.msra.mxu0 %v2448
  %2470 = vmatmul.bf16.gmra.mxu0 %v2445
  %v2471 = vpop.f32.mrf.mxu0
  %v2472 = vadd.f32 0.0, %v2471
  %v2473 = vpop.f32.mrf.mxu0
  %2474 = vdwg.mxu0
  %2475 = vmatpush.bf16.msra.mxu0 0
  %2476 = vmatpush.bf16.msra.mxu0 0
  %2477 = vmatpush.bf16.msra.mxu0 0
  %2478 = vmatpush.bf16.msra.mxu0 0
  %2479 = vmatpush.bf16.msra.mxu0 0
  %2480 = vmatpush.bf16.msra.mxu0 0
  %2481 = vmatpush.bf16.msra.mxu0 0
  %2482 = vmatpush.bf16.msra.mxu0 %v2451
  %2483 = vmatmul.bf16.gmra.mxu0 %v2445
  %v2484 = vpop.f32.mrf.mxu0
  %v2485 = vadd.f32 0.0, %v2484
  %v2486 = vpop.f32.mrf.mxu0
  %2487 = vdwg.mxu0
  %2488 = vmatpush.bf16.msra.mxu0 0
  %2489 = vmatpush.bf16.msra.mxu0 0
  %2490 = vmatpush.bf16.msra.mxu0 0
  %2491 = vmatpush.bf16.msra.mxu0 0
  %2492 = vmatpush.bf16.msra.mxu0 0
  %2493 = vmatpush.bf16.msra.mxu0 0
  %2494 = vmatpush.bf16.msra.mxu0 0
  %2495 = vmatpush.bf16.msra.mxu0 %v2454
  %2496 = vmatmul.bf16.gmra.mxu0 %v2445
  %v2497 = vpop.f32.mrf.mxu0
  %v2498 = vadd.f32 0.0, %v2497
  %v2499 = vpop.f32.mrf.mxu0
  %2500 = vdwg.mxu0
  %2501 = vmatpush.bf16.msra.mxu0 0
  %2502 = vmatpush.bf16.msra.mxu0 0
  %2503 = vmatpush.bf16.msra.mxu0 0
  %2504 = vmatpush.bf16.msra.mxu0 0
  %2505 = vmatpush.bf16.msra.mxu0 0
  %2506 = vmatpush.bf16.msra.mxu0 0
  %2507 = vmatpush.bf16.msra.mxu0 0
  %2508 = vmatpush.bf16.msra.mxu0 %v2457
  %2509 = vmatmul.bf16.gmra.mxu0 %v2445
  %v2510 = vpop.f32.mrf.mxu0
  %v2511 = vadd.f32 0.0, %v2510
  %v2512 = vpop.f32.mrf.mxu0
  %2513 = vdwg.mxu0
  %2514 = vmatpush.bf16.msra.mxu0 0
  %2515 = vmatpush.bf16.msra.mxu0 0
  %2516 = vmatpush.bf16.msra.mxu0 0
  %2517 = vmatpush.bf16.msra.mxu0 0
  %2518 = vmatpush.bf16.msra.mxu0 0
  %2519 = vmatpush.bf16.msra.mxu0 0
  %2520 = vmatpush.bf16.msra.mxu0 0
  %2521 = vmatpush.bf16.msra.mxu0 %v2460
  %2522 = vmatmul.bf16.gmra.mxu0 %v2445
  %v2523 = vpop.f32.mrf.mxu0
  %v2524 = vadd.f32 0.0, %v2523
  %v2525 = vpop.f32.mrf.mxu0
  %2526 = vdwg.mxu0
  %v2527 = vadd.f32 %v2373, %v2472
  %v2528 = vadd.f32 %v2386, %v2485
  %v2529 = vadd.f32 %v2399, %v2498
  %v2530 = vadd.f32 %v2412, %v2511
  %v2531 = vadd.f32 %v2425, %v2524
  %v2532 = vmul.f32 %v2527, %v1464
  %v2533 = vmul.f32 %v2528, %v1465
  %v2534 = vmul.f32 %v2529, %v1466
  %v2535 = vmul.f32 %v2530, %v1467
  %v2536 = vmul.f32 %v2531, %v1468
  %v2537 = vadd.f32 %v2225, %v2532
  %v2538 = vadd.f32 %v2226, %v2533
  %v2539 = vadd.f32 %v2227, %v2534
  %v2540 = vadd.f32 %v2228, %v2535
  %v2541 = vadd.f32 %v2229, %v2536
  %v2542 = vld [vmem:[%s9] sm:$0xf]
  %v2543 = vld [vmem:[%s10] sm:$0xf]
  %v2544 = vsel %vm563, %v2537, 0.0
  %v2545 = vsel %vm563, %v2538, 0.0
  %v2546 = vadd.f32 %v2544, %v2545
  %2547 = vadd.xlane.f32.xlu0 %v2546
  %v2548 = vpop.xlane.xlu0 %2547
  %v2549 = vadd.f32 %v2548, 0.0
  %2553 = vrot.lane.b32.xlu0 %v2539, 94
  %v2554 = vpop.permute.xlu0 %2553
  %2555 = vrot.lane.b32.xlu0 %v2540, 94
  %v2556 = vpop.permute.xlu0 %2555
  %2557 = vrot.lane.b32.xlu0 %v2541, 94
  %v2558 = vpop.permute.xlu0 %2557
  %v2559 = vsel %vm1501, %v2554, %v2556
  %v2560 = vsel %vm1501, %v2556, %v2558
  %v2563 = vsel %vm563, %v2559, 0.0
  %v2564 = vsel %vm563, %v2560, 0.0
  %v2565 = vadd.f32 %v2563, %v2564
  %2566 = vadd.xlane.f32.xlu0 %v2565
  %v2567 = vpop.xlane.xlu0 %2566
  %v2568 = vadd.f32 %v2549, %v2567
  %v2569 = vmul.f32 %v2568, 0.001953125
  %v2570 = vsub.f32 %v2537, %v2569
  %v2571 = vsub.f32 %v2538, %v2569
  %v2572 = vmul.f32 %v2570, %v2570
  %v2573 = vmul.f32 %v2571, %v2571
  %v2574 = vsel %vm563, %v2572, 0.0
  %v2575 = vsel %vm563, %v2573, 0.0
  %v2576 = vadd.f32 %v2574, %v2575
  %2577 = vadd.xlane.f32.xlu0 %v2576
  %v2578 = vpop.xlane.xlu0 %2577
  %v2579 = vadd.f32 %v2578, 0.0
  %v2580 = vsub.f32 %v2539, %v2569
  %v2581 = vsub.f32 %v2540, %v2569
  %v2582 = vsub.f32 %v2541, %v2569
  %v2583 = vmul.f32 %v2580, %v2580
  %v2584 = vmul.f32 %v2581, %v2581
  %v2585 = vmul.f32 %v2582, %v2582
  %2589 = vrot.lane.b32.xlu0 %v2583, 94
  %v2590 = vpop.permute.xlu0 %2589
  %2591 = vrot.lane.b32.xlu0 %v2584, 94
  %v2592 = vpop.permute.xlu0 %2591
  %2593 = vrot.lane.b32.xlu0 %v2585, 94
  %v2594 = vpop.permute.xlu0 %2593
  %v2595 = vsel %vm1501, %v2590, %v2592
  %v2596 = vsel %vm1501, %v2592, %v2594
  %v2599 = vsel %vm563, %v2595, 0.0
  %v2600 = vsel %vm563, %v2596, 0.0
  %v2601 = vadd.f32 %v2599, %v2600
  %2602 = vadd.xlane.f32.xlu0 %v2601
  %v2603 = vpop.xlane.xlu0 %2602
  %v2604 = vadd.f32 %v2579, %v2603
  %v2605 = vmul.f32 %v2604, 0.001953125
  %v2606 = vadd.f32 %v2605, 1e-05
  %v2607 = vrsqrt.pop %v2606
  %v2608 = vmul.f32 %v2607, %v2606
  %v2609 = vmul.f32 %v2608, %v2607
  %v2610 = vmul.f32 0.5, %v2609
  %v2611 = vsub.f32 1.5, %v2610
  %v2612 = vmul.f32 %v2607, %v2611
  %vm2613 = vweird.f32 %v2606
  %vm2614 = vweird.f32 %v2607
  %vm2615 = vmor %vm2613, %vm2614
  %v2616 = vsel %vm2615, %v2607, %v2612
  %v2617 = vmul.f32 %v2542, %v2616
  %v2618 = vmul.f32 %v2569, %v2617
  %v2619 = vsub.f32 %v2543, %v2618
  %2621 = vset.pattern.permute.xlu0 0
  %2622 = vperm.xlu0 %2621, %v2617
  %v2623 = vpop.permute.xlu0 %2622
  %2626 = vset.pattern.permute.xlu0 0
  %2627 = vperm.xlu0 %2626, %v2619
  %v2628 = vpop.permute.xlu0 %2627
  %v2630 = vmul.f32 %v2537, %v2623
  %v2631 = vmul.f32 %v2538, %v2623
  %v2632 = vadd.f32 %v2630, %v2628
  %v2633 = vadd.f32 %v2631, %v2628
  %v2634 = vmax.f32 %v2632, 0.0
  %v2635 = vmax.f32 %v2633, 0.0
  %v2638 = vrot.slane %v2635, 4
  %v2639 = vsel %vm563, %v2634, %v2638
  %2641 = vst [vmem:[%s11] sm:$0xff] %v2639
  %v2642 = vmul.f32 %v2539, %v2623
  %v2643 = vmul.f32 %v2540, %v2623
  %v2644 = vmul.f32 %v2541, %v2623
  %v2645 = vadd.f32 %v2642, %v2628
  %v2646 = vadd.f32 %v2643, %v2628
  %v2647 = vadd.f32 %v2644, %v2628
  %v2648 = vmax.f32 %v2645, 0.0
  %v2649 = vmax.f32 %v2646, 0.0
  %v2650 = vmax.f32 %v2647, 0.0
  %v2654 = vrot.slane %v2649, 4
  %v2655 = vsel %vm563, %v2648, %v2654
  %2656 = vrot.lane.b32.xlu0 %v2655, 94
  %v2657 = vpop.permute.xlu0 %2656
  %2658 = vrot.lane.b32.xlu0 %v2650, 94
  %v2659 = vpop.permute.xlu0 %2658
  %v2660 = vrot.slane %v2657, 4
  %v2661 = vrot.slane %v2659, 4
  %v2662 = vsel %vm563, %v2660, %v2661
  %v2663 = vsel %vm1501, %v2657, %v2662
  %s2665 = scalar_lea.vmem %s11, 8
  %2666 = vst [vmem:[%s2665] sm:$0xff] %v2663
  // Predicated region
  $region46: #{up_forward.1} parent=0 // pred_check
    _
  $region47: #{up_forward.1} parent=0 // pred_check_branch
    %2668 = sbr.rel (0) target = $region49
  $region48: #{up_forward.1} parent=0 // pred_region
    _
  $region49: #{up_forward.1} parent=0 // pred_fallthru
    _
  // Predicated region
  $region50: #{up_forward.1} parent=0 // pred_check
    _
  $region51: #{up_forward.1} parent=0 // pred_check_branch
    %2670 = sbr.rel (0) target = $region53
  $region52: #{up_forward.1} parent=0 // pred_region
    _
  $region53: #{up_forward.1} parent=0 // pred_fallthru
    _

</llo_original>
